<compile_context>
chip_gen: v7x
topology: tpu7x:2x2x1
jax: 0.10.0
libtpu: 0.0.40
codegen_flags: <defaults>
</compile_context>

<pallas_src>
import math
import functools
import numpy as np

import jax
import jax.numpy as jnp
from jax.experimental import pallas as pl
from jax.experimental.pallas import tpu as pltpu

EPS = 1e-6


# ---------------------------------------------------------------------------
# in-kernel helpers
# ---------------------------------------------------------------------------
def _layernorm(x, a, b):
    # PyTorch LayerNorm in the reference: unbiased std, divide by (std + eps).
    mean = jnp.mean(x, axis=-1, keepdims=True)
    d = x - mean
    var = jnp.sum(d * d, axis=-1, keepdims=True) * (1.0 / (x.shape[-1] - 1))
    inv = pl.reciprocal(jnp.sqrt(var) + EPS, approx=True)   # EUP, keeps (+eps) semantics
    return a * (d * inv) + b


def _softmax_last(s):
    s = s - jnp.max(s, axis=-1, keepdims=True)
    e = jnp.exp(s)
    return e * pl.reciprocal(jnp.sum(e, axis=-1, keepdims=True), approx=True)


def _attention(q, k, v, bias, wo, bo, n_heads, d_k):
    """Scaled-dot-product attention + output projection on one batch element.

    q: (Tq, D) f32 with the 1/sqrt(d_k) scale already folded in.
    k, v: (Tk, D) f32.  bias: additive mask (Tq|1, Tk) f32.
    wo bf16 (D, D); bo f32 (1, D).
    """
    q_b = q.astype(jnp.bfloat16)
    k_b = k.astype(jnp.bfloat16)
    v_b = v.astype(jnp.bfloat16)

    head_outs = []
    # Static head loop with lane-aligned d_k slices (demo uses d_k == 128);
    # scores / softmax kept in f32, probs cast to bf16 for the PV matmul.
    for h in range(n_heads):
        sl = slice(h * d_k, (h + 1) * d_k)
        s = jnp.einsum('qd,kd->qk', q_b[:, sl], k_b[:, sl],
                       preferred_element_type=jnp.float32)
        s = s + bias                                   # additive mask bias (f32)
        p = _softmax_last(s)
        head_outs.append(jnp.dot(p.astype(jnp.bfloat16), v_b[:, sl],
                                 preferred_element_type=jnp.float32))

    # Concatenate heads once, then a single full-K output projection.
    o = jnp.concatenate(head_outs, axis=-1).astype(jnp.bfloat16)   # (Tq, D)
    return jnp.dot(o, wo, preferred_element_type=jnp.float32) + bo


# ---------------------------------------------------------------------------
# Pallas kernel: one grid step == one batch element of the decoder layer
# ---------------------------------------------------------------------------
def _decoder_layer_kernel(n_heads, d_k, d_model,
                          x_ref, mem_ref, tbias_ref, sbias_ref,
                          ln1a_ref, ln1b_ref,
                          wqkv1_ref, bqkv1_ref, wo1_ref, bo1_ref,
                          ln2a_ref, ln2b_ref,
                          wq2_ref, bq2_ref, wkv2_ref, bkv2_ref,
                          wo2_ref, bo2_ref,
                          ln3a_ref, ln3b_ref,
                          w1_ref, b1_ref, w2_ref, b2_ref,
                          out_ref):
    D = d_model
    scale = 1.0 / math.sqrt(d_k)

    x = x_ref[...]        # (Tq, D) f32
    m = mem_ref[...]      # (Sk, D) f32

    # ---- sublayer 0: x + SelfAttn(LN1(x), tgt_mask) ------------------------
    xn = _layernorm(x, ln1a_ref[...], ln1b_ref[...]).astype(jnp.bfloat16)
    qkv = jnp.dot(xn, wqkv1_ref[...],
                  preferred_element_type=jnp.float32) + bqkv1_ref[...]   # (Tq, 3D)
    q1 = qkv[:, :D] * scale
    x = x + _attention(q1, qkv[:, D:2 * D], qkv[:, 2 * D:],
                       tbias_ref[...], wo1_ref[...], bo1_ref[...],
                       n_heads, d_k)
    # TODO(synk): dropout in SublayerConnection / attention omitted (eval mode).

    # ---- sublayer 1: x + SrcAttn(LN2(x), memory, src_mask) -----------------
    xn = _layernorm(x, ln2a_ref[...], ln2b_ref[...]).astype(jnp.bfloat16)
    q2 = (jnp.dot(xn, wq2_ref[...],
                  preferred_element_type=jnp.float32) + bq2_ref[...]) * scale
    kv = jnp.dot(m.astype(jnp.bfloat16), wkv2_ref[...],
                 preferred_element_type=jnp.float32) + bkv2_ref[...]     # (Sk, 2D)
    x = x + _attention(q2, kv[:, :D], kv[:, D:],
                       sbias_ref[...], wo2_ref[...], bo2_ref[...],
                       n_heads, d_k)

    # ---- sublayer 2: x + FFN(LN3(x)) ----------------------------------------
    xn = _layernorm(x, ln3a_ref[...], ln3b_ref[...]).astype(jnp.bfloat16)
    hdn = jnp.dot(xn, w1_ref[...],
                  preferred_element_type=jnp.float32) + b1_ref[...]
    hdn = jnp.maximum(hdn, 0.0).astype(jnp.bfloat16)
    ffn = jnp.dot(hdn, w2_ref[...],
                  preferred_element_type=jnp.float32) + b2_ref[...]
    out_ref[...] = x + ffn


# ---------------------------------------------------------------------------
# wrapper
# ---------------------------------------------------------------------------
def decoder_layer_forward(x, memory, tgt_mask, src_mask, params, *, n_heads):
    B, Tq, D = x.shape
    Sk = memory.shape[1]
    d_k = D // n_heads
    d_ff = params['w1'].shape[-1]

    # Precompute additive mask biases once (0 / -1e9), f32.
    tgt_bias = jnp.where(tgt_mask == 0, -1e9, 0.0).astype(jnp.float32)  # (B,Tq,Tq)
    src_bias = jnp.where(src_mask == 0, -1e9, 0.0).astype(jnp.float32)  # (B,1,Sk)

    bf16 = lambda w: w.astype(jnp.bfloat16)

    # Fused projection weights (done once per call on tiny host-side arrays).
    wqkv1 = bf16(jnp.concatenate([params['wq1'], params['wk1'], params['wv1']], axis=1))
    bqkv1 = jnp.concatenate([params['bq1'], params['bk1'], params['bv1']], axis=1)
    wkv2 = bf16(jnp.concatenate([params['wk2'], params['wv2']], axis=1))
    bkv2 = jnp.concatenate([params['bk2'], params['bv2']], axis=1)

    def batch3(a1, a2):      # per-batch block, batch dim squeezed
        return pl.BlockSpec((None, a1, a2), lambda b: (b, 0, 0))

    def const2(a1, a2):      # layer parameter, constant across the grid
        return pl.BlockSpec((a1, a2), lambda b: (0, 0))

    in_specs = [
        batch3(Tq, D),                          # x
        batch3(Sk, D),                          # memory
        batch3(Tq, Tq),                         # tgt additive bias
        batch3(1, Sk),                          # src additive bias
        const2(1, D), const2(1, D),             # ln1 a, b
        const2(D, 3 * D), const2(1, 3 * D),     # wqkv1, bqkv1
        const2(D, D), const2(1, D),             # wo1, bo1
        const2(1, D), const2(1, D),             # ln2 a, b
        const2(D, D), const2(1, D),             # wq2, bq2
        const2(D, 2 * D), const2(1, 2 * D),     # wkv2, bkv2
        const2(D, D), const2(1, D),             # wo2, bo2
        const2(1, D), const2(1, D),             # ln3 a, b
        const2(D, d_ff), const2(1, d_ff),       # w1, b1
        const2(d_ff, D), const2(1, D),          # w2, b2
    ]
    out_spec = pl.BlockSpec((None, Tq, D), lambda b: (b, 0, 0))

    # Advisory cost estimate for the XLA scheduler.
    flops = B * (2 * Tq * D * 3 * D + 4 * Tq * Tq * D + 2 * Tq * D * D     # self-attn
                 + 2 * Tq * D * D + 2 * Sk * D * 2 * D                     # src proj
                 + 4 * Tq * Sk * D + 2 * Tq * D * D                        # src attn
                 + 4 * Tq * D * d_ff)                                      # FFN
    transcendentals = B * (n_heads * (Tq * Tq + Tq * Sk) + 8 * Tq)
    bytes_accessed = (4 * (x.size + memory.size + tgt_bias.size + src_bias.size
                           + B * Tq * D)
                      + 2 * (8 * D * D + 2 * D * d_ff)
                      + 4 * (14 * D + d_ff))

    kernel = functools.partial(_decoder_layer_kernel, n_heads, d_k, D)
    return pl.pallas_call(
        kernel,
        out_shape=jax.ShapeDtypeStruct((B, Tq, D), jnp.float32),
        grid_spec=pltpu.PrefetchScalarGridSpec(
            num_scalar_prefetch=0,
            grid=(B,),
            in_specs=in_specs,
            out_specs=out_spec,
        ),
        compiler_params=pltpu.CompilerParams(
            dimension_semantics=("parallel",),          # shards batch across TCs (v7x)
            vmem_limit_bytes=48 * 1024 * 1024,          # above 32 MiB default, < v7x 64 MiB
        ),
        cost_estimate=pl.CostEstimate(flops=flops,
                                      transcendentals=transcendentals,
                                      bytes_accessed=bytes_accessed),
    )(x, memory, tgt_bias, src_bias,
      params['ln1_a'], params['ln1_b'],
      wqkv1, bqkv1, bf16(params['wo1']), params['bo1'],
      params['ln2_a'], params['ln2_b'],
      bf16(params['wq2']), params['bq2'], wkv2, bkv2,
      bf16(params['wo2']), params['bo2'],
      params['ln3_a'], params['ln3_b'],
      bf16(params['w1']), params['b1'], bf16(params['w2']), params['b2'])


# ---------------------------------------------------------------------------
# deterministic parameter init (synthetic weights, no checkpoint)
# ---------------------------------------------------------------------------
def init_params(key, D, d_ff):
    ks = jax.random.split(key, 20)

    def nrm(k, shape, scale=0.05):
        return (scale * jax.random.normal(k, shape)).astype(jnp.float32)

    return dict(
        ln1_a=jnp.ones((1, D), jnp.float32), ln1_b=jnp.zeros((1, D), jnp.float32),
        wq1=nrm(ks[0], (D, D)), bq1=nrm(ks[1], (1, D)),
        wk1=nrm(ks[2], (D, D)), bk1=nrm(ks[3], (1, D)),
        wv1=nrm(ks[4], (D, D)), bv1=nrm(ks[5], (1, D)),
        wo1=nrm(ks[6], (D, D)), bo1=nrm(ks[7], (1, D)),
        ln2_a=jnp.ones((1, D), jnp.float32), ln2_b=jnp.zeros((1, D), jnp.float32),
        wq2=nrm(ks[8], (D, D)), bq2=nrm(ks[9], (1, D)),
        wk2=nrm(ks[10], (D, D)), bk2=nrm(ks[11], (1, D)),
        wv2=nrm(ks[12], (D, D)), bv2=nrm(ks[13], (1, D)),
        wo2=nrm(ks[14], (D, D)), bo2=nrm(ks[15], (1, D)),
        ln3_a=jnp.ones((1, D), jnp.float32), ln3_b=jnp.zeros((1, D), jnp.float32),
        w1=nrm(ks[16], (D, d_ff)), b1=jnp.zeros((1, d_ff), jnp.float32),
        w2=nrm(ks[17], (d_ff, D)), b2=jnp.zeros((1, D), jnp.float32),
    )


# ---------------------------------------------------------------------------
# pure-JAX reference (mirrors the PyTorch DecoderLayer forward, f32)
# ---------------------------------------------------------------------------
def decoder_layer_ref(x, memory, tgt_mask, src_mask, params, n_heads):
    B, Tq, D = x.shape
    d_k = D // n_heads

    def ln(t, a, b):
        mean = t.mean(-1, keepdims=True)
        d = t - mean
        var = (d * d).sum(-1, keepdims=True) / (D - 1)
        return a * d / (jnp.sqrt(var) + EPS) + b

    def mha(q_in, kv_in, mask, sfx):
        Tk = kv_in.shape[1]
        q = q_in @ params['wq' + sfx] + params['bq' + sfx]
        k = kv_in @ params['wk' + sfx] + params['bk' + sfx]
        v = kv_in @ params['wv' + sfx] + params['bv' + sfx]

        def split(t, T):
            return t.reshape(B, T, n_heads, d_k).transpose(0, 2, 1, 3)

        qh, kh, vh = split(q, q_in.shape[1]), split(k, Tk), split(v, Tk)
        s = jnp.einsum('bhqd,bhkd->bhqk', qh, kh) / math.sqrt(d_k)
        s = jnp.where(mask[:, None, :, :] == 0, -1e9, s)
        p = jax.nn.softmax(s, axis=-1)
        o = jnp.einsum('bhqk,bhkd->bhqd', p, vh)
        o = o.transpose(0, 2, 1, 3).reshape(B, q_in.shape[1], D)
        return o @ params['wo' + sfx] + params['bo' + sfx]

    h = x
    xn = ln(h, params['ln1_a'], params['ln1_b'])
    h = h + mha(xn, xn, tgt_mask, '1')
    xn = ln(h, params['ln2_a'], params['ln2_b'])
    h = h + mha(xn, memory, src_mask, '2')
    xn = ln(h, params['ln3_a'], params['ln3_b'])
    ffn = jnp.maximum(xn @ params['w1'] + params['b1'], 0.0) @ params['w2'] + params['b2']
    return h + ffn


if __name__ == "__main__":
    # Small demo shapes; D/H chosen so d_k == 128 (lane-aligned head slices).
    B, Tq, Sk, D, H, DFF = 2, 8, 16, 256, 2, 512

    key = jax.random.PRNGKey(0)
    kx, km, kp = jax.random.split(key, 3)
    x = jax.random.normal(kx, (B, Tq, D), dtype=jnp.float32)
    memory = jax.random.normal(km, (B, Sk, D), dtype=jnp.float32)

    tgt_mask = jnp.tile(jnp.tril(jnp.ones((Tq, Tq), jnp.int32))[None], (B, 1, 1))
    src_mask = jnp.ones((B, 1, Sk), dtype=jnp.int32)
    src_mask = src_mask.at[1, 0, 12:].set(0)   # pad out last src positions of batch 1

    params = init_params(kp, D, DFF)

    out = decoder_layer_forward(x, memory, tgt_mask, src_mask, params, n_heads=H)
    out = jax.block_until_ready(out)

    ref = decoder_layer_ref(x, memory, tgt_mask, src_mask, params, H)
    np.testing.assert_allclose(np.asarray(out), np.asarray(ref),
                               rtol=5e-2, atol=5e-2)
    print("KERNEL_OK")
</pallas_src>

<mosaic_0001>
module attributes {stable_mosaic.version = 11 : i64} {
  func.func @_decoder_layer_kernel(%arg0: i32, %arg1: memref<1x8x256xf32, #tpu.memory_space<vmem>>, %arg2: memref<1x16x256xf32, #tpu.memory_space<vmem>>, %arg3: memref<1x8x8xf32, #tpu.memory_space<vmem>>, %arg4: memref<1x1x16xf32, #tpu.memory_space<vmem>>, %arg5: memref<1x256xf32, #tpu.memory_space<vmem>>, %arg6: memref<1x256xf32, #tpu.memory_space<vmem>>, %arg7: memref<256x768xbf16, #tpu.memory_space<vmem>>, %arg8: memref<1x768xf32, #tpu.memory_space<vmem>>, %arg9: memref<256x256xbf16, #tpu.memory_space<vmem>>, %arg10: memref<1x256xf32, #tpu.memory_space<vmem>>, %arg11: memref<1x256xf32, #tpu.memory_space<vmem>>, %arg12: memref<1x256xf32, #tpu.memory_space<vmem>>, %arg13: memref<256x256xbf16, #tpu.memory_space<vmem>>, %arg14: memref<1x256xf32, #tpu.memory_space<vmem>>, %arg15: memref<256x512xbf16, #tpu.memory_space<vmem>>, %arg16: memref<1x512xf32, #tpu.memory_space<vmem>>, %arg17: memref<256x256xbf16, #tpu.memory_space<vmem>>, %arg18: memref<1x256xf32, #tpu.memory_space<vmem>>, %arg19: memref<1x256xf32, #tpu.memory_space<vmem>>, %arg20: memref<1x256xf32, #tpu.memory_space<vmem>>, %arg21: memref<256x512xbf16, #tpu.memory_space<vmem>>, %arg22: memref<1x512xf32, #tpu.memory_space<vmem>>, %arg23: memref<512x256xbf16, #tpu.memory_space<vmem>>, %arg24: memref<1x256xf32, #tpu.memory_space<vmem>>, %arg25: memref<1x8x256xf32, #tpu.memory_space<vmem>>) attributes {dimension_semantics = [#tpu.dimension_semantics<parallel>], iteration_bounds = array<i64: 2>, scalar_prefetch = 0 : i64, scratch_operands = 0 : i64, tpu.core_type = #tpu.core_type<tc>, window_params = [{transform_indices = @transform_0, window_bounds = array<i64: 1, 8, 256>}, {transform_indices = @transform_1, window_bounds = array<i64: 1, 16, 256>}, {transform_indices = @transform_2, window_bounds = array<i64: 1, 8, 8>}, {transform_indices = @transform_3, window_bounds = array<i64: 1, 1, 16>}, {pipeline_mode = #tpu.pipeline_mode<synchronous>, transform_indices = @transform_4, window_bounds = array<i64: 1, 256>}, {pipeline_mode = #tpu.pipeline_mode<synchronous>, transform_indices = @transform_5, window_bounds = array<i64: 1, 256>}, {pipeline_mode = #tpu.pipeline_mode<synchronous>, transform_indices = @transform_6, window_bounds = array<i64: 256, 768>}, {pipeline_mode = #tpu.pipeline_mode<synchronous>, transform_indices = @transform_7, window_bounds = array<i64: 1, 768>}, {pipeline_mode = #tpu.pipeline_mode<synchronous>, transform_indices = @transform_8, window_bounds = array<i64: 256, 256>}, {pipeline_mode = #tpu.pipeline_mode<synchronous>, transform_indices = @transform_9, window_bounds = array<i64: 1, 256>}, {pipeline_mode = #tpu.pipeline_mode<synchronous>, transform_indices = @transform_10, window_bounds = array<i64: 1, 256>}, {pipeline_mode = #tpu.pipeline_mode<synchronous>, transform_indices = @transform_11, window_bounds = array<i64: 1, 256>}, {pipeline_mode = #tpu.pipeline_mode<synchronous>, transform_indices = @transform_12, window_bounds = array<i64: 256, 256>}, {pipeline_mode = #tpu.pipeline_mode<synchronous>, transform_indices = @transform_13, window_bounds = array<i64: 1, 256>}, {pipeline_mode = #tpu.pipeline_mode<synchronous>, transform_indices = @transform_14, window_bounds = array<i64: 256, 512>}, {pipeline_mode = #tpu.pipeline_mode<synchronous>, transform_indices = @transform_15, window_bounds = array<i64: 1, 512>}, {pipeline_mode = #tpu.pipeline_mode<synchronous>, transform_indices = @transform_16, window_bounds = array<i64: 256, 256>}, {pipeline_mode = #tpu.pipeline_mode<synchronous>, transform_indices = @transform_17, window_bounds = array<i64: 1, 256>}, {pipeline_mode = #tpu.pipeline_mode<synchronous>, transform_indices = @transform_18, window_bounds = array<i64: 1, 256>}, {pipeline_mode = #tpu.pipeline_mode<synchronous>, transform_indices = @transform_19, window_bounds = array<i64: 1, 256>}, {pipeline_mode = #tpu.pipeline_mode<synchronous>, transform_indices = @transform_20, window_bounds = array<i64: 256, 512>}, {pipeline_mode = #tpu.pipeline_mode<synchronous>, transform_indices = @transform_21, window_bounds = array<i64: 1, 512>}, {pipeline_mode = #tpu.pipeline_mode<synchronous>, transform_indices = @transform_22, window_bounds = array<i64: 512, 256>}, {pipeline_mode = #tpu.pipeline_mode<synchronous>, transform_indices = @transform_23, window_bounds = array<i64: 1, 256>}, {transform_indices = @transform_24, window_bounds = array<i64: 1, 8, 256>}]} {
    %c0 = arith.constant 0 : index
    %c0_0 = arith.constant 0 : index
    %c0_1 = arith.constant 0 : index
    %0 = vector.load %arg1[%c0, %c0_0, %c0_1] : memref<1x8x256xf32, #tpu.memory_space<vmem>>, vector<1x8x256xf32>
    %1 = vector.shape_cast %0 : vector<1x8x256xf32> to vector<8x256xf32>
    %c0_2 = arith.constant 0 : index
    %c0_3 = arith.constant 0 : index
    %c0_4 = arith.constant 0 : index
    %2 = vector.load %arg2[%c0_2, %c0_3, %c0_4] : memref<1x16x256xf32, #tpu.memory_space<vmem>>, vector<1x16x256xf32>
    %3 = vector.shape_cast %2 : vector<1x16x256xf32> to vector<16x256xf32>
    %c0_5 = arith.constant 0 : index
    %c0_6 = arith.constant 0 : index
    %4 = vector.load %arg5[%c0_5, %c0_6] : memref<1x256xf32, #tpu.memory_space<vmem>>, vector<1x256xf32>
    %c0_7 = arith.constant 0 : index
    %c0_8 = arith.constant 0 : index
    %5 = vector.load %arg6[%c0_7, %c0_8] : memref<1x256xf32, #tpu.memory_space<vmem>>, vector<1x256xf32>
    %cst = arith.constant dense<0.000000e+00> : vector<8xf32>
    %6 = vector.multi_reduction <add>, %1, %cst [1] : vector<8x256xf32> to vector<8xf32>
    %7 = vector.shape_cast %6 : vector<8xf32> to vector<8x1xf32>
    %cst_9 = arith.constant 2.560000e+02 : f32
    %8 = vector.broadcast %cst_9 : f32 to vector<8x1xf32>
    %9 = arith.divf %7, %8 : vector<8x1xf32>
    %10 = vector.broadcast %9 : vector<8x1xf32> to vector<8x256xf32>
    %11 = arith.subf %1, %10 : vector<8x256xf32>
    %12 = arith.mulf %11, %11 : vector<8x256xf32>
    %cst_10 = arith.constant dense<0.000000e+00> : vector<8xf32>
    %13 = vector.multi_reduction <add>, %12, %cst_10 [1] : vector<8x256xf32> to vector<8xf32>
    %14 = vector.shape_cast %13 : vector<8xf32> to vector<8x1xf32>
    %cst_11 = arith.constant 0.00392156886 : f32
    %15 = vector.broadcast %cst_11 : f32 to vector<8x1xf32>
    %16 = arith.mulf %14, %15 : vector<8x1xf32>
    %17 = math.sqrt %16 : vector<8x1xf32>
    %cst_12 = arith.constant 9.99999997E-7 : f32
    %18 = vector.broadcast %cst_12 : f32 to vector<8x1xf32>
    %19 = arith.addf %17, %18 : vector<8x1xf32>
    %20 = tpu.reciprocal %19 {approx = true} : vector<8x1xf32> -> vector<8x1xf32>
    %21 = vector.broadcast %20 : vector<8x1xf32> to vector<8x256xf32>
    %22 = arith.mulf %11, %21 : vector<8x256xf32>
    %23 = vector.broadcast %4 : vector<1x256xf32> to vector<8x256xf32>
    %24 = arith.mulf %23, %22 : vector<8x256xf32>
    %25 = vector.broadcast %5 : vector<1x256xf32> to vector<8x256xf32>
    %26 = arith.addf %24, %25 : vector<8x256xf32>
    %27 = arith.truncf %26 : vector<8x256xf32> to vector<8x256xbf16>
    %c0_13 = arith.constant 0 : index
    %c0_14 = arith.constant 0 : index
    %28 = vector.load %arg7[%c0_13, %c0_14] : memref<256x768xbf16, #tpu.memory_space<vmem>>, vector<256x768xbf16>
    %cst_15 = arith.constant dense<0.000000e+00> : vector<8x768xf32>
    %29 = tpu.matmul %27, %28, %cst_15 {dimension_numbers = #tpu.dot_dimension_numbers<[1], [0], [0], [1], [0, 0, 1, 1], [], []>} : vector<8x256xbf16>, vector<256x768xbf16>, vector<8x768xf32> -> vector<8x768xf32>
    %c0_16 = arith.constant 0 : index
    %c0_17 = arith.constant 0 : index
    %30 = vector.load %arg8[%c0_16, %c0_17] : memref<1x768xf32, #tpu.memory_space<vmem>>, vector<1x768xf32>
    %31 = vector.broadcast %30 : vector<1x768xf32> to vector<8x768xf32>
    %32 = arith.addf %29, %31 : vector<8x768xf32>
    %33 = vector.extract_strided_slice %32 {offsets = [0, 0], sizes = [8, 256], strides = [1, 1]} : vector<8x768xf32> to vector<8x256xf32>
    %cst_18 = arith.constant 0.0883883461 : f32
    %34 = vector.broadcast %cst_18 : f32 to vector<8x256xf32>
    %35 = arith.mulf %33, %34 : vector<8x256xf32>
    %36 = vector.extract_strided_slice %32 {offsets = [0, 256], sizes = [8, 256], strides = [1, 1]} : vector<8x768xf32> to vector<8x256xf32>
    %37 = vector.extract_strided_slice %32 {offsets = [0, 512], sizes = [8, 256], strides = [1, 1]} : vector<8x768xf32> to vector<8x256xf32>
    %c0_19 = arith.constant 0 : index
    %c0_20 = arith.constant 0 : index
    %c0_21 = arith.constant 0 : index
    %38 = vector.load %arg3[%c0_19, %c0_20, %c0_21] : memref<1x8x8xf32, #tpu.memory_space<vmem>>, vector<1x8x8xf32>
    %39 = vector.shape_cast %38 : vector<1x8x8xf32> to vector<8x8xf32>
    %c0_22 = arith.constant 0 : index
    %c0_23 = arith.constant 0 : index
    %40 = vector.load %arg9[%c0_22, %c0_23] : memref<256x256xbf16, #tpu.memory_space<vmem>>, vector<256x256xbf16>
    %c0_24 = arith.constant 0 : index
    %c0_25 = arith.constant 0 : index
    %41 = vector.load %arg10[%c0_24, %c0_25] : memref<1x256xf32, #tpu.memory_space<vmem>>, vector<1x256xf32>
    %42 = arith.truncf %35 : vector<8x256xf32> to vector<8x256xbf16>
    %43 = arith.truncf %36 : vector<8x256xf32> to vector<8x256xbf16>
    %44 = arith.truncf %37 : vector<8x256xf32> to vector<8x256xbf16>
    %45 = vector.extract_strided_slice %42 {offsets = [0, 0], sizes = [8, 128], strides = [1, 1]} : vector<8x256xbf16> to vector<8x128xbf16>
    %46 = vector.extract_strided_slice %43 {offsets = [0, 0], sizes = [8, 128], strides = [1, 1]} : vector<8x256xbf16> to vector<8x128xbf16>
    "tpu.trace_start"() <{level = 10 : i32, message = "qd,kd->qk"}> : () -> ()
    %cst_26 = arith.constant dense<0.000000e+00> : vector<8x8xf32>
    %47 = tpu.matmul %45, %46, %cst_26 {dimension_numbers = #tpu.dot_dimension_numbers<[1], [1], [0], [0], [0, 0, 1, 0], [], []>} : vector<8x128xbf16>, vector<8x128xbf16>, vector<8x8xf32> -> vector<8x8xf32>
    "tpu.trace_stop"() : () -> ()
    %48 = arith.addf %47, %39 : vector<8x8xf32>
    %cst_27 = arith.constant dense<0xFF800000> : vector<8xf32>
    %49 = vector.multi_reduction <maximumf>, %48, %cst_27 [1] : vector<8x8xf32> to vector<8xf32>
    %50 = vector.shape_cast %49 : vector<8xf32> to vector<8x1xf32>
    %51 = vector.broadcast %50 : vector<8x1xf32> to vector<8x8xf32>
    %52 = arith.subf %48, %51 : vector<8x8xf32>
    %53 = math.exp %52 : vector<8x8xf32>
    %cst_28 = arith.constant dense<0.000000e+00> : vector<8xf32>
    %54 = vector.multi_reduction <add>, %53, %cst_28 [1] : vector<8x8xf32> to vector<8xf32>
    %55 = vector.shape_cast %54 : vector<8xf32> to vector<8x1xf32>
    %56 = tpu.reciprocal %55 {approx = true} : vector<8x1xf32> -> vector<8x1xf32>
    %57 = vector.broadcast %56 : vector<8x1xf32> to vector<8x8xf32>
    %58 = arith.mulf %53, %57 : vector<8x8xf32>
    %59 = arith.truncf %58 : vector<8x8xf32> to vector<8x8xbf16>
    %60 = vector.extract_strided_slice %44 {offsets = [0, 0], sizes = [8, 128], strides = [1, 1]} : vector<8x256xbf16> to vector<8x128xbf16>
    %cst_29 = arith.constant dense<0.000000e+00> : vector<8x128xf32>
    %61 = tpu.matmul %59, %60, %cst_29 {dimension_numbers = #tpu.dot_dimension_numbers<[1], [0], [0], [1], [0, 0, 1, 1], [], []>} : vector<8x8xbf16>, vector<8x128xbf16>, vector<8x128xf32> -> vector<8x128xf32>
    %62 = vector.extract_strided_slice %42 {offsets = [0, 128], sizes = [8, 128], strides = [1, 1]} : vector<8x256xbf16> to vector<8x128xbf16>
    %63 = vector.extract_strided_slice %43 {offsets = [0, 128], sizes = [8, 128], strides = [1, 1]} : vector<8x256xbf16> to vector<8x128xbf16>
    "tpu.trace_start"() <{level = 10 : i32, message = "qd,kd->qk"}> : () -> ()
    %cst_30 = arith.constant dense<0.000000e+00> : vector<8x8xf32>
    %64 = tpu.matmul %62, %63, %cst_30 {dimension_numbers = #tpu.dot_dimension_numbers<[1], [1], [0], [0], [0, 0, 1, 0], [], []>} : vector<8x128xbf16>, vector<8x128xbf16>, vector<8x8xf32> -> vector<8x8xf32>
    "tpu.trace_stop"() : () -> ()
    %65 = arith.addf %64, %39 : vector<8x8xf32>
    %cst_31 = arith.constant dense<0xFF800000> : vector<8xf32>
    %66 = vector.multi_reduction <maximumf>, %65, %cst_31 [1] : vector<8x8xf32> to vector<8xf32>
    %67 = vector.shape_cast %66 : vector<8xf32> to vector<8x1xf32>
    %68 = vector.broadcast %67 : vector<8x1xf32> to vector<8x8xf32>
    %69 = arith.subf %65, %68 : vector<8x8xf32>
    %70 = math.exp %69 : vector<8x8xf32>
    %cst_32 = arith.constant dense<0.000000e+00> : vector<8xf32>
    %71 = vector.multi_reduction <add>, %70, %cst_32 [1] : vector<8x8xf32> to vector<8xf32>
    %72 = vector.shape_cast %71 : vector<8xf32> to vector<8x1xf32>
    %73 = tpu.reciprocal %72 {approx = true} : vector<8x1xf32> -> vector<8x1xf32>
    %74 = vector.broadcast %73 : vector<8x1xf32> to vector<8x8xf32>
    %75 = arith.mulf %70, %74 : vector<8x8xf32>
    %76 = arith.truncf %75 : vector<8x8xf32> to vector<8x8xbf16>
    %77 = vector.extract_strided_slice %44 {offsets = [0, 128], sizes = [8, 128], strides = [1, 1]} : vector<8x256xbf16> to vector<8x128xbf16>
    %cst_33 = arith.constant dense<0.000000e+00> : vector<8x128xf32>
    %78 = tpu.matmul %76, %77, %cst_33 {dimension_numbers = #tpu.dot_dimension_numbers<[1], [0], [0], [1], [0, 0, 1, 1], [], []>} : vector<8x8xbf16>, vector<8x128xbf16>, vector<8x128xf32> -> vector<8x128xf32>
    %79 = tpu.concatenate %61, %78 in 1 : vector<8x128xf32>, vector<8x128xf32> -> vector<8x256xf32>
    %80 = arith.truncf %79 : vector<8x256xf32> to vector<8x256xbf16>
    %cst_34 = arith.constant dense<0.000000e+00> : vector<8x256xf32>
    %81 = tpu.matmul %80, %40, %cst_34 {dimension_numbers = #tpu.dot_dimension_numbers<[1], [0], [0], [1], [0, 0, 1, 1], [], []>} : vector<8x256xbf16>, vector<256x256xbf16>, vector<8x256xf32> -> vector<8x256xf32>
    %82 = vector.broadcast %41 : vector<1x256xf32> to vector<8x256xf32>
    %83 = arith.addf %81, %82 : vector<8x256xf32>
    %84 = arith.addf %1, %83 : vector<8x256xf32>
    %c0_35 = arith.constant 0 : index
    %c0_36 = arith.constant 0 : index
    %85 = vector.load %arg11[%c0_35, %c0_36] : memref<1x256xf32, #tpu.memory_space<vmem>>, vector<1x256xf32>
    %c0_37 = arith.constant 0 : index
    %c0_38 = arith.constant 0 : index
    %86 = vector.load %arg12[%c0_37, %c0_38] : memref<1x256xf32, #tpu.memory_space<vmem>>, vector<1x256xf32>
    %cst_39 = arith.constant dense<0.000000e+00> : vector<8xf32>
    %87 = vector.multi_reduction <add>, %84, %cst_39 [1] : vector<8x256xf32> to vector<8xf32>
    %88 = vector.shape_cast %87 : vector<8xf32> to vector<8x1xf32>
    %cst_40 = arith.constant 2.560000e+02 : f32
    %89 = vector.broadcast %cst_40 : f32 to vector<8x1xf32>
    %90 = arith.divf %88, %89 : vector<8x1xf32>
    %91 = vector.broadcast %90 : vector<8x1xf32> to vector<8x256xf32>
    %92 = arith.subf %84, %91 : vector<8x256xf32>
    %93 = arith.mulf %92, %92 : vector<8x256xf32>
    %cst_41 = arith.constant dense<0.000000e+00> : vector<8xf32>
    %94 = vector.multi_reduction <add>, %93, %cst_41 [1] : vector<8x256xf32> to vector<8xf32>
    %95 = vector.shape_cast %94 : vector<8xf32> to vector<8x1xf32>
    %cst_42 = arith.constant 0.00392156886 : f32
    %96 = vector.broadcast %cst_42 : f32 to vector<8x1xf32>
    %97 = arith.mulf %95, %96 : vector<8x1xf32>
    %98 = math.sqrt %97 : vector<8x1xf32>
    %cst_43 = arith.constant 9.99999997E-7 : f32
    %99 = vector.broadcast %cst_43 : f32 to vector<8x1xf32>
    %100 = arith.addf %98, %99 : vector<8x1xf32>
    %101 = tpu.reciprocal %100 {approx = true} : vector<8x1xf32> -> vector<8x1xf32>
    %102 = vector.broadcast %101 : vector<8x1xf32> to vector<8x256xf32>
    %103 = arith.mulf %92, %102 : vector<8x256xf32>
    %104 = vector.broadcast %85 : vector<1x256xf32> to vector<8x256xf32>
    %105 = arith.mulf %104, %103 : vector<8x256xf32>
    %106 = vector.broadcast %86 : vector<1x256xf32> to vector<8x256xf32>
    %107 = arith.addf %105, %106 : vector<8x256xf32>
    %108 = arith.truncf %107 : vector<8x256xf32> to vector<8x256xbf16>
    %c0_44 = arith.constant 0 : index
    %c0_45 = arith.constant 0 : index
    %109 = vector.load %arg13[%c0_44, %c0_45] : memref<256x256xbf16, #tpu.memory_space<vmem>>, vector<256x256xbf16>
    %cst_46 = arith.constant dense<0.000000e+00> : vector<8x256xf32>
    %110 = tpu.matmul %108, %109, %cst_46 {dimension_numbers = #tpu.dot_dimension_numbers<[1], [0], [0], [1], [0, 0, 1, 1], [], []>} : vector<8x256xbf16>, vector<256x256xbf16>, vector<8x256xf32> -> vector<8x256xf32>
    %c0_47 = arith.constant 0 : index
    %c0_48 = arith.constant 0 : index
    %111 = vector.load %arg14[%c0_47, %c0_48] : memref<1x256xf32, #tpu.memory_space<vmem>>, vector<1x256xf32>
    %112 = vector.broadcast %111 : vector<1x256xf32> to vector<8x256xf32>
    %113 = arith.addf %110, %112 : vector<8x256xf32>
    %cst_49 = arith.constant 0.0883883461 : f32
    %114 = vector.broadcast %cst_49 : f32 to vector<8x256xf32>
    %115 = arith.mulf %113, %114 : vector<8x256xf32>
    %116 = arith.truncf %3 : vector<16x256xf32> to vector<16x256xbf16>
    %c0_50 = arith.constant 0 : index
    %c0_51 = arith.constant 0 : index
    %117 = vector.load %arg15[%c0_50, %c0_51] : memref<256x512xbf16, #tpu.memory_space<vmem>>, vector<256x512xbf16>
    %cst_52 = arith.constant dense<0.000000e+00> : vector<16x512xf32>
    %118 = tpu.matmul %116, %117, %cst_52 {dimension_numbers = #tpu.dot_dimension_numbers<[1], [0], [0], [1], [0, 0, 1, 1], [], []>} : vector<16x256xbf16>, vector<256x512xbf16>, vector<16x512xf32> -> vector<16x512xf32>
    %c0_53 = arith.constant 0 : index
    %c0_54 = arith.constant 0 : index
    %119 = vector.load %arg16[%c0_53, %c0_54] : memref<1x512xf32, #tpu.memory_space<vmem>>, vector<1x512xf32>
    %120 = vector.broadcast %119 : vector<1x512xf32> to vector<16x512xf32>
    %121 = arith.addf %118, %120 : vector<16x512xf32>
    %122 = vector.extract_strided_slice %121 {offsets = [0, 0], sizes = [16, 256], strides = [1, 1]} : vector<16x512xf32> to vector<16x256xf32>
    %123 = vector.extract_strided_slice %121 {offsets = [0, 256], sizes = [16, 256], strides = [1, 1]} : vector<16x512xf32> to vector<16x256xf32>
    %c0_55 = arith.constant 0 : index
    %c0_56 = arith.constant 0 : index
    %c0_57 = arith.constant 0 : index
    %124 = vector.load %arg4[%c0_55, %c0_56, %c0_57] : memref<1x1x16xf32, #tpu.memory_space<vmem>>, vector<1x1x16xf32>
    %125 = vector.shape_cast %124 : vector<1x1x16xf32> to vector<1x16xf32>
    %c0_58 = arith.constant 0 : index
    %c0_59 = arith.constant 0 : index
    %126 = vector.load %arg17[%c0_58, %c0_59] : memref<256x256xbf16, #tpu.memory_space<vmem>>, vector<256x256xbf16>
    %c0_60 = arith.constant 0 : index
    %c0_61 = arith.constant 0 : index
    %127 = vector.load %arg18[%c0_60, %c0_61] : memref<1x256xf32, #tpu.memory_space<vmem>>, vector<1x256xf32>
    %128 = arith.truncf %115 : vector<8x256xf32> to vector<8x256xbf16>
    %129 = arith.truncf %122 : vector<16x256xf32> to vector<16x256xbf16>
    %130 = arith.truncf %123 : vector<16x256xf32> to vector<16x256xbf16>
    %131 = vector.extract_strided_slice %128 {offsets = [0, 0], sizes = [8, 128], strides = [1, 1]} : vector<8x256xbf16> to vector<8x128xbf16>
    %132 = vector.extract_strided_slice %129 {offsets = [0, 0], sizes = [16, 128], strides = [1, 1]} : vector<16x256xbf16> to vector<16x128xbf16>
    "tpu.trace_start"() <{level = 10 : i32, message = "qd,kd->qk"}> : () -> ()
    %cst_62 = arith.constant dense<0.000000e+00> : vector<8x16xf32>
    %133 = tpu.matmul %131, %132, %cst_62 {dimension_numbers = #tpu.dot_dimension_numbers<[1], [1], [0], [0], [0, 0, 1, 0], [], []>} : vector<8x128xbf16>, vector<16x128xbf16>, vector<8x16xf32> -> vector<8x16xf32>
    "tpu.trace_stop"() : () -> ()
    %134 = vector.broadcast %125 : vector<1x16xf32> to vector<8x16xf32>
    %135 = arith.addf %133, %134 : vector<8x16xf32>
    %cst_63 = arith.constant dense<0xFF800000> : vector<8xf32>
    %136 = vector.multi_reduction <maximumf>, %135, %cst_63 [1] : vector<8x16xf32> to vector<8xf32>
    %137 = vector.shape_cast %136 : vector<8xf32> to vector<8x1xf32>
    %138 = vector.broadcast %137 : vector<8x1xf32> to vector<8x16xf32>
    %139 = arith.subf %135, %138 : vector<8x16xf32>
    %140 = math.exp %139 : vector<8x16xf32>
    %cst_64 = arith.constant dense<0.000000e+00> : vector<8xf32>
    %141 = vector.multi_reduction <add>, %140, %cst_64 [1] : vector<8x16xf32> to vector<8xf32>
    %142 = vector.shape_cast %141 : vector<8xf32> to vector<8x1xf32>
    %143 = tpu.reciprocal %142 {approx = true} : vector<8x1xf32> -> vector<8x1xf32>
    %144 = vector.broadcast %143 : vector<8x1xf32> to vector<8x16xf32>
    %145 = arith.mulf %140, %144 : vector<8x16xf32>
    %146 = arith.truncf %145 : vector<8x16xf32> to vector<8x16xbf16>
    %147 = vector.extract_strided_slice %130 {offsets = [0, 0], sizes = [16, 128], strides = [1, 1]} : vector<16x256xbf16> to vector<16x128xbf16>
    %cst_65 = arith.constant dense<0.000000e+00> : vector<8x128xf32>
    %148 = tpu.matmul %146, %147, %cst_65 {dimension_numbers = #tpu.dot_dimension_numbers<[1], [0], [0], [1], [0, 0, 1, 1], [], []>} : vector<8x16xbf16>, vector<16x128xbf16>, vector<8x128xf32> -> vector<8x128xf32>
    %149 = vector.extract_strided_slice %128 {offsets = [0, 128], sizes = [8, 128], strides = [1, 1]} : vector<8x256xbf16> to vector<8x128xbf16>
    %150 = vector.extract_strided_slice %129 {offsets = [0, 128], sizes = [16, 128], strides = [1, 1]} : vector<16x256xbf16> to vector<16x128xbf16>
    "tpu.trace_start"() <{level = 10 : i32, message = "qd,kd->qk"}> : () -> ()
    %cst_66 = arith.constant dense<0.000000e+00> : vector<8x16xf32>
    %151 = tpu.matmul %149, %150, %cst_66 {dimension_numbers = #tpu.dot_dimension_numbers<[1], [1], [0], [0], [0, 0, 1, 0], [], []>} : vector<8x128xbf16>, vector<16x128xbf16>, vector<8x16xf32> -> vector<8x16xf32>
    "tpu.trace_stop"() : () -> ()
    %152 = vector.broadcast %125 : vector<1x16xf32> to vector<8x16xf32>
    %153 = arith.addf %151, %152 : vector<8x16xf32>
    %cst_67 = arith.constant dense<0xFF800000> : vector<8xf32>
    %154 = vector.multi_reduction <maximumf>, %153, %cst_67 [1] : vector<8x16xf32> to vector<8xf32>
    %155 = vector.shape_cast %154 : vector<8xf32> to vector<8x1xf32>
    %156 = vector.broadcast %155 : vector<8x1xf32> to vector<8x16xf32>
    %157 = arith.subf %153, %156 : vector<8x16xf32>
    %158 = math.exp %157 : vector<8x16xf32>
    %cst_68 = arith.constant dense<0.000000e+00> : vector<8xf32>
    %159 = vector.multi_reduction <add>, %158, %cst_68 [1] : vector<8x16xf32> to vector<8xf32>
    %160 = vector.shape_cast %159 : vector<8xf32> to vector<8x1xf32>
    %161 = tpu.reciprocal %160 {approx = true} : vector<8x1xf32> -> vector<8x1xf32>
    %162 = vector.broadcast %161 : vector<8x1xf32> to vector<8x16xf32>
    %163 = arith.mulf %158, %162 : vector<8x16xf32>
    %164 = arith.truncf %163 : vector<8x16xf32> to vector<8x16xbf16>
    %165 = vector.extract_strided_slice %130 {offsets = [0, 128], sizes = [16, 128], strides = [1, 1]} : vector<16x256xbf16> to vector<16x128xbf16>
    %cst_69 = arith.constant dense<0.000000e+00> : vector<8x128xf32>
    %166 = tpu.matmul %164, %165, %cst_69 {dimension_numbers = #tpu.dot_dimension_numbers<[1], [0], [0], [1], [0, 0, 1, 1], [], []>} : vector<8x16xbf16>, vector<16x128xbf16>, vector<8x128xf32> -> vector<8x128xf32>
    %167 = tpu.concatenate %148, %166 in 1 : vector<8x128xf32>, vector<8x128xf32> -> vector<8x256xf32>
    %168 = arith.truncf %167 : vector<8x256xf32> to vector<8x256xbf16>
    %cst_70 = arith.constant dense<0.000000e+00> : vector<8x256xf32>
    %169 = tpu.matmul %168, %126, %cst_70 {dimension_numbers = #tpu.dot_dimension_numbers<[1], [0], [0], [1], [0, 0, 1, 1], [], []>} : vector<8x256xbf16>, vector<256x256xbf16>, vector<8x256xf32> -> vector<8x256xf32>
    %170 = vector.broadcast %127 : vector<1x256xf32> to vector<8x256xf32>
    %171 = arith.addf %169, %170 : vector<8x256xf32>
    %172 = arith.addf %84, %171 : vector<8x256xf32>
    %c0_71 = arith.constant 0 : index
    %c0_72 = arith.constant 0 : index
    %173 = vector.load %arg19[%c0_71, %c0_72] : memref<1x256xf32, #tpu.memory_space<vmem>>, vector<1x256xf32>
    %c0_73 = arith.constant 0 : index
    %c0_74 = arith.constant 0 : index
    %174 = vector.load %arg20[%c0_73, %c0_74] : memref<1x256xf32, #tpu.memory_space<vmem>>, vector<1x256xf32>
    %cst_75 = arith.constant dense<0.000000e+00> : vector<8xf32>
    %175 = vector.multi_reduction <add>, %172, %cst_75 [1] : vector<8x256xf32> to vector<8xf32>
    %176 = vector.shape_cast %175 : vector<8xf32> to vector<8x1xf32>
    %cst_76 = arith.constant 2.560000e+02 : f32
    %177 = vector.broadcast %cst_76 : f32 to vector<8x1xf32>
    %178 = arith.divf %176, %177 : vector<8x1xf32>
    %179 = vector.broadcast %178 : vector<8x1xf32> to vector<8x256xf32>
    %180 = arith.subf %172, %179 : vector<8x256xf32>
    %181 = arith.mulf %180, %180 : vector<8x256xf32>
    %cst_77 = arith.constant dense<0.000000e+00> : vector<8xf32>
    %182 = vector.multi_reduction <add>, %181, %cst_77 [1] : vector<8x256xf32> to vector<8xf32>
    %183 = vector.shape_cast %182 : vector<8xf32> to vector<8x1xf32>
    %cst_78 = arith.constant 0.00392156886 : f32
    %184 = vector.broadcast %cst_78 : f32 to vector<8x1xf32>
    %185 = arith.mulf %183, %184 : vector<8x1xf32>
    %186 = math.sqrt %185 : vector<8x1xf32>
    %cst_79 = arith.constant 9.99999997E-7 : f32
    %187 = vector.broadcast %cst_79 : f32 to vector<8x1xf32>
    %188 = arith.addf %186, %187 : vector<8x1xf32>
    %189 = tpu.reciprocal %188 {approx = true} : vector<8x1xf32> -> vector<8x1xf32>
    %190 = vector.broadcast %189 : vector<8x1xf32> to vector<8x256xf32>
    %191 = arith.mulf %180, %190 : vector<8x256xf32>
    %192 = vector.broadcast %173 : vector<1x256xf32> to vector<8x256xf32>
    %193 = arith.mulf %192, %191 : vector<8x256xf32>
    %194 = vector.broadcast %174 : vector<1x256xf32> to vector<8x256xf32>
    %195 = arith.addf %193, %194 : vector<8x256xf32>
    %196 = arith.truncf %195 : vector<8x256xf32> to vector<8x256xbf16>
    %c0_80 = arith.constant 0 : index
    %c0_81 = arith.constant 0 : index
    %197 = vector.load %arg21[%c0_80, %c0_81] : memref<256x512xbf16, #tpu.memory_space<vmem>>, vector<256x512xbf16>
    %cst_82 = arith.constant dense<0.000000e+00> : vector<8x512xf32>
    %198 = tpu.matmul %196, %197, %cst_82 {dimension_numbers = #tpu.dot_dimension_numbers<[1], [0], [0], [1], [0, 0, 1, 1], [], []>} : vector<8x256xbf16>, vector<256x512xbf16>, vector<8x512xf32> -> vector<8x512xf32>
    %c0_83 = arith.constant 0 : index
    %c0_84 = arith.constant 0 : index
    %199 = vector.load %arg22[%c0_83, %c0_84] : memref<1x512xf32, #tpu.memory_space<vmem>>, vector<1x512xf32>
    %200 = vector.broadcast %199 : vector<1x512xf32> to vector<8x512xf32>
    %201 = arith.addf %198, %200 : vector<8x512xf32>
    %cst_85 = arith.constant 0.000000e+00 : f32
    %202 = vector.broadcast %cst_85 : f32 to vector<8x512xf32>
    %203 = arith.maximumf %201, %202 : vector<8x512xf32>
    %204 = arith.truncf %203 : vector<8x512xf32> to vector<8x512xbf16>
    %c0_86 = arith.constant 0 : index
    %c0_87 = arith.constant 0 : index
    %205 = vector.load %arg23[%c0_86, %c0_87] : memref<512x256xbf16, #tpu.memory_space<vmem>>, vector<512x256xbf16>
    %cst_88 = arith.constant dense<0.000000e+00> : vector<8x256xf32>
    %206 = tpu.matmul %204, %205, %cst_88 {dimension_numbers = #tpu.dot_dimension_numbers<[1], [0], [0], [1], [0, 0, 1, 1], [], []>} : vector<8x512xbf16>, vector<512x256xbf16>, vector<8x256xf32> -> vector<8x256xf32>
    %c0_89 = arith.constant 0 : index
    %c0_90 = arith.constant 0 : index
    %207 = vector.load %arg24[%c0_89, %c0_90] : memref<1x256xf32, #tpu.memory_space<vmem>>, vector<1x256xf32>
    %208 = vector.broadcast %207 : vector<1x256xf32> to vector<8x256xf32>
    %209 = arith.addf %206, %208 : vector<8x256xf32>
    %210 = arith.addf %172, %209 : vector<8x256xf32>
    %c0_91 = arith.constant 0 : index
    %c0_92 = arith.constant 0 : index
    %c0_93 = arith.constant 0 : index
    %211 = vector.load %arg25[%c0_91, %c0_92, %c0_93] : memref<1x8x256xf32, #tpu.memory_space<vmem>>, vector<1x8x256xf32>
    %212 = vector.shape_cast %211 : vector<1x8x256xf32> to vector<8x256xf32>
    %213 = vector.shape_cast %210 : vector<8x256xf32> to vector<1x8x256xf32>
    tpu.vector_store %arg25[%c0_91, %c0_92, %c0_93], %213 {strides = array<i32>} : memref<1x8x256xf32, #tpu.memory_space<vmem>>, vector<1x8x256xf32>,
    return
  }
  func.func @transform_0(%arg0: i32) -> (i32, i32, i32) {
    %c0_i32 = arith.constant 0 : i32
    %c0_i32_0 = arith.constant 0 : i32
    %c0_i32_1 = arith.constant 0 : i32
    return %arg0, %c0_i32, %c0_i32_0 : i32, i32, i32
  }
  func.func @transform_1(%arg0: i32) -> (i32, i32, i32) {
    %c0_i32 = arith.constant 0 : i32
    %c0_i32_0 = arith.constant 0 : i32
    %c0_i32_1 = arith.constant 0 : i32
    return %arg0, %c0_i32, %c0_i32_0 : i32, i32, i32
  }
  func.func @transform_2(%arg0: i32) -> (i32, i32, i32) {
    %c0_i32 = arith.constant 0 : i32
    %c0_i32_0 = arith.constant 0 : i32
    %c0_i32_1 = arith.constant 0 : i32
    return %arg0, %c0_i32, %c0_i32_0 : i32, i32, i32
  }
  func.func @transform_3(%arg0: i32) -> (i32, i32, i32) {
    %c0_i32 = arith.constant 0 : i32
    %c0_i32_0 = arith.constant 0 : i32
    %c0_i32_1 = arith.constant 0 : i32
    return %arg0, %c0_i32, %c0_i32_0 : i32, i32, i32
  }
  func.func @transform_4(%arg0: i32) -> (i32, i32) {
    %c0_i32 = arith.constant 0 : i32
    %c0_i32_0 = arith.constant 0 : i32
    %c0_i32_1 = arith.constant 0 : i32
    return %c0_i32, %c0_i32_0 : i32, i32
  }
  func.func @transform_5(%arg0: i32) -> (i32, i32) {
    %c0_i32 = arith.constant 0 : i32
    %c0_i32_0 = arith.constant 0 : i32
    %c0_i32_1 = arith.constant 0 : i32
    return %c0_i32, %c0_i32_0 : i32, i32
  }
  func.func @transform_6(%arg0: i32) -> (i32, i32) {
    %c0_i32 = arith.constant 0 : i32
    %c0_i32_0 = arith.constant 0 : i32
    %c0_i32_1 = arith.constant 0 : i32
    return %c0_i32, %c0_i32_0 : i32, i32
  }
  func.func @transform_7(%arg0: i32) -> (i32, i32) {
    %c0_i32 = arith.constant 0 : i32
    %c0_i32_0 = arith.constant 0 : i32
    %c0_i32_1 = arith.constant 0 : i32
    return %c0_i32, %c0_i32_0 : i32, i32
  }
  func.func @transform_8(%arg0: i32) -> (i32, i32) {
    %c0_i32 = arith.constant 0 : i32
    %c0_i32_0 = arith.constant 0 : i32
    %c0_i32_1 = arith.constant 0 : i32
    return %c0_i32, %c0_i32_0 : i32, i32
  }
  func.func @transform_9(%arg0: i32) -> (i32, i32) {
    %c0_i32 = arith.constant 0 : i32
    %c0_i32_0 = arith.constant 0 : i32
    %c0_i32_1 = arith.constant 0 : i32
    return %c0_i32, %c0_i32_0 : i32, i32
  }
  func.func @transform_10(%arg0: i32) -> (i32, i32) {
    %c0_i32 = arith.constant 0 : i32
    %c0_i32_0 = arith.constant 0 : i32
    %c0_i32_1 = arith.constant 0 : i32
    return %c0_i32, %c0_i32_0 : i32, i32
  }
  func.func @transform_11(%arg0: i32) -> (i32, i32) {
    %c0_i32 = arith.constant 0 : i32
    %c0_i32_0 = arith.constant 0 : i32
    %c0_i32_1 = arith.constant 0 : i32
    return %c0_i32, %c0_i32_0 : i32, i32
  }
  func.func @transform_12(%arg0: i32) -> (i32, i32) {
    %c0_i32 = arith.constant 0 : i32
    %c0_i32_0 = arith.constant 0 : i32
    %c0_i32_1 = arith.constant 0 : i32
    return %c0_i32, %c0_i32_0 : i32, i32
  }
  func.func @transform_13(%arg0: i32) -> (i32, i32) {
    %c0_i32 = arith.constant 0 : i32
    %c0_i32_0 = arith.constant 0 : i32
    %c0_i32_1 = arith.constant 0 : i32
    return %c0_i32, %c0_i32_0 : i32, i32
  }
  func.func @transform_14(%arg0: i32) -> (i32, i32) {
    %c0_i32 = arith.constant 0 : i32
    %c0_i32_0 = arith.constant 0 : i32
    %c0_i32_1 = arith.constant 0 : i32
    return %c0_i32, %c0_i32_0 : i32, i32
  }
  func.func @transform_15(%arg0: i32) -> (i32, i32) {
    %c0_i32 = arith.constant 0 : i32
    %c0_i32_0 = arith.constant 0 : i32
    %c0_i32_1 = arith.constant 0 : i32
    return %c0_i32, %c0_i32_0 : i32, i32
  }
  func.func @transform_16(%arg0: i32) -> (i32, i32) {
    %c0_i32 = arith.constant 0 : i32
    %c0_i32_0 = arith.constant 0 : i32
    %c0_i32_1 = arith.constant 0 : i32
    return %c0_i32, %c0_i32_0 : i32, i32
  }
  func.func @transform_17(%arg0: i32) -> (i32, i32) {
    %c0_i32 = arith.constant 0 : i32
    %c0_i32_0 = arith.constant 0 : i32
    %c0_i32_1 = arith.constant 0 : i32
    return %c0_i32, %c0_i32_0 : i32, i32
  }
  func.func @transform_18(%arg0: i32) -> (i32, i32) {
    %c0_i32 = arith.constant 0 : i32
    %c0_i32_0 = arith.constant 0 : i32
    %c0_i32_1 = arith.constant 0 : i32
    return %c0_i32, %c0_i32_0 : i32, i32
  }
  func.func @transform_19(%arg0: i32) -> (i32, i32) {
    %c0_i32 = arith.constant 0 : i32
    %c0_i32_0 = arith.constant 0 : i32
    %c0_i32_1 = arith.constant 0 : i32
    return %c0_i32, %c0_i32_0 : i32, i32
  }
  func.func @transform_20(%arg0: i32) -> (i32, i32) {
    %c0_i32 = arith.constant 0 : i32
    %c0_i32_0 = arith.constant 0 : i32
    %c0_i32_1 = arith.constant 0 : i32
    return %c0_i32, %c0_i32_0 : i32, i32
  }
  func.func @transform_21(%arg0: i32) -> (i32, i32) {
    %c0_i32 = arith.constant 0 : i32
    %c0_i32_0 = arith.constant 0 : i32
    %c0_i32_1 = arith.constant 0 : i32
    return %c0_i32, %c0_i32_0 : i32, i32
  }
  func.func @transform_22(%arg0: i32) -> (i32, i32) {
    %c0_i32 = arith.constant 0 : i32
    %c0_i32_0 = arith.constant 0 : i32
    %c0_i32_1 = arith.constant 0 : i32
    return %c0_i32, %c0_i32_0 : i32, i32
  }
  func.func @transform_23(%arg0: i32) -> (i32, i32) {
    %c0_i32 = arith.constant 0 : i32
    %c0_i32_0 = arith.constant 0 : i32
    %c0_i32_1 = arith.constant 0 : i32
    return %c0_i32, %c0_i32_0 : i32, i32
  }
  func.func @transform_24(%arg0: i32) -> (i32, i32, i32) {
    %c0_i32 = arith.constant 0 : i32
    %c0_i32_0 = arith.constant 0 : i32
    %c0_i32_1 = arith.constant 0 : i32
    return %arg0, %c0_i32, %c0_i32_0 : i32, i32, i32
  }
}

</mosaic_0001>

<llo_original>
// kernel: tpu_custom_call.1
$region0: #{tpu_custom_call.1}
  #allocation0 [shape = 'u32[]', space=smem, size = 0x4, offset = 0x4, fixed_abs, tag = 'smem constant byte address 0x4 - core index']
  #allocation1 [shape = 'u32[144,128]{1,0:T(1,128)}', space=vmem, size = 0x12000, scoped, tag = 'internal scratch']
  %s0 = inlined_call_operand.hbm [shape: f32[2,8,256], index: 0, kind: input, shape index: {}]
  %s1 = inlined_call_operand.hbm [shape: f32[2,16,256], index: 1, kind: input, shape index: {}]
  %s2 = inlined_call_operand.hbm [shape: f32[2,8,8], index: 2, kind: input, shape index: {}]
  %s3 = inlined_call_operand.hbm [shape: f32[2,1,16], index: 3, kind: input, shape index: {}]
  %s4 = inlined_call_operand.hbm [shape: f32[1,256], index: 4, kind: input, shape index: {}]
  %s5 = inlined_call_operand.vmem [shape: f32[1,256], index: 5, kind: input, shape index: {}]
  %s6 = inlined_call_operand.hbm [shape: bf16[256,768], index: 6, kind: input, shape index: {}]
  %s7 = inlined_call_operand.vmem [shape: f32[1,768], index: 7, kind: input, shape index: {}]
  %s8 = inlined_call_operand.hbm [shape: bf16[256,256], index: 8, kind: input, shape index: {}]
  %s9 = inlined_call_operand.vmem [shape: f32[1,256], index: 9, kind: input, shape index: {}]
  %s10 = inlined_call_operand.vmem [shape: f32[1,256], index: 10, kind: input, shape index: {}]
  %s11 = inlined_call_operand.vmem [shape: f32[1,256], index: 11, kind: input, shape index: {}]
  %s12 = inlined_call_operand.hbm [shape: bf16[256,256], index: 12, kind: input, shape index: {}]
  %s13 = inlined_call_operand.vmem [shape: f32[1,256], index: 13, kind: input, shape index: {}]
  %s14 = inlined_call_operand.hbm [shape: bf16[256,512], index: 14, kind: input, shape index: {}]
  %s15 = inlined_call_operand.vmem [shape: f32[1,512], index: 15, kind: input, shape index: {}]
  %s16 = inlined_call_operand.hbm [shape: bf16[256,256], index: 16, kind: input, shape index: {}]
  %s17 = inlined_call_operand.vmem [shape: f32[1,256], index: 17, kind: input, shape index: {}]
  %s18 = inlined_call_operand.vmem [shape: f32[1,256], index: 18, kind: input, shape index: {}]
  %s19 = inlined_call_operand.vmem [shape: f32[1,256], index: 19, kind: input, shape index: {}]
  %s20 = inlined_call_operand.hbm [shape: bf16[256,512], index: 20, kind: input, shape index: {}]
  %s21 = inlined_call_operand.vmem [shape: f32[1,512], index: 21, kind: input, shape index: {}]
  %s22 = inlined_call_operand.hbm [shape: bf16[512,256], index: 22, kind: input, shape index: {}]
  %s23 = inlined_call_operand.vmem [shape: f32[1,256], index: 23, kind: input, shape index: {}]
  %s24 = inlined_call_operand.hbm [shape: f32[2,8,256], index: 24, kind: output, shape index: {}]
  %s25 = sld [smem:[#allocation0]]
  $region177: #{tpu_custom_call.1} parent=0
    _
  %s27 = ssub.s32 1, %s25
  %s28 = scalar_select 0, %s27, %s25
  $region1: #{tpu_custom_call.1} parent=0
    #allocation2 [shape = 'u8[16384]{0}', space=vmem, size = 0x4000, scoped, tag = 'input window, operand 0']
    #allocation3 [shape = 's32[2]{0}', space=sflag, size = 0x8, scoped, tag = 'scoped memory for tpu_custom_call.1']
    #allocation4 [shape = 's32[2]{0}', space=sflag, size = 0x8, scoped, tag = 'scoped memory for tpu_custom_call.1']
    #allocation5 [shape = 'u8[32768]{0}', space=vmem, size = 0x8000, scoped, tag = 'input window, operand 1']
    #allocation6 [shape = 's32[2]{0}', space=sflag, size = 0x8, scoped, tag = 'scoped memory for tpu_custom_call.1']
    #allocation7 [shape = 'u8[8192]{0}', space=vmem, size = 0x2000, scoped, tag = 'input window, operand 2']
    #allocation8 [shape = 'u8[1024]{0}', space=vmem, size = 0x400, scoped, tag = 'input window, operand 3']
    #allocation9 [shape = 's32[2]{0}', space=sflag, size = 0x8, scoped, tag = 'scoped memory for tpu_custom_call.1']
    #allocation10 [shape = 'u8[1024]{0}', space=vmem, size = 0x400, scoped, tag = 'input window, operand 4, single buffered']
    #allocation11 [shape = 'u8[393216]{0}', space=vmem, size = 0x60000, scoped, tag = 'input window, operand 6, single buffered']
    #allocation12 [shape = 's32[1]{0}', space=sflag, size = 0x4, scoped, tag = 'scoped memory for tpu_custom_call.1']
    #allocation13 [shape = 'u8[131072]{0}', space=vmem, size = 0x20000, scoped, tag = 'input window, operand 8, single buffered']
    #allocation14 [shape = 'u8[131072]{0}', space=vmem, size = 0x20000, scoped, tag = 'input window, operand 12, single buffered']
    #allocation15 [shape = 's32[1]{0}', space=sflag, size = 0x4, scoped, tag = 'scoped memory for tpu_custom_call.1']
    #allocation16 [shape = 'u8[262144]{0}', space=vmem, size = 0x40000, scoped, tag = 'input window, operand 14, single buffered']
    #allocation17 [shape = 'u8[131072]{0}', space=vmem, size = 0x20000, scoped, tag = 'input window, operand 16, single buffered']
    #allocation18 [shape = 's32[1]{0}', space=sflag, size = 0x4, scoped, tag = 'scoped memory for tpu_custom_call.1']
    #allocation19 [shape = 'u8[262144]{0}', space=vmem, size = 0x40000, scoped, tag = 'input window, operand 20, single buffered']
    #allocation20 [shape = 'u8[262144]{0}', space=vmem, size = 0x40000, scoped, tag = 'input window, operand 22, single buffered']
    #allocation21 [shape = 's32[1]{0}', space=sflag, size = 0x4, scoped, tag = 'scoped memory for tpu_custom_call.1']
    #allocation22 [shape = 'u8[16384]{0}', space=vmem, size = 0x4000, scoped, tag = 'output window, operand 0']
    %29 = vsyncpa [#allocation3], 0
    %s30 = scalar_lea.sflag [#allocation3], 1
    %31 = vsyncpa %s30, 0
    %32 = vsyncpa [#allocation6], 0
    %s33 = scalar_lea.sflag [#allocation6], 1
    %34 = vsyncpa %s33, 0
    %35 = vsyncpa [#allocation9], 0
    %s36 = scalar_lea.sflag [#allocation9], 1
    %37 = vsyncpa %s36, 0
    %38 = vsyncpa [#allocation12], 0
    %39 = vsyncpa [#allocation15], 0
    %40 = vsyncpa [#allocation18], 0
    %41 = vsyncpa [#allocation21], 0
    %42 = vsyncpa [#allocation4], 0
    %s43 = scalar_lea.sflag [#allocation4], 1
    %44 = vsyncpa %s43, 0
    loop: start=0, step=1, limit=4
    $region2: #{tpu_custom_call.1} parent=1 // loop_pre_header
      _
    $region3: #{tpu_custom_call.1} parent=1 // loop_header
      %s46 = sphi 0, %s50
      %p47 = scmp.ge.s32.totalorder %s46, 4
      %s56 = sphi 0, %s58
      %s59 = sphi 0, %s56
      %s60 = sphi 0, %s59
      %s76 = sphi 0, %s60
      %s82 = sphi 0, %s84
      %s85 = sphi 0, %s82
      %s86 = sphi 0, %s85
      %s102 = sphi 0, %s86
      %s108 = sphi 0, %s110
      %s111 = sphi 0, %s108
      %s112 = sphi 0, %s111
      %s128 = sphi 0, %s112
      %s134 = sphi 0, %s136
      %s137 = sphi 0, %s134
      %s138 = sphi 0, %s137
      %s154 = sphi 0, %s138
      %s158 = sphi 0, %s158
      %s160 = sphi 0, %s158
      %s161 = sphi 0, %s160
      %s175 = sphi 0, %s161
      %s179 = sphi 0, %s179
      %s181 = sphi 0, %s179
      %s182 = sphi 0, %s181
      %s196 = sphi 0, %s182
      %s200 = sphi 0, %s200
      %s202 = sphi 0, %s200
      %s203 = sphi 0, %s202
      %s217 = sphi 0, %s203
      %s221 = sphi 0, %s221
      %s223 = sphi 0, %s221
      %s224 = sphi 0, %s223
      %s238 = sphi 0, %s224
      %s242 = sphi 0, %s242
      %s244 = sphi 0, %s242
      %s245 = sphi 0, %s244
      %s259 = sphi 0, %s245
      %s263 = sphi 0, %s263
      %s265 = sphi 0, %s263
      %s266 = sphi 0, %s265
      %s280 = sphi 0, %s266
      %s284 = sphi 0, %s284
      %s286 = sphi 0, %s284
      %s287 = sphi 0, %s286
      %s301 = sphi 0, %s287
      %s305 = sphi 0, %s305
      %s307 = sphi 0, %s305
      %s308 = sphi 0, %s307
      %s322 = sphi 0, %s308
      %s326 = sphi 0, %s326
      %s328 = sphi 0, %s326
      %s329 = sphi 0, %s328
      %s343 = sphi 0, %s329
      %s347 = sphi 0, %s347
      %s349 = sphi 0, %s347
      %s350 = sphi 0, %s349
      %s364 = sphi 0, %s350
      %s368 = sphi 0, %s368
      %s370 = sphi 0, %s368
      %s371 = sphi 0, %s370
      %s385 = sphi 0, %s371
      %s389 = sphi 0, %s389
      %s391 = sphi 0, %s389
      %s392 = sphi 0, %s391
      %s406 = sphi 0, %s392
      %s410 = sphi 0, %s410
      %s412 = sphi 0, %s410
      %s413 = sphi 0, %s412
      %s427 = sphi 0, %s413
      %s431 = sphi 0, %s431
      %s433 = sphi 0, %s431
      %s434 = sphi 0, %s433
      %s448 = sphi 0, %s434
      %s452 = sphi 0, %s452
      %s454 = sphi 0, %s452
      %s455 = sphi 0, %s454
      %s469 = sphi 0, %s455
      %s473 = sphi 0, %s473
      %s475 = sphi 0, %s473
      %s476 = sphi 0, %s475
      %s490 = sphi 0, %s476
      %s494 = sphi 0, %s494
      %s496 = sphi 0, %s494
      %s497 = sphi 0, %s496
      %s511 = sphi 0, %s497
      %s515 = sphi 0, %s515
      %s517 = sphi 0, %s515
      %s518 = sphi 0, %s517
      %s532 = sphi 0, %s518
      %s536 = sphi 0, %s536
      %s538 = sphi 0, %s536
      %s539 = sphi 0, %s538
      %s553 = sphi 0, %s539
      %s557 = sphi 0, %s557
      %s559 = sphi 0, %s557
      %s560 = sphi 0, %s559
      %s574 = sphi 0, %s560
      %s580 = sphi 0, %s582
      %s583 = sphi 0, %s580
      %s584 = sphi 0, %s583
      %s600 = sphi 0, %s584
    $region4: #{tpu_custom_call.1} parent=1 // loop_header_branch
      %49 = sbr.rel (%p47) target = $region8
    $region5: #{tpu_custom_call.1} parent=1 // loop_body
      %s51 = ssub.s32 %s46, 1
      %s52 = ssub.s32 %s46, 2
      %s53 = sadd.s32 %s46, 1
      %s54 = ssub.s32 %s46, %s53
      %p55 = scmp.eq.s32.totalorder %s54, 0
      %s57 = sadd.s32 %s56, 1
      %s58 = scalar_select %p55, %s56, %s57
      %p61 = pneg %p55
      %p62 = scmp.eq.s32.totalorder %s46, 1
      %p63 = por %p61, %p62
      %p64 = scmp.ne.s32.totalorder %s56, %s59
      %p65 = scmp.eq.s32.totalorder %s46, 0
      %p66 = por %p64, %p65
      %p67 = scmp.ne.s32.totalorder %s56, %s59
      %p68 = scmp.eq.s32.totalorder %s51, 1
      %p69 = por %p67, %p68
      %p70 = scmp.ne.s32.totalorder %s59, %s60
      %p71 = scmp.eq.s32.totalorder %s51, 0
      %p72 = por %p70, %p71
      %p73 = scmp.ne.s32.totalorder %s59, %s60
      %p74 = scmp.eq.s32.totalorder %s52, 1
      %p75 = por %p73, %p74
      %p77 = scmp.ne.s32.totalorder %s60, %s76
      %p78 = scmp.eq.s32.totalorder %s52, 0
      %p79 = por %p77, %p78
      %s80 = ssub.s32 %s46, %s53
      %p81 = scmp.eq.s32.totalorder %s80, 0
      %s83 = sadd.s32 %s82, 1
      %s84 = scalar_select %p81, %s82, %s83
      %p87 = pneg %p81
      %p88 = scmp.eq.s32.totalorder %s46, 1
      %p89 = por %p87, %p88
      %p90 = scmp.ne.s32.totalorder %s82, %s85
      %p91 = scmp.eq.s32.totalorder %s46, 0
      %p92 = por %p90, %p91
      %p93 = scmp.ne.s32.totalorder %s82, %s85
      %p94 = scmp.eq.s32.totalorder %s51, 1
      %p95 = por %p93, %p94
      %p96 = scmp.ne.s32.totalorder %s85, %s86
      %p97 = scmp.eq.s32.totalorder %s51, 0
      %p98 = por %p96, %p97
      %p99 = scmp.ne.s32.totalorder %s85, %s86
      %p100 = scmp.eq.s32.totalorder %s52, 1
      %p101 = por %p99, %p100
      %p103 = scmp.ne.s32.totalorder %s86, %s102
      %p104 = scmp.eq.s32.totalorder %s52, 0
      %p105 = por %p103, %p104
      %s106 = ssub.s32 %s46, %s53
      %p107 = scmp.eq.s32.totalorder %s106, 0
      %s109 = sadd.s32 %s108, 1
      %s110 = scalar_select %p107, %s108, %s109
      %p113 = pneg %p107
      %p114 = scmp.eq.s32.totalorder %s46, 1
      %p115 = por %p113, %p114
      %p116 = scmp.ne.s32.totalorder %s108, %s111
      %p117 = scmp.eq.s32.totalorder %s46, 0
      %p118 = por %p116, %p117
      %p119 = scmp.ne.s32.totalorder %s108, %s111
      %p120 = scmp.eq.s32.totalorder %s51, 1
      %p121 = por %p119, %p120
      %p122 = scmp.ne.s32.totalorder %s111, %s112
      %p123 = scmp.eq.s32.totalorder %s51, 0
      %p124 = por %p122, %p123
      %p125 = scmp.ne.s32.totalorder %s111, %s112
      %p126 = scmp.eq.s32.totalorder %s52, 1
      %p127 = por %p125, %p126
      %p129 = scmp.ne.s32.totalorder %s112, %s128
      %p130 = scmp.eq.s32.totalorder %s52, 0
      %p131 = por %p129, %p130
      %s132 = ssub.s32 %s46, %s53
      %p133 = scmp.eq.s32.totalorder %s132, 0
      %s135 = sadd.s32 %s134, 1
      %s136 = scalar_select %p133, %s134, %s135
      %p139 = pneg %p133
      %p140 = scmp.eq.s32.totalorder %s46, 1
      %p141 = por %p139, %p140
      %p142 = scmp.ne.s32.totalorder %s134, %s137
      %p143 = scmp.eq.s32.totalorder %s46, 0
      %p144 = por %p142, %p143
      %p145 = scmp.ne.s32.totalorder %s134, %s137
      %p146 = scmp.eq.s32.totalorder %s51, 1
      %p147 = por %p145, %p146
      %p148 = scmp.ne.s32.totalorder %s137, %s138
      %p149 = scmp.eq.s32.totalorder %s51, 0
      %p150 = por %p148, %p149
      %p151 = scmp.ne.s32.totalorder %s137, %s138
      %p152 = scmp.eq.s32.totalorder %s52, 1
      %p153 = por %p151, %p152
      %p155 = scmp.ne.s32.totalorder %s138, %s154
      %p156 = scmp.eq.s32.totalorder %s52, 0
      %p157 = por %p155, %p156
      %s159 = sadd.s32 %s158, 1
      %p162 = scmp.eq.s32.totalorder %s46, 1
      %p163 = scmp.ne.s32.totalorder %s158, %s160
      %p164 = scmp.eq.s32.totalorder %s46, 0
      %p165 = por %p163, %p164
      %p166 = scmp.ne.s32.totalorder %s158, %s160
      %p167 = scmp.eq.s32.totalorder %s51, 1
      %p168 = por %p166, %p167
      %p169 = scmp.ne.s32.totalorder %s160, %s161
      %p170 = scmp.eq.s32.totalorder %s51, 0
      %p171 = por %p169, %p170
      %p172 = scmp.ne.s32.totalorder %s160, %s161
      %p173 = scmp.eq.s32.totalorder %s52, 1
      %p174 = por %p172, %p173
      %p176 = scmp.ne.s32.totalorder %s161, %s175
      %p177 = scmp.eq.s32.totalorder %s52, 0
      %p178 = por %p176, %p177
      %s180 = sadd.s32 %s179, 1
      %p183 = scmp.eq.s32.totalorder %s46, 1
      %p184 = scmp.ne.s32.totalorder %s179, %s181
      %p185 = scmp.eq.s32.totalorder %s46, 0
      %p186 = por %p184, %p185
      %p187 = scmp.ne.s32.totalorder %s179, %s181
      %p188 = scmp.eq.s32.totalorder %s51, 1
      %p189 = por %p187, %p188
      %p190 = scmp.ne.s32.totalorder %s181, %s182
      %p191 = scmp.eq.s32.totalorder %s51, 0
      %p192 = por %p190, %p191
      %p193 = scmp.ne.s32.totalorder %s181, %s182
      %p194 = scmp.eq.s32.totalorder %s52, 1
      %p195 = por %p193, %p194
      %p197 = scmp.ne.s32.totalorder %s182, %s196
      %p198 = scmp.eq.s32.totalorder %s52, 0
      %p199 = por %p197, %p198
      %s201 = sadd.s32 %s200, 1
      %p204 = scmp.eq.s32.totalorder %s46, 1
      %p205 = scmp.ne.s32.totalorder %s200, %s202
      %p206 = scmp.eq.s32.totalorder %s46, 0
      %p207 = por %p205, %p206
      %p208 = scmp.ne.s32.totalorder %s200, %s202
      %p209 = scmp.eq.s32.totalorder %s51, 1
      %p210 = por %p208, %p209
      %p211 = scmp.ne.s32.totalorder %s202, %s203
      %p212 = scmp.eq.s32.totalorder %s51, 0
      %p213 = por %p211, %p212
      %p214 = scmp.ne.s32.totalorder %s202, %s203
      %p215 = scmp.eq.s32.totalorder %s52, 1
      %p216 = por %p214, %p215
      %p218 = scmp.ne.s32.totalorder %s203, %s217
      %p219 = scmp.eq.s32.totalorder %s52, 0
      %p220 = por %p218, %p219
      %s222 = sadd.s32 %s221, 1
      %p225 = scmp.eq.s32.totalorder %s46, 1
      %p226 = scmp.ne.s32.totalorder %s221, %s223
      %p227 = scmp.eq.s32.totalorder %s46, 0
      %p228 = por %p226, %p227
      %p229 = scmp.ne.s32.totalorder %s221, %s223
      %p230 = scmp.eq.s32.totalorder %s51, 1
      %p231 = por %p229, %p230
      %p232 = scmp.ne.s32.totalorder %s223, %s224
      %p233 = scmp.eq.s32.totalorder %s51, 0
      %p234 = por %p232, %p233
      %p235 = scmp.ne.s32.totalorder %s223, %s224
      %p236 = scmp.eq.s32.totalorder %s52, 1
      %p237 = por %p235, %p236
      %p239 = scmp.ne.s32.totalorder %s224, %s238
      %p240 = scmp.eq.s32.totalorder %s52, 0
      %p241 = por %p239, %p240
      %s243 = sadd.s32 %s242, 1
      %p246 = scmp.eq.s32.totalorder %s46, 1
      %p247 = scmp.ne.s32.totalorder %s242, %s244
      %p248 = scmp.eq.s32.totalorder %s46, 0
      %p249 = por %p247, %p248
      %p250 = scmp.ne.s32.totalorder %s242, %s244
      %p251 = scmp.eq.s32.totalorder %s51, 1
      %p252 = por %p250, %p251
      %p253 = scmp.ne.s32.totalorder %s244, %s245
      %p254 = scmp.eq.s32.totalorder %s51, 0
      %p255 = por %p253, %p254
      %p256 = scmp.ne.s32.totalorder %s244, %s245
      %p257 = scmp.eq.s32.totalorder %s52, 1
      %p258 = por %p256, %p257
      %p260 = scmp.ne.s32.totalorder %s245, %s259
      %p261 = scmp.eq.s32.totalorder %s52, 0
      %p262 = por %p260, %p261
      %s264 = sadd.s32 %s263, 1
      %p267 = scmp.eq.s32.totalorder %s46, 1
      %p268 = scmp.ne.s32.totalorder %s263, %s265
      %p269 = scmp.eq.s32.totalorder %s46, 0
      %p270 = por %p268, %p269
      %p271 = scmp.ne.s32.totalorder %s263, %s265
      %p272 = scmp.eq.s32.totalorder %s51, 1
      %p273 = por %p271, %p272
      %p274 = scmp.ne.s32.totalorder %s265, %s266
      %p275 = scmp.eq.s32.totalorder %s51, 0
      %p276 = por %p274, %p275
      %p277 = scmp.ne.s32.totalorder %s265, %s266
      %p278 = scmp.eq.s32.totalorder %s52, 1
      %p279 = por %p277, %p278
      %p281 = scmp.ne.s32.totalorder %s266, %s280
      %p282 = scmp.eq.s32.totalorder %s52, 0
      %p283 = por %p281, %p282
      %s285 = sadd.s32 %s284, 1
      %p288 = scmp.eq.s32.totalorder %s46, 1
      %p289 = scmp.ne.s32.totalorder %s284, %s286
      %p290 = scmp.eq.s32.totalorder %s46, 0
      %p291 = por %p289, %p290
      %p292 = scmp.ne.s32.totalorder %s284, %s286
      %p293 = scmp.eq.s32.totalorder %s51, 1
      %p294 = por %p292, %p293
      %p295 = scmp.ne.s32.totalorder %s286, %s287
      %p296 = scmp.eq.s32.totalorder %s51, 0
      %p297 = por %p295, %p296
      %p298 = scmp.ne.s32.totalorder %s286, %s287
      %p299 = scmp.eq.s32.totalorder %s52, 1
      %p300 = por %p298, %p299
      %p302 = scmp.ne.s32.totalorder %s287, %s301
      %p303 = scmp.eq.s32.totalorder %s52, 0
      %p304 = por %p302, %p303
      %s306 = sadd.s32 %s305, 1
      %p309 = scmp.eq.s32.totalorder %s46, 1
      %p310 = scmp.ne.s32.totalorder %s305, %s307
      %p311 = scmp.eq.s32.totalorder %s46, 0
      %p312 = por %p310, %p311
      %p313 = scmp.ne.s32.totalorder %s305, %s307
      %p314 = scmp.eq.s32.totalorder %s51, 1
      %p315 = por %p313, %p314
      %p316 = scmp.ne.s32.totalorder %s307, %s308
      %p317 = scmp.eq.s32.totalorder %s51, 0
      %p318 = por %p316, %p317
      %p319 = scmp.ne.s32.totalorder %s307, %s308
      %p320 = scmp.eq.s32.totalorder %s52, 1
      %p321 = por %p319, %p320
      %p323 = scmp.ne.s32.totalorder %s308, %s322
      %p324 = scmp.eq.s32.totalorder %s52, 0
      %p325 = por %p323, %p324
      %s327 = sadd.s32 %s326, 1
      %p330 = scmp.eq.s32.totalorder %s46, 1
      %p331 = scmp.ne.s32.totalorder %s326, %s328
      %p332 = scmp.eq.s32.totalorder %s46, 0
      %p333 = por %p331, %p332
      %p334 = scmp.ne.s32.totalorder %s326, %s328
      %p335 = scmp.eq.s32.totalorder %s51, 1
      %p336 = por %p334, %p335
      %p337 = scmp.ne.s32.totalorder %s328, %s329
      %p338 = scmp.eq.s32.totalorder %s51, 0
      %p339 = por %p337, %p338
      %p340 = scmp.ne.s32.totalorder %s328, %s329
      %p341 = scmp.eq.s32.totalorder %s52, 1
      %p342 = por %p340, %p341
      %p344 = scmp.ne.s32.totalorder %s329, %s343
      %p345 = scmp.eq.s32.totalorder %s52, 0
      %p346 = por %p344, %p345
      %s348 = sadd.s32 %s347, 1
      %p351 = scmp.eq.s32.totalorder %s46, 1
      %p352 = scmp.ne.s32.totalorder %s347, %s349
      %p353 = scmp.eq.s32.totalorder %s46, 0
      %p354 = por %p352, %p353
      %p355 = scmp.ne.s32.totalorder %s347, %s349
      %p356 = scmp.eq.s32.totalorder %s51, 1
      %p357 = por %p355, %p356
      %p358 = scmp.ne.s32.totalorder %s349, %s350
      %p359 = scmp.eq.s32.totalorder %s51, 0
      %p360 = por %p358, %p359
      %p361 = scmp.ne.s32.totalorder %s349, %s350
      %p362 = scmp.eq.s32.totalorder %s52, 1
      %p363 = por %p361, %p362
      %p365 = scmp.ne.s32.totalorder %s350, %s364
      %p366 = scmp.eq.s32.totalorder %s52, 0
      %p367 = por %p365, %p366
      %s369 = sadd.s32 %s368, 1
      %p372 = scmp.eq.s32.totalorder %s46, 1
      %p373 = scmp.ne.s32.totalorder %s368, %s370
      %p374 = scmp.eq.s32.totalorder %s46, 0
      %p375 = por %p373, %p374
      %p376 = scmp.ne.s32.totalorder %s368, %s370
      %p377 = scmp.eq.s32.totalorder %s51, 1
      %p378 = por %p376, %p377
      %p379 = scmp.ne.s32.totalorder %s370, %s371
      %p380 = scmp.eq.s32.totalorder %s51, 0
      %p381 = por %p379, %p380
      %p382 = scmp.ne.s32.totalorder %s370, %s371
      %p383 = scmp.eq.s32.totalorder %s52, 1
      %p384 = por %p382, %p383
      %p386 = scmp.ne.s32.totalorder %s371, %s385
      %p387 = scmp.eq.s32.totalorder %s52, 0
      %p388 = por %p386, %p387
      %s390 = sadd.s32 %s389, 1
      %p393 = scmp.eq.s32.totalorder %s46, 1
      %p394 = scmp.ne.s32.totalorder %s389, %s391
      %p395 = scmp.eq.s32.totalorder %s46, 0
      %p396 = por %p394, %p395
      %p397 = scmp.ne.s32.totalorder %s389, %s391
      %p398 = scmp.eq.s32.totalorder %s51, 1
      %p399 = por %p397, %p398
      %p400 = scmp.ne.s32.totalorder %s391, %s392
      %p401 = scmp.eq.s32.totalorder %s51, 0
      %p402 = por %p400, %p401
      %p403 = scmp.ne.s32.totalorder %s391, %s392
      %p404 = scmp.eq.s32.totalorder %s52, 1
      %p405 = por %p403, %p404
      %p407 = scmp.ne.s32.totalorder %s392, %s406
      %p408 = scmp.eq.s32.totalorder %s52, 0
      %p409 = por %p407, %p408
      %s411 = sadd.s32 %s410, 1
      %p414 = scmp.eq.s32.totalorder %s46, 1
      %p415 = scmp.ne.s32.totalorder %s410, %s412
      %p416 = scmp.eq.s32.totalorder %s46, 0
      %p417 = por %p415, %p416
      %p418 = scmp.ne.s32.totalorder %s410, %s412
      %p419 = scmp.eq.s32.totalorder %s51, 1
      %p420 = por %p418, %p419
      %p421 = scmp.ne.s32.totalorder %s412, %s413
      %p422 = scmp.eq.s32.totalorder %s51, 0
      %p423 = por %p421, %p422
      %p424 = scmp.ne.s32.totalorder %s412, %s413
      %p425 = scmp.eq.s32.totalorder %s52, 1
      %p426 = por %p424, %p425
      %p428 = scmp.ne.s32.totalorder %s413, %s427
      %p429 = scmp.eq.s32.totalorder %s52, 0
      %p430 = por %p428, %p429
      %s432 = sadd.s32 %s431, 1
      %p435 = scmp.eq.s32.totalorder %s46, 1
      %p436 = scmp.ne.s32.totalorder %s431, %s433
      %p437 = scmp.eq.s32.totalorder %s46, 0
      %p438 = por %p436, %p437
      %p439 = scmp.ne.s32.totalorder %s431, %s433
      %p440 = scmp.eq.s32.totalorder %s51, 1
      %p441 = por %p439, %p440
      %p442 = scmp.ne.s32.totalorder %s433, %s434
      %p443 = scmp.eq.s32.totalorder %s51, 0
      %p444 = por %p442, %p443
      %p445 = scmp.ne.s32.totalorder %s433, %s434
      %p446 = scmp.eq.s32.totalorder %s52, 1
      %p447 = por %p445, %p446
      %p449 = scmp.ne.s32.totalorder %s434, %s448
      %p450 = scmp.eq.s32.totalorder %s52, 0
      %p451 = por %p449, %p450
      %s453 = sadd.s32 %s452, 1
      %p456 = scmp.eq.s32.totalorder %s46, 1
      %p457 = scmp.ne.s32.totalorder %s452, %s454
      %p458 = scmp.eq.s32.totalorder %s46, 0
      %p459 = por %p457, %p458
      %p460 = scmp.ne.s32.totalorder %s452, %s454
      %p461 = scmp.eq.s32.totalorder %s51, 1
      %p462 = por %p460, %p461
      %p463 = scmp.ne.s32.totalorder %s454, %s455
      %p464 = scmp.eq.s32.totalorder %s51, 0
      %p465 = por %p463, %p464
      %p466 = scmp.ne.s32.totalorder %s454, %s455
      %p467 = scmp.eq.s32.totalorder %s52, 1
      %p468 = por %p466, %p467
      %p470 = scmp.ne.s32.totalorder %s455, %s469
      %p471 = scmp.eq.s32.totalorder %s52, 0
      %p472 = por %p470, %p471
      %s474 = sadd.s32 %s473, 1
      %p477 = scmp.eq.s32.totalorder %s46, 1
      %p478 = scmp.ne.s32.totalorder %s473, %s475
      %p479 = scmp.eq.s32.totalorder %s46, 0
      %p480 = por %p478, %p479
      %p481 = scmp.ne.s32.totalorder %s473, %s475
      %p482 = scmp.eq.s32.totalorder %s51, 1
      %p483 = por %p481, %p482
      %p484 = scmp.ne.s32.totalorder %s475, %s476
      %p485 = scmp.eq.s32.totalorder %s51, 0
      %p486 = por %p484, %p485
      %p487 = scmp.ne.s32.totalorder %s475, %s476
      %p488 = scmp.eq.s32.totalorder %s52, 1
      %p489 = por %p487, %p488
      %p491 = scmp.ne.s32.totalorder %s476, %s490
      %p492 = scmp.eq.s32.totalorder %s52, 0
      %p493 = por %p491, %p492
      %s495 = sadd.s32 %s494, 1
      %p498 = scmp.eq.s32.totalorder %s46, 1
      %p499 = scmp.ne.s32.totalorder %s494, %s496
      %p500 = scmp.eq.s32.totalorder %s46, 0
      %p501 = por %p499, %p500
      %p502 = scmp.ne.s32.totalorder %s494, %s496
      %p503 = scmp.eq.s32.totalorder %s51, 1
      %p504 = por %p502, %p503
      %p505 = scmp.ne.s32.totalorder %s496, %s497
      %p506 = scmp.eq.s32.totalorder %s51, 0
      %p507 = por %p505, %p506
      %p508 = scmp.ne.s32.totalorder %s496, %s497
      %p509 = scmp.eq.s32.totalorder %s52, 1
      %p510 = por %p508, %p509
      %p512 = scmp.ne.s32.totalorder %s497, %s511
      %p513 = scmp.eq.s32.totalorder %s52, 0
      %p514 = por %p512, %p513
      %s516 = sadd.s32 %s515, 1
      %p519 = scmp.eq.s32.totalorder %s46, 1
      %p520 = scmp.ne.s32.totalorder %s515, %s517
      %p521 = scmp.eq.s32.totalorder %s46, 0
      %p522 = por %p520, %p521
      %p523 = scmp.ne.s32.totalorder %s515, %s517
      %p524 = scmp.eq.s32.totalorder %s51, 1
      %p525 = por %p523, %p524
      %p526 = scmp.ne.s32.totalorder %s517, %s518
      %p527 = scmp.eq.s32.totalorder %s51, 0
      %p528 = por %p526, %p527
      %p529 = scmp.ne.s32.totalorder %s517, %s518
      %p530 = scmp.eq.s32.totalorder %s52, 1
      %p531 = por %p529, %p530
      %p533 = scmp.ne.s32.totalorder %s518, %s532
      %p534 = scmp.eq.s32.totalorder %s52, 0
      %p535 = por %p533, %p534
      %s537 = sadd.s32 %s536, 1
      %p540 = scmp.eq.s32.totalorder %s46, 1
      %p541 = scmp.ne.s32.totalorder %s536, %s538
      %p542 = scmp.eq.s32.totalorder %s46, 0
      %p543 = por %p541, %p542
      %p544 = scmp.ne.s32.totalorder %s536, %s538
      %p545 = scmp.eq.s32.totalorder %s51, 1
      %p546 = por %p544, %p545
      %p547 = scmp.ne.s32.totalorder %s538, %s539
      %p548 = scmp.eq.s32.totalorder %s51, 0
      %p549 = por %p547, %p548
      %p550 = scmp.ne.s32.totalorder %s538, %s539
      %p551 = scmp.eq.s32.totalorder %s52, 1
      %p552 = por %p550, %p551
      %p554 = scmp.ne.s32.totalorder %s539, %s553
      %p555 = scmp.eq.s32.totalorder %s52, 0
      %p556 = por %p554, %p555
      %s558 = sadd.s32 %s557, 1
      %p561 = scmp.eq.s32.totalorder %s46, 1
      %p562 = scmp.ne.s32.totalorder %s557, %s559
      %p563 = scmp.eq.s32.totalorder %s46, 0
      %p564 = por %p562, %p563
      %p565 = scmp.ne.s32.totalorder %s557, %s559
      %p566 = scmp.eq.s32.totalorder %s51, 1
      %p567 = por %p565, %p566
      %p568 = scmp.ne.s32.totalorder %s559, %s560
      %p569 = scmp.eq.s32.totalorder %s51, 0
      %p570 = por %p568, %p569
      %p571 = scmp.ne.s32.totalorder %s559, %s560
      %p572 = scmp.eq.s32.totalorder %s52, 1
      %p573 = por %p571, %p572
      %p575 = scmp.ne.s32.totalorder %s560, %s574
      %p576 = scmp.eq.s32.totalorder %s52, 0
      %p577 = por %p575, %p576
      %s578 = ssub.s32 %s46, %s53
      %p579 = scmp.eq.s32.totalorder %s578, 0
      %s581 = sadd.s32 %s580, 1
      %s582 = scalar_select %p579, %s580, %s581
      %p585 = pneg %p579
      %p586 = scmp.eq.s32.totalorder %s46, 1
      %p587 = por %p585, %p586
      %p588 = scmp.ne.s32.totalorder %s580, %s583
      %p589 = scmp.eq.s32.totalorder %s46, 0
      %p590 = por %p588, %p589
      %p591 = scmp.ne.s32.totalorder %s580, %s583
      %p592 = scmp.eq.s32.totalorder %s51, 1
      %p593 = por %p591, %p592
      %p594 = scmp.ne.s32.totalorder %s583, %s584
      %p595 = scmp.eq.s32.totalorder %s51, 0
      %p596 = por %p594, %p595
      %p597 = scmp.ne.s32.totalorder %s583, %s584
      %p598 = scmp.eq.s32.totalorder %s52, 1
      %p599 = por %p597, %p598
      %p601 = scmp.ne.s32.totalorder %s584, %s600
      %p602 = scmp.eq.s32.totalorder %s52, 0
      %p603 = por %p601, %p602
      %p604 = scmp.le.s32.totalorder 1, %s46
      %p605 = scmp.lt.s32.totalorder %s46, 3
      %p606 = pnand %p604, %p605
      %p607 = pneg %p606
      // Predicated region
      $region9: #{tpu_custom_call.1} parent=5 // pred_check
        _
      $region10: #{tpu_custom_call.1} parent=5 // pred_check_branch
        %609 = sbr.rel (%p606) target = $region12
      $region11: #{tpu_custom_call.1} parent=5 // pred_region
        %s610 = ssub.s32 %s46, 1
        // Predicated region
        $region13: #{tpu_custom_call.1} parent=11 // pred_check
          %p611 = pneg %p171
        $region14: #{tpu_custom_call.1} parent=11 // pred_check_branch
          %613 = sbr.rel (%p611) target = $region16
        $region15: #{tpu_custom_call.1} parent=11 // pred_region
          %s615 = ssub.s32 32, 32
          %616 = vsyncadd [#allocation9], %s615
          %s618 = sshll.u32 [#allocation10], 4
          %s619 = int_to_ptr.vmem [resolvable:$true] %s618
          %621 = dma.hbm_to_vmem [thread:$0]  %s4, 32, %s619, [#allocation9]
        $region16: #{tpu_custom_call.1} parent=11 // pred_fallthru
          _
        // Predicated region
        $region17: #{tpu_custom_call.1} parent=11 // pred_check
          %p622 = pneg %p192
        $region18: #{tpu_custom_call.1} parent=11 // pred_check_branch
          %624 = sbr.rel (%p622) target = $region20
        $region19: #{tpu_custom_call.1} parent=11 // pred_region
          _
        $region20: #{tpu_custom_call.1} parent=11 // pred_fallthru
          _
        // Predicated region
        $region21: #{tpu_custom_call.1} parent=11 // pred_check
          %p625 = pneg %p213
        $region22: #{tpu_custom_call.1} parent=11 // pred_check_branch
          %627 = sbr.rel (%p625) target = $region24
        $region23: #{tpu_custom_call.1} parent=11 // pred_region
          %s629 = ssub.s32 12288, 12288
          %630 = vsyncadd [#allocation12], %s629
          %s631 = sshll.u32 [#allocation11], 4
          %s632 = int_to_ptr.vmem [resolvable:$true] %s631
          %637 = dma.hbm_to_vmem [thread:$0]  %s6, 12288, %s632, [#allocation12], 384, 384, 24
        $region24: #{tpu_custom_call.1} parent=11 // pred_fallthru
          _
        // Predicated region
        $region25: #{tpu_custom_call.1} parent=11 // pred_check
          %p638 = pneg %p234
        $region26: #{tpu_custom_call.1} parent=11 // pred_check_branch
          %640 = sbr.rel (%p638) target = $region28
        $region27: #{tpu_custom_call.1} parent=11 // pred_region
          _
        $region28: #{tpu_custom_call.1} parent=11 // pred_fallthru
          _
        // Predicated region
        $region29: #{tpu_custom_call.1} parent=11 // pred_check
          %p641 = pneg %p255
        $region30: #{tpu_custom_call.1} parent=11 // pred_check_branch
          %643 = sbr.rel (%p641) target = $region32
        $region31: #{tpu_custom_call.1} parent=11 // pred_region
          %s645 = ssub.s32 4096, 4096
          %646 = vsyncadd [#allocation12], %s645
          %s647 = sshll.u32 [#allocation13], 4
          %s648 = int_to_ptr.vmem [resolvable:$true] %s647
          %653 = dma.hbm_to_vmem [thread:$0]  %s8, 4096, %s648, [#allocation12], 128, 128, 8
        $region32: #{tpu_custom_call.1} parent=11 // pred_fallthru
          _
        // Predicated region
        $region33: #{tpu_custom_call.1} parent=11 // pred_check
          %p654 = pneg %p276
        $region34: #{tpu_custom_call.1} parent=11 // pred_check_branch
          %656 = sbr.rel (%p654) target = $region36
        $region35: #{tpu_custom_call.1} parent=11 // pred_region
          _
        $region36: #{tpu_custom_call.1} parent=11 // pred_fallthru
          _
        // Predicated region
        $region37: #{tpu_custom_call.1} parent=11 // pred_check
          %p657 = pneg %p297
        $region38: #{tpu_custom_call.1} parent=11 // pred_check_branch
          %659 = sbr.rel (%p657) target = $region40
        $region39: #{tpu_custom_call.1} parent=11 // pred_region
          _
        $region40: #{tpu_custom_call.1} parent=11 // pred_fallthru
          _
        // Predicated region
        $region41: #{tpu_custom_call.1} parent=11 // pred_check
          %p660 = pneg %p318
        $region42: #{tpu_custom_call.1} parent=11 // pred_check_branch
          %662 = sbr.rel (%p660) target = $region44
        $region43: #{tpu_custom_call.1} parent=11 // pred_region
          _
        $region44: #{tpu_custom_call.1} parent=11 // pred_fallthru
          _
        // Predicated region
        $region45: #{tpu_custom_call.1} parent=11 // pred_check
          %p663 = pneg %p339
        $region46: #{tpu_custom_call.1} parent=11 // pred_check_branch
          %665 = sbr.rel (%p663) target = $region48
        $region47: #{tpu_custom_call.1} parent=11 // pred_region
          %s667 = ssub.s32 4096, 4096
          %668 = vsyncadd [#allocation15], %s667
          %s669 = sshll.u32 [#allocation14], 4
          %s670 = int_to_ptr.vmem [resolvable:$true] %s669
          %675 = dma.hbm_to_vmem [thread:$0]  %s12, 4096, %s670, [#allocation15], 128, 128, 8
        $region48: #{tpu_custom_call.1} parent=11 // pred_fallthru
          _
        // Predicated region
        $region49: #{tpu_custom_call.1} parent=11 // pred_check
          %p676 = pneg %p360
        $region50: #{tpu_custom_call.1} parent=11 // pred_check_branch
          %678 = sbr.rel (%p676) target = $region52
        $region51: #{tpu_custom_call.1} parent=11 // pred_region
          _
        $region52: #{tpu_custom_call.1} parent=11 // pred_fallthru
          _
        // Predicated region
        $region53: #{tpu_custom_call.1} parent=11 // pred_check
          %p679 = pneg %p381
        $region54: #{tpu_custom_call.1} parent=11 // pred_check_branch
          %681 = sbr.rel (%p679) target = $region56
        $region55: #{tpu_custom_call.1} parent=11 // pred_region
          %s683 = ssub.s32 8192, 8192
          %684 = vsyncadd [#allocation15], %s683
          %s685 = sshll.u32 [#allocation16], 4
          %s686 = int_to_ptr.vmem [resolvable:$true] %s685
          %691 = dma.hbm_to_vmem [thread:$0]  %s14, 8192, %s686, [#allocation15], 256, 256, 16
        $region56: #{tpu_custom_call.1} parent=11 // pred_fallthru
          _
        // Predicated region
        $region57: #{tpu_custom_call.1} parent=11 // pred_check
          %p692 = pneg %p402
        $region58: #{tpu_custom_call.1} parent=11 // pred_check_branch
          %694 = sbr.rel (%p692) target = $region60
        $region59: #{tpu_custom_call.1} parent=11 // pred_region
          _
        $region60: #{tpu_custom_call.1} parent=11 // pred_fallthru
          _
        // Predicated region
        $region61: #{tpu_custom_call.1} parent=11 // pred_check
          %p695 = pneg %p423
        $region62: #{tpu_custom_call.1} parent=11 // pred_check_branch
          %697 = sbr.rel (%p695) target = $region64
        $region63: #{tpu_custom_call.1} parent=11 // pred_region
          %s699 = ssub.s32 4096, 4096
          %700 = vsyncadd [#allocation18], %s699
          %s701 = sshll.u32 [#allocation17], 4
          %s702 = int_to_ptr.vmem [resolvable:$true] %s701
          %707 = dma.hbm_to_vmem [thread:$0]  %s16, 4096, %s702, [#allocation18], 128, 128, 8
        $region64: #{tpu_custom_call.1} parent=11 // pred_fallthru
          _
        // Predicated region
        $region65: #{tpu_custom_call.1} parent=11 // pred_check
          %p708 = pneg %p444
        $region66: #{tpu_custom_call.1} parent=11 // pred_check_branch
          %710 = sbr.rel (%p708) target = $region68
        $region67: #{tpu_custom_call.1} parent=11 // pred_region
          _
        $region68: #{tpu_custom_call.1} parent=11 // pred_fallthru
          _
        // Predicated region
        $region69: #{tpu_custom_call.1} parent=11 // pred_check
          %p711 = pneg %p465
        $region70: #{tpu_custom_call.1} parent=11 // pred_check_branch
          %713 = sbr.rel (%p711) target = $region72
        $region71: #{tpu_custom_call.1} parent=11 // pred_region
          _
        $region72: #{tpu_custom_call.1} parent=11 // pred_fallthru
          _
        // Predicated region
        $region73: #{tpu_custom_call.1} parent=11 // pred_check
          %p714 = pneg %p486
        $region74: #{tpu_custom_call.1} parent=11 // pred_check_branch
          %716 = sbr.rel (%p714) target = $region76
        $region75: #{tpu_custom_call.1} parent=11 // pred_region
          _
        $region76: #{tpu_custom_call.1} parent=11 // pred_fallthru
          _
        // Predicated region
        $region77: #{tpu_custom_call.1} parent=11 // pred_check
          %p717 = pneg %p507
        $region78: #{tpu_custom_call.1} parent=11 // pred_check_branch
          %719 = sbr.rel (%p717) target = $region80
        $region79: #{tpu_custom_call.1} parent=11 // pred_region
          %s721 = ssub.s32 8192, 8192
          %722 = vsyncadd [#allocation18], %s721
          %s723 = sshll.u32 [#allocation19], 4
          %s724 = int_to_ptr.vmem [resolvable:$true] %s723
          %729 = dma.hbm_to_vmem [thread:$0]  %s20, 8192, %s724, [#allocation18], 256, 256, 16
        $region80: #{tpu_custom_call.1} parent=11 // pred_fallthru
          _
        // Predicated region
        $region81: #{tpu_custom_call.1} parent=11 // pred_check
          %p730 = pneg %p528
        $region82: #{tpu_custom_call.1} parent=11 // pred_check_branch
          %732 = sbr.rel (%p730) target = $region84
        $region83: #{tpu_custom_call.1} parent=11 // pred_region
          _
        $region84: #{tpu_custom_call.1} parent=11 // pred_fallthru
          _
        // Predicated region
        $region85: #{tpu_custom_call.1} parent=11 // pred_check
          %p733 = pneg %p549
        $region86: #{tpu_custom_call.1} parent=11 // pred_check_branch
          %735 = sbr.rel (%p733) target = $region88
        $region87: #{tpu_custom_call.1} parent=11 // pred_region
          %s737 = ssub.s32 8192, 8192
          %738 = vsyncadd [#allocation21], %s737
          %s739 = sshll.u32 [#allocation20], 4
          %s740 = int_to_ptr.vmem [resolvable:$true] %s739
          %745 = dma.hbm_to_vmem [thread:$0]  %s22, 8192, %s740, [#allocation21], 128, 128, 8
        $region88: #{tpu_custom_call.1} parent=11 // pred_fallthru
          _
        // Predicated region
        $region89: #{tpu_custom_call.1} parent=11 // pred_check
          %p746 = pneg %p570
        $region90: #{tpu_custom_call.1} parent=11 // pred_check_branch
          %748 = sbr.rel (%p746) target = $region92
        $region91: #{tpu_custom_call.1} parent=11 // pred_region
          _
        $region92: #{tpu_custom_call.1} parent=11 // pred_fallthru
          _
      $region12: #{tpu_custom_call.1} parent=5 // pred_fallthru
        _
      %p749 = scmp.lt.s32.totalorder %s46, 2
      // Predicated region
      $region93: #{tpu_custom_call.1} parent=5 // pred_check
        %p750 = pneg %p749
      $region94: #{tpu_custom_call.1} parent=5 // pred_check_branch
        %752 = sbr.rel (%p750) target = $region96
      $region95: #{tpu_custom_call.1} parent=5 // pred_region
        // Predicated region
        $region97: #{tpu_custom_call.1} parent=95 // pred_check
          %p753 = pneg %p66
        $region98: #{tpu_custom_call.1} parent=95 // pred_check_branch
          %755 = sbr.rel (%p753) target = $region100
        $region99: #{tpu_custom_call.1} parent=95 // pred_region
          %s756 = sand.u32 %s56, 1
          %s757 = scalar_lea.sflag [#allocation3], %s756
          %s758 = sand.u32 %s56, 1
          %s759 = smul.addr %s758, 16
          %s760 = scalar_lea.vmem [#allocation2], %s759
          %s762 = ssub.s32 256, 256
          %763 = vsyncadd %s757, %s762
          %s764 = smul.addr %s46, 2
          %s765 = smul.addr %s764, 128
          %s766 = scalar_lea.hbm %s0, %s765
          %s768 = sshll.u32 %s760, 4
          %s769 = int_to_ptr.vmem [resolvable:$true] %s768
          %771 = dma.hbm_to_vmem [thread:$0]  %s766, 256, %s769, %s757
        $region100: #{tpu_custom_call.1} parent=95 // pred_fallthru
          _
        // Predicated region
        $region101: #{tpu_custom_call.1} parent=95 // pred_check
          %p772 = pneg %p92
        $region102: #{tpu_custom_call.1} parent=95 // pred_check_branch
          %774 = sbr.rel (%p772) target = $region104
        $region103: #{tpu_custom_call.1} parent=95 // pred_region
          %s775 = sand.u32 %s46, 1
          %s776 = scalar_lea.sflag [#allocation6], %s775
          %s777 = sand.u32 %s82, 1
          %s778 = smul.addr %s777, 32
          %s779 = scalar_lea.vmem [#allocation5], %s778
          %s781 = ssub.s32 512, 512
          %782 = vsyncadd %s776, %s781
          %s783 = smul.addr %s46, 4
          %s784 = smul.addr %s783, 128
          %s785 = scalar_lea.hbm %s1, %s784
          %s786 = sshll.u32 %s779, 4
          %s787 = int_to_ptr.vmem [resolvable:$true] %s786
          %792 = dma.hbm_to_vmem [thread:$0]  %s785, 512, %s787, %s776, 256, 256, 16
        $region104: #{tpu_custom_call.1} parent=95 // pred_fallthru
          _
        // Predicated region
        $region105: #{tpu_custom_call.1} parent=95 // pred_check
          %p793 = pneg %p118
        $region106: #{tpu_custom_call.1} parent=95 // pred_check_branch
          %795 = sbr.rel (%p793) target = $region108
        $region107: #{tpu_custom_call.1} parent=95 // pred_region
          %s796 = sand.u32 %s46, 1
          %s797 = scalar_lea.sflag [#allocation6], %s796
          %s798 = sand.u32 %s108, 1
          %s799 = smul.addr %s798, 8
          %s800 = scalar_lea.vmem [#allocation7], %s799
          %s802 = ssub.s32 128, 128
          %803 = vsyncadd %s797, %s802
          %s804 = smul.addr %s46, 128
          %s805 = scalar_lea.hbm %s2, %s804
          %s807 = sshll.u32 %s800, 4
          %s808 = int_to_ptr.vmem [resolvable:$true] %s807
          %810 = dma.hbm_to_vmem [thread:$0]  %s805, 128, %s808, %s797
        $region108: #{tpu_custom_call.1} parent=95 // pred_fallthru
          _
        // Predicated region
        $region109: #{tpu_custom_call.1} parent=95 // pred_check
          %p811 = pneg %p144
        $region110: #{tpu_custom_call.1} parent=95 // pred_check_branch
          %813 = sbr.rel (%p811) target = $region112
        $region111: #{tpu_custom_call.1} parent=95 // pred_region
          %s814 = sand.u32 %s46, 1
          %s815 = scalar_lea.sflag [#allocation9], %s814
          %s816 = sand.u32 %s134, 1
          %s817 = scalar_lea.vmem [#allocation8], %s816
          %s819 = ssub.s32 16, 16
          %820 = vsyncadd %s815, %s819
          %s821 = smul.addr %s46, 16
          %s822 = scalar_lea.hbm %s3, %s821
          %s824 = sshll.u32 %s817, 4
          %s825 = int_to_ptr.vmem [resolvable:$true] %s824
          %827 = dma.hbm_to_vmem [thread:$0]  %s822, 16, %s825, %s815
        $region112: #{tpu_custom_call.1} parent=95 // pred_fallthru
          _
      $region96: #{tpu_custom_call.1} parent=5 // pred_fallthru
        _
      %p828 = scmp.le.s32.totalorder 1, %s46
      %p829 = scmp.lt.s32.totalorder %s46, 3
      %p830 = pnand %p828, %p829
      %p831 = pneg %p830
      // Predicated region
      $region113: #{tpu_custom_call.1} parent=5 // pred_check
        _
      $region114: #{tpu_custom_call.1} parent=5 // pred_check_branch
        %833 = sbr.rel (%p830) target = $region116
      $region115: #{tpu_custom_call.1} parent=5 // pred_region
        %s834 = ssub.s32 %s46, 1
        %s835 = sand.u32 %s59, 1
        %s836 = scalar_lea.sflag [#allocation3], %s835
        %s837 = sand.u32 %s59, 1
        %s838 = smul.addr %s837, 16
        %s839 = scalar_lea.vmem [#allocation2], %s838
        // Predicated region
        $region117: #{tpu_custom_call.1} parent=115 // pred_check
          %p840 = pneg %p72
        $region118: #{tpu_custom_call.1} parent=115 // pred_check_branch
          %842 = sbr.rel (%p840) target = $region120
        $region119: #{tpu_custom_call.1} parent=115 // pred_region
          %843 = dma.done %s836, 256
        $region120: #{tpu_custom_call.1} parent=115 // pred_fallthru
          _
        %s844 = sand.u32 %s51, 1
        %s845 = scalar_lea.sflag [#allocation6], %s844
        %s846 = sand.u32 %s85, 1
        %s847 = smul.addr %s846, 32
        %s848 = scalar_lea.vmem [#allocation5], %s847
        // Predicated region
        $region121: #{tpu_custom_call.1} parent=115 // pred_check
          %p849 = pneg %p98
        $region122: #{tpu_custom_call.1} parent=115 // pred_check_branch
          %851 = sbr.rel (%p849) target = $region124
        $region123: #{tpu_custom_call.1} parent=115 // pred_region
          %852 = dma.done %s845, 512
        $region124: #{tpu_custom_call.1} parent=115 // pred_fallthru
          _
        %s853 = sand.u32 %s51, 1
        %s854 = scalar_lea.sflag [#allocation6], %s853
        %s855 = sand.u32 %s111, 1
        %s856 = smul.addr %s855, 8
        %s857 = scalar_lea.vmem [#allocation7], %s856
        // Predicated region
        $region125: #{tpu_custom_call.1} parent=115 // pred_check
          %p858 = pneg %p124
        $region126: #{tpu_custom_call.1} parent=115 // pred_check_branch
          %860 = sbr.rel (%p858) target = $region128
        $region127: #{tpu_custom_call.1} parent=115 // pred_region
          %861 = dma.done %s854, 128
        $region128: #{tpu_custom_call.1} parent=115 // pred_fallthru
          _
        %s862 = sand.u32 %s51, 1
        %s863 = scalar_lea.sflag [#allocation9], %s862
        %s864 = sand.u32 %s137, 1
        %s865 = scalar_lea.vmem [#allocation8], %s864
        // Predicated region
        $region129: #{tpu_custom_call.1} parent=115 // pred_check
          %p866 = pneg %p150
        $region130: #{tpu_custom_call.1} parent=115 // pred_check_branch
          %868 = sbr.rel (%p866) target = $region132
        $region131: #{tpu_custom_call.1} parent=115 // pred_region
          %869 = dma.done %s863, 16
        $region132: #{tpu_custom_call.1} parent=115 // pred_fallthru
          _
        // Predicated region
        $region133: #{tpu_custom_call.1} parent=115 // pred_check
          %p870 = pneg %p171
        $region134: #{tpu_custom_call.1} parent=115 // pred_check_branch
          %872 = sbr.rel (%p870) target = $region136
        $region135: #{tpu_custom_call.1} parent=115 // pred_region
          %873 = dma.done [#allocation9], 32
        $region136: #{tpu_custom_call.1} parent=115 // pred_fallthru
          _
        // Predicated region
        $region137: #{tpu_custom_call.1} parent=115 // pred_check
          %p874 = pneg %p213
        $region138: #{tpu_custom_call.1} parent=115 // pred_check_branch
          %876 = sbr.rel (%p874) target = $region140
        $region139: #{tpu_custom_call.1} parent=115 // pred_region
          %877 = dma.done [#allocation12], 12288
        $region140: #{tpu_custom_call.1} parent=115 // pred_fallthru
          _
        // Predicated region
        $region141: #{tpu_custom_call.1} parent=115 // pred_check
          %p878 = pneg %p255
        $region142: #{tpu_custom_call.1} parent=115 // pred_check_branch
          %880 = sbr.rel (%p878) target = $region144
        $region143: #{tpu_custom_call.1} parent=115 // pred_region
          %881 = dma.done [#allocation12], 4096
        $region144: #{tpu_custom_call.1} parent=115 // pred_fallthru
          _
        // Predicated region
        $region145: #{tpu_custom_call.1} parent=115 // pred_check
          %p882 = pneg %p339
        $region146: #{tpu_custom_call.1} parent=115 // pred_check_branch
          %884 = sbr.rel (%p882) target = $region148
        $region147: #{tpu_custom_call.1} parent=115 // pred_region
          %885 = dma.done [#allocation15], 4096
        $region148: #{tpu_custom_call.1} parent=115 // pred_fallthru
          _
        // Predicated region
        $region149: #{tpu_custom_call.1} parent=115 // pred_check
          %p886 = pneg %p381
        $region150: #{tpu_custom_call.1} parent=115 // pred_check_branch
          %888 = sbr.rel (%p886) target = $region152
        $region151: #{tpu_custom_call.1} parent=115 // pred_region
          %889 = dma.done [#allocation15], 8192
        $region152: #{tpu_custom_call.1} parent=115 // pred_fallthru
          _
        // Predicated region
        $region153: #{tpu_custom_call.1} parent=115 // pred_check
          %p890 = pneg %p423
        $region154: #{tpu_custom_call.1} parent=115 // pred_check_branch
          %892 = sbr.rel (%p890) target = $region156
        $region155: #{tpu_custom_call.1} parent=115 // pred_region
          %893 = dma.done [#allocation18], 4096
        $region156: #{tpu_custom_call.1} parent=115 // pred_fallthru
          _
        // Predicated region
        $region157: #{tpu_custom_call.1} parent=115 // pred_check
          %p894 = pneg %p507
        $region158: #{tpu_custom_call.1} parent=115 // pred_check_branch
          %896 = sbr.rel (%p894) target = $region160
        $region159: #{tpu_custom_call.1} parent=115 // pred_region
          %897 = dma.done [#allocation18], 8192
        $region160: #{tpu_custom_call.1} parent=115 // pred_fallthru
          _
        // Predicated region
        $region161: #{tpu_custom_call.1} parent=115 // pred_check
          %p898 = pneg %p549
        $region162: #{tpu_custom_call.1} parent=115 // pred_check_branch
          %900 = sbr.rel (%p898) target = $region164
        $region163: #{tpu_custom_call.1} parent=115 // pred_region
          %901 = dma.done [#allocation21], 8192
        $region164: #{tpu_custom_call.1} parent=115 // pred_fallthru
          _
        %s902 = sand.u32 %s59, 1
        %s903 = scalar_lea.sflag [#allocation3], %s902
        %s904 = sand.u32 %s59, 1
        %s905 = smul.addr %s904, 16
        %s906 = scalar_lea.vmem [#allocation2], %s905
        %p907 = pneg %p72
        %p908 = pneg %p69
        %s909 = sand.u32 %s51, 1
        %s910 = scalar_lea.sflag [#allocation6], %s909
        %s911 = sand.u32 %s85, 1
        %s912 = smul.addr %s911, 32
        %s913 = scalar_lea.vmem [#allocation5], %s912
        %p914 = pneg %p98
        %p915 = pneg %p95
        %s916 = sand.u32 %s51, 1
        %s917 = scalar_lea.sflag [#allocation6], %s916
        %s918 = sand.u32 %s111, 1
        %s919 = smul.addr %s918, 8
        %s920 = scalar_lea.vmem [#allocation7], %s919
        %p921 = pneg %p124
        %p922 = pneg %p121
        %s923 = sand.u32 %s51, 1
        %s924 = scalar_lea.sflag [#allocation9], %s923
        %s925 = sand.u32 %s137, 1
        %s926 = scalar_lea.vmem [#allocation8], %s925
        %p927 = pneg %p150
        %p928 = pneg %p147
        %p929 = pneg %p171
        %p930 = pneg %p168
        %p931 = pneg %p192
        %p932 = pneg %p189
        %p933 = pneg %p213
        %p934 = pneg %p210
        %p935 = pneg %p234
        %p936 = pneg %p231
        %p937 = pneg %p255
        %p938 = pneg %p252
        %p939 = pneg %p276
        %p940 = pneg %p273
        %p941 = pneg %p297
        %p942 = pneg %p294
        %p943 = pneg %p318
        %p944 = pneg %p315
        %p945 = pneg %p339
        %p946 = pneg %p336
        %p947 = pneg %p360
        %p948 = pneg %p357
        %p949 = pneg %p381
        %p950 = pneg %p378
        %p951 = pneg %p402
        %p952 = pneg %p399
        %p953 = pneg %p423
        %p954 = pneg %p420
        %p955 = pneg %p444
        %p956 = pneg %p441
        %p957 = pneg %p465
        %p958 = pneg %p462
        %p959 = pneg %p486
        %p960 = pneg %p483
        %p961 = pneg %p507
        %p962 = pneg %p504
        %p963 = pneg %p528
        %p964 = pneg %p525
        %p965 = pneg %p549
        %p966 = pneg %p546
        %p967 = pneg %p570
        %p968 = pneg %p567
        %p969 = pneg %p596
        %p970 = pneg %p593
        %s971 = sand.u32 %s583, 1
        %s972 = scalar_lea.sflag [#allocation4], %s971
        %s973 = sand.u32 %s583, 1
        %s974 = smul.addr %s973, 16
        %s975 = scalar_lea.vmem [#allocation22], %s974
        %v977 = vld [vmem:[%s839] sm:$0xff]
        %v978 = vld [vmem:[%s839 + $0x8] sm:$0xff]
        %v979 = vld [vmem:[%s848] sm:$0xff]
        %v980 = vld [vmem:[%s848 + $0x8] sm:$0xff]
        %v981 = vld [vmem:[%s848 + $0x10] sm:$0xff]
        %v982 = vld [vmem:[%s848 + $0x18] sm:$0xff]
        %v983 = vld [vmem:[#allocation10] sm:$0x3]
        %v984 = vld [vmem:[%s5] sm:$0x3]
        %v985 = vadd.f32 %v977, %v978
        %986 = vadd.xlane.f32.xlu0 %v985
        %v987 = vpop.xlane.xlu0 %986
        %v988 = vrcp.pop 256.0
        %v989 = vmul.f32 %v987, %v988
        %v990 = vsub.f32 %v977, %v989
        %v991 = vsub.f32 %v978, %v989
        %v992 = vmul.f32 %v990, %v990
        %v993 = vmul.f32 %v991, %v991
        %v994 = vadd.f32 %v992, %v993
        %995 = vadd.xlane.f32.xlu0 %v994
        %v996 = vpop.xlane.xlu0 %995
        %v997 = vmul.f32 %v996, 0.003921569
        %v998 = vrsqrt.pop %v997
        %v999 = vmul.f32 %v997, %v998
        %vm1000 = vcmp.eq.f32.partialorder %v997, inf
        %v1001 = vsel %vm1000, %v997, %v999
        %vm1002 = vcmp.eq.f32.partialorder %v997, 0.0
        %v1003 = vand.u32 %v997, 2147483648
        %v1004 = vsel %vm1002, %v1003, %v1001
        %v1005 = vadd.f32 %v1004, 1e-06
        %v1006 = vrcp.pop %v1005
        %v1007 = vmul.f32 %v990, %v1006
        %v1008 = vmul.f32 %v991, %v1006
        %v1010 = vlaneseq
        %v1011 = vshrl.u32 %v1010, 7
        %v1012 = vsub.s32 0, %v1011
        %v1013 = vrot.slane %v983, %v1012
        %v1014 = vlaneseq
        %v1015 = vshrl.u32 %v1014, 7
        %v1016 = vsub.s32 1, %v1015
        %v1017 = vrot.slane %v983, %v1016
        %v1020 = vmul.f32 %v1013, %v1007
        %v1021 = vmul.f32 %v1017, %v1008
        %v1023 = vlaneseq
        %v1024 = vshrl.u32 %v1023, 7
        %v1025 = vsub.s32 0, %v1024
        %v1026 = vrot.slane %v984, %v1025
        %v1027 = vlaneseq
        %v1028 = vshrl.u32 %v1027, 7
        %v1029 = vsub.s32 1, %v1028
        %v1030 = vrot.slane %v984, %v1029
        %v1033 = vadd.f32 %v1020, %v1026
        %v1034 = vadd.f32 %v1021, %v1030
        %v1035 = vpack.c.bf16 %v1033, %v1033
        %v1036 = vpack.c.bf16 %v1034, %v1034
        %v1037 = vld [vmem:[#allocation11] sm:$0xff]
        %v1038 = vld [vmem:[#allocation11 + $0x8] sm:$0xff]
        %v1039 = vld [vmem:[#allocation11 + $0x10] sm:$0xff]
        %v1040 = vld [vmem:[#allocation11 + $0x18] sm:$0xff]
        %v1041 = vld [vmem:[#allocation11 + $0x20] sm:$0xff]
        %v1042 = vld [vmem:[#allocation11 + $0x28] sm:$0xff]
        %v1043 = vld [vmem:[#allocation11 + $0x30] sm:$0xff]
        %v1044 = vld [vmem:[#allocation11 + $0x38] sm:$0xff]
        %v1045 = vld [vmem:[#allocation11 + $0x40] sm:$0xff]
        %v1046 = vld [vmem:[#allocation11 + $0x48] sm:$0xff]
        %v1047 = vld [vmem:[#allocation11 + $0x50] sm:$0xff]
        %v1048 = vld [vmem:[#allocation11 + $0x58] sm:$0xff]
        %v1049 = vld [vmem:[#allocation11 + $0x60] sm:$0xff]
        %v1050 = vld [vmem:[#allocation11 + $0x68] sm:$0xff]
        %v1051 = vld [vmem:[#allocation11 + $0x70] sm:$0xff]
        %v1052 = vld [vmem:[#allocation11 + $0x78] sm:$0xff]
        %v1053 = vld [vmem:[#allocation11 + $0x80] sm:$0xff]
        %v1054 = vld [vmem:[#allocation11 + $0x88] sm:$0xff]
        %v1055 = vld [vmem:[#allocation11 + $0x90] sm:$0xff]
        %v1056 = vld [vmem:[#allocation11 + $0x98] sm:$0xff]
        %v1057 = vld [vmem:[#allocation11 + $0xa0] sm:$0xff]
        %v1058 = vld [vmem:[#allocation11 + $0xa8] sm:$0xff]
        %v1059 = vld [vmem:[#allocation11 + $0xb0] sm:$0xff]
        %v1060 = vld [vmem:[#allocation11 + $0xb8] sm:$0xff]
        %v1061 = vld [vmem:[#allocation11 + $0xc0] sm:$0xff]
        %v1062 = vld [vmem:[#allocation11 + $0xc8] sm:$0xff]
        %v1063 = vld [vmem:[#allocation11 + $0xd0] sm:$0xff]
        %v1064 = vld [vmem:[#allocation11 + $0xd8] sm:$0xff]
        %v1065 = vld [vmem:[#allocation11 + $0xe0] sm:$0xff]
        %v1066 = vld [vmem:[#allocation11 + $0xe8] sm:$0xff]
        %v1067 = vld [vmem:[#allocation11 + $0xf0] sm:$0xff]
        %v1068 = vld [vmem:[#allocation11 + $0xf8] sm:$0xff]
        %v1069 = vld [vmem:[#allocation11 + $0x100] sm:$0xff]
        %v1070 = vld [vmem:[#allocation11 + $0x108] sm:$0xff]
        %v1071 = vld [vmem:[#allocation11 + $0x110] sm:$0xff]
        %v1072 = vld [vmem:[#allocation11 + $0x118] sm:$0xff]
        %v1073 = vld [vmem:[#allocation11 + $0x120] sm:$0xff]
        %v1074 = vld [vmem:[#allocation11 + $0x128] sm:$0xff]
        %v1075 = vld [vmem:[#allocation11 + $0x130] sm:$0xff]
        %v1076 = vld [vmem:[#allocation11 + $0x138] sm:$0xff]
        %v1077 = vld [vmem:[#allocation11 + $0x140] sm:$0xff]
        %v1078 = vld [vmem:[#allocation11 + $0x148] sm:$0xff]
        %v1079 = vld [vmem:[#allocation11 + $0x150] sm:$0xff]
        %v1080 = vld [vmem:[#allocation11 + $0x158] sm:$0xff]
        %v1081 = vld [vmem:[#allocation11 + $0x160] sm:$0xff]
        %v1082 = vld [vmem:[#allocation11 + $0x168] sm:$0xff]
        %v1083 = vld [vmem:[#allocation11 + $0x170] sm:$0xff]
        %v1084 = vld [vmem:[#allocation11 + $0x178] sm:$0xff]
        %v1085 = vld [vmem:[#allocation11 + $0x180] sm:$0xff]
        %v1086 = vld [vmem:[#allocation11 + $0x188] sm:$0xff]
        %v1087 = vld [vmem:[#allocation11 + $0x190] sm:$0xff]
        %v1088 = vld [vmem:[#allocation11 + $0x198] sm:$0xff]
        %v1089 = vld [vmem:[#allocation11 + $0x1a0] sm:$0xff]
        %v1090 = vld [vmem:[#allocation11 + $0x1a8] sm:$0xff]
        %v1091 = vld [vmem:[#allocation11 + $0x1b0] sm:$0xff]
        %v1092 = vld [vmem:[#allocation11 + $0x1b8] sm:$0xff]
        %v1093 = vld [vmem:[#allocation11 + $0x1c0] sm:$0xff]
        %v1094 = vld [vmem:[#allocation11 + $0x1c8] sm:$0xff]
        %v1095 = vld [vmem:[#allocation11 + $0x1d0] sm:$0xff]
        %v1096 = vld [vmem:[#allocation11 + $0x1d8] sm:$0xff]
        %v1097 = vld [vmem:[#allocation11 + $0x1e0] sm:$0xff]
        %v1098 = vld [vmem:[#allocation11 + $0x1e8] sm:$0xff]
        %v1099 = vld [vmem:[#allocation11 + $0x1f0] sm:$0xff]
        %v1100 = vld [vmem:[#allocation11 + $0x1f8] sm:$0xff]
        %v1101 = vld [vmem:[#allocation11 + $0x200] sm:$0xff]
        %v1102 = vld [vmem:[#allocation11 + $0x208] sm:$0xff]
        %v1103 = vld [vmem:[#allocation11 + $0x210] sm:$0xff]
        %v1104 = vld [vmem:[#allocation11 + $0x218] sm:$0xff]
        %v1105 = vld [vmem:[#allocation11 + $0x220] sm:$0xff]
        %v1106 = vld [vmem:[#allocation11 + $0x228] sm:$0xff]
        %v1107 = vld [vmem:[#allocation11 + $0x230] sm:$0xff]
        %v1108 = vld [vmem:[#allocation11 + $0x238] sm:$0xff]
        %v1109 = vld [vmem:[#allocation11 + $0x240] sm:$0xff]
        %v1110 = vld [vmem:[#allocation11 + $0x248] sm:$0xff]
        %v1111 = vld [vmem:[#allocation11 + $0x250] sm:$0xff]
        %v1112 = vld [vmem:[#allocation11 + $0x258] sm:$0xff]
        %v1113 = vld [vmem:[#allocation11 + $0x260] sm:$0xff]
        %v1114 = vld [vmem:[#allocation11 + $0x268] sm:$0xff]
        %v1115 = vld [vmem:[#allocation11 + $0x270] sm:$0xff]
        %v1116 = vld [vmem:[#allocation11 + $0x278] sm:$0xff]
        %v1117 = vld [vmem:[#allocation11 + $0x280] sm:$0xff]
        %v1118 = vld [vmem:[#allocation11 + $0x288] sm:$0xff]
        %v1119 = vld [vmem:[#allocation11 + $0x290] sm:$0xff]
        %v1120 = vld [vmem:[#allocation11 + $0x298] sm:$0xff]
        %v1121 = vld [vmem:[#allocation11 + $0x2a0] sm:$0xff]
        %v1122 = vld [vmem:[#allocation11 + $0x2a8] sm:$0xff]
        %v1123 = vld [vmem:[#allocation11 + $0x2b0] sm:$0xff]
        %v1124 = vld [vmem:[#allocation11 + $0x2b8] sm:$0xff]
        %v1125 = vld [vmem:[#allocation11 + $0x2c0] sm:$0xff]
        %v1126 = vld [vmem:[#allocation11 + $0x2c8] sm:$0xff]
        %v1127 = vld [vmem:[#allocation11 + $0x2d0] sm:$0xff]
        %v1128 = vld [vmem:[#allocation11 + $0x2d8] sm:$0xff]
        %v1129 = vld [vmem:[#allocation11 + $0x2e0] sm:$0xff]
        %v1130 = vld [vmem:[#allocation11 + $0x2e8] sm:$0xff]
        %v1131 = vld [vmem:[#allocation11 + $0x2f0] sm:$0xff]
        %v1132 = vld [vmem:[#allocation11 + $0x2f8] sm:$0xff]
        %v1133 = vld [vmem:[%s7] sm:$0x3f]
        %v1135 = vlaneseq
        %v1136 = vshrl.u32 %v1135, 7
        %v1137 = vsub.s32 0, %v1136
        %v1138 = vrot.slane %v1133, %v1137
        %v1139 = vlaneseq
        %v1140 = vshrl.u32 %v1139, 7
        %v1141 = vsub.s32 1, %v1140
        %v1142 = vrot.slane %v1133, %v1141
        %v1143 = vlaneseq
        %v1144 = vshrl.u32 %v1143, 7
        %v1145 = vsub.s32 2, %v1144
        %v1146 = vrot.slane %v1133, %v1145
        %v1147 = vlaneseq
        %v1148 = vshrl.u32 %v1147, 7
        %v1149 = vsub.s32 3, %v1148
        %v1150 = vrot.slane %v1133, %v1149
        %v1151 = vlaneseq
        %v1152 = vshrl.u32 %v1151, 7
        %v1153 = vsub.s32 4, %v1152
        %v1154 = vrot.slane %v1133, %v1153
        %v1155 = vlaneseq
        %v1156 = vshrl.u32 %v1155, 7
        %v1157 = vsub.s32 5, %v1156
        %v1158 = vrot.slane %v1133, %v1157
        %v1261 = vunpack.c.l.b16 %v1037
        %v1262 = vunpack.c.h.b16 %v1037
        %v1263 = vunpack.c.l.b16 %v1038
        %v1264 = vunpack.c.h.b16 %v1038
        %v1265 = vunpack.c.l.b16 %v1039
        %v1266 = vunpack.c.h.b16 %v1039
        %v1267 = vunpack.c.l.b16 %v1040
        %v1268 = vunpack.c.h.b16 %v1040
        %v1269 = vunpack.c.l.b16 %v1041
        %v1270 = vunpack.c.h.b16 %v1041
        %v1271 = vunpack.c.l.b16 %v1042
        %v1272 = vunpack.c.h.b16 %v1042
        %v1273 = vunpack.c.l.b16 %v1043
        %v1274 = vunpack.c.h.b16 %v1043
        %v1275 = vunpack.c.l.b16 %v1044
        %v1276 = vunpack.c.h.b16 %v1044
        %v1277 = vunpack.c.l.b16 %v1045
        %v1278 = vunpack.c.h.b16 %v1045
        %v1279 = vunpack.c.l.b16 %v1046
        %v1280 = vunpack.c.h.b16 %v1046
        %v1281 = vunpack.c.l.b16 %v1047
        %v1282 = vunpack.c.h.b16 %v1047
        %v1283 = vunpack.c.l.b16 %v1048
        %v1284 = vunpack.c.h.b16 %v1048
        %v1285 = vunpack.c.l.b16 %v1049
        %v1286 = vunpack.c.h.b16 %v1049
        %v1287 = vunpack.c.l.b16 %v1050
        %v1288 = vunpack.c.h.b16 %v1050
        %v1289 = vunpack.c.l.b16 %v1051
        %v1290 = vunpack.c.h.b16 %v1051
        %v1291 = vunpack.c.l.b16 %v1052
        %v1292 = vunpack.c.h.b16 %v1052
        %v1293 = vunpack.c.l.b16 %v1053
        %v1294 = vunpack.c.h.b16 %v1053
        %v1295 = vunpack.c.l.b16 %v1054
        %v1296 = vunpack.c.h.b16 %v1054
        %v1297 = vunpack.c.l.b16 %v1055
        %v1298 = vunpack.c.h.b16 %v1055
        %v1299 = vunpack.c.l.b16 %v1056
        %v1300 = vunpack.c.h.b16 %v1056
        %v1301 = vunpack.c.l.b16 %v1057
        %v1302 = vunpack.c.h.b16 %v1057
        %v1303 = vunpack.c.l.b16 %v1058
        %v1304 = vunpack.c.h.b16 %v1058
        %v1305 = vunpack.c.l.b16 %v1059
        %v1306 = vunpack.c.h.b16 %v1059
        %v1307 = vunpack.c.l.b16 %v1060
        %v1308 = vunpack.c.h.b16 %v1060
        %v1309 = vunpack.c.l.b16 %v1061
        %v1310 = vunpack.c.h.b16 %v1061
        %v1311 = vunpack.c.l.b16 %v1062
        %v1312 = vunpack.c.h.b16 %v1062
        %v1313 = vunpack.c.l.b16 %v1063
        %v1314 = vunpack.c.h.b16 %v1063
        %v1315 = vunpack.c.l.b16 %v1064
        %v1316 = vunpack.c.h.b16 %v1064
        %v1317 = vunpack.c.l.b16 %v1065
        %v1318 = vunpack.c.h.b16 %v1065
        %v1319 = vunpack.c.l.b16 %v1066
        %v1320 = vunpack.c.h.b16 %v1066
        %v1321 = vunpack.c.l.b16 %v1067
        %v1322 = vunpack.c.h.b16 %v1067
        %v1323 = vunpack.c.l.b16 %v1068
        %v1324 = vunpack.c.h.b16 %v1068
        %v1325 = vunpack.c.l.b16 %v1069
        %v1326 = vunpack.c.h.b16 %v1069
        %v1327 = vunpack.c.l.b16 %v1070
        %v1328 = vunpack.c.h.b16 %v1070
        %v1329 = vunpack.c.l.b16 %v1071
        %v1330 = vunpack.c.h.b16 %v1071
        %v1331 = vunpack.c.l.b16 %v1072
        %v1332 = vunpack.c.h.b16 %v1072
        %v1333 = vunpack.c.l.b16 %v1073
        %v1334 = vunpack.c.h.b16 %v1073
        %v1335 = vunpack.c.l.b16 %v1074
        %v1336 = vunpack.c.h.b16 %v1074
        %v1337 = vunpack.c.l.b16 %v1075
        %v1338 = vunpack.c.h.b16 %v1075
        %v1339 = vunpack.c.l.b16 %v1076
        %v1340 = vunpack.c.h.b16 %v1076
        %v1341 = vunpack.c.l.b16 %v1077
        %v1342 = vunpack.c.h.b16 %v1077
        %v1343 = vunpack.c.l.b16 %v1078
        %v1344 = vunpack.c.h.b16 %v1078
        %v1345 = vunpack.c.l.b16 %v1079
        %v1346 = vunpack.c.h.b16 %v1079
        %v1347 = vunpack.c.l.b16 %v1080
        %v1348 = vunpack.c.h.b16 %v1080
        %v1349 = vunpack.c.l.b16 %v1081
        %v1350 = vunpack.c.h.b16 %v1081
        %v1351 = vunpack.c.l.b16 %v1082
        %v1352 = vunpack.c.h.b16 %v1082
        %v1353 = vunpack.c.l.b16 %v1083
        %v1354 = vunpack.c.h.b16 %v1083
        %v1355 = vunpack.c.l.b16 %v1084
        %v1356 = vunpack.c.h.b16 %v1084
        %v1357 = vunpack.c.l.b16 %v1085
        %v1358 = vunpack.c.h.b16 %v1085
        %v1359 = vunpack.c.l.b16 %v1086
        %v1360 = vunpack.c.h.b16 %v1086
        %v1361 = vunpack.c.l.b16 %v1087
        %v1362 = vunpack.c.h.b16 %v1087
        %v1363 = vunpack.c.l.b16 %v1088
        %v1364 = vunpack.c.h.b16 %v1088
        %v1365 = vunpack.c.l.b16 %v1089
        %v1366 = vunpack.c.h.b16 %v1089
        %v1367 = vunpack.c.l.b16 %v1090
        %v1368 = vunpack.c.h.b16 %v1090
        %v1369 = vunpack.c.l.b16 %v1091
        %v1370 = vunpack.c.h.b16 %v1091
        %v1371 = vunpack.c.l.b16 %v1092
        %v1372 = vunpack.c.h.b16 %v1092
        %v1373 = vunpack.c.l.b16 %v1093
        %v1374 = vunpack.c.h.b16 %v1093
        %v1375 = vunpack.c.l.b16 %v1094
        %v1376 = vunpack.c.h.b16 %v1094
        %v1377 = vunpack.c.l.b16 %v1095
        %v1378 = vunpack.c.h.b16 %v1095
        %v1379 = vunpack.c.l.b16 %v1096
        %v1380 = vunpack.c.h.b16 %v1096
        %v1381 = vunpack.c.l.b16 %v1097
        %v1382 = vunpack.c.h.b16 %v1097
        %v1383 = vunpack.c.l.b16 %v1098
        %v1384 = vunpack.c.h.b16 %v1098
        %v1385 = vunpack.c.l.b16 %v1099
        %v1386 = vunpack.c.h.b16 %v1099
        %v1387 = vunpack.c.l.b16 %v1100
        %v1388 = vunpack.c.h.b16 %v1100
        %v1389 = vunpack.c.l.b16 %v1101
        %v1390 = vunpack.c.h.b16 %v1101
        %v1391 = vunpack.c.l.b16 %v1102
        %v1392 = vunpack.c.h.b16 %v1102
        %v1393 = vunpack.c.l.b16 %v1103
        %v1394 = vunpack.c.h.b16 %v1103
        %v1395 = vunpack.c.l.b16 %v1104
        %v1396 = vunpack.c.h.b16 %v1104
        %v1397 = vunpack.c.l.b16 %v1105
        %v1398 = vunpack.c.h.b16 %v1105
        %v1399 = vunpack.c.l.b16 %v1106
        %v1400 = vunpack.c.h.b16 %v1106
        %v1401 = vunpack.c.l.b16 %v1107
        %v1402 = vunpack.c.h.b16 %v1107
        %v1403 = vunpack.c.l.b16 %v1108
        %v1404 = vunpack.c.h.b16 %v1108
        %v1405 = vunpack.c.l.b16 %v1109
        %v1406 = vunpack.c.h.b16 %v1109
        %v1407 = vunpack.c.l.b16 %v1110
        %v1408 = vunpack.c.h.b16 %v1110
        %v1409 = vunpack.c.l.b16 %v1111
        %v1410 = vunpack.c.h.b16 %v1111
        %v1411 = vunpack.c.l.b16 %v1112
        %v1412 = vunpack.c.h.b16 %v1112
        %v1413 = vunpack.c.l.b16 %v1113
        %v1414 = vunpack.c.h.b16 %v1113
        %v1415 = vunpack.c.l.b16 %v1114
        %v1416 = vunpack.c.h.b16 %v1114
        %v1417 = vunpack.c.l.b16 %v1115
        %v1418 = vunpack.c.h.b16 %v1115
        %v1419 = vunpack.c.l.b16 %v1116
        %v1420 = vunpack.c.h.b16 %v1116
        %v1421 = vunpack.c.l.b16 %v1117
        %v1422 = vunpack.c.h.b16 %v1117
        %v1423 = vunpack.c.l.b16 %v1118
        %v1424 = vunpack.c.h.b16 %v1118
        %v1425 = vunpack.c.l.b16 %v1119
        %v1426 = vunpack.c.h.b16 %v1119
        %v1427 = vunpack.c.l.b16 %v1120
        %v1428 = vunpack.c.h.b16 %v1120
        %v1429 = vunpack.c.l.b16 %v1121
        %v1430 = vunpack.c.h.b16 %v1121
        %v1431 = vunpack.c.l.b16 %v1122
        %v1432 = vunpack.c.h.b16 %v1122
        %v1433 = vunpack.c.l.b16 %v1123
        %v1434 = vunpack.c.h.b16 %v1123
        %v1435 = vunpack.c.l.b16 %v1124
        %v1436 = vunpack.c.h.b16 %v1124
        %v1437 = vunpack.c.l.b16 %v1125
        %v1438 = vunpack.c.h.b16 %v1125
        %v1439 = vunpack.c.l.b16 %v1126
        %v1440 = vunpack.c.h.b16 %v1126
        %v1441 = vunpack.c.l.b16 %v1127
        %v1442 = vunpack.c.h.b16 %v1127
        %v1443 = vunpack.c.l.b16 %v1128
        %v1444 = vunpack.c.h.b16 %v1128
        %v1445 = vunpack.c.l.b16 %v1129
        %v1446 = vunpack.c.h.b16 %v1129
        %v1447 = vunpack.c.l.b16 %v1130
        %v1448 = vunpack.c.h.b16 %v1130
        %v1449 = vunpack.c.l.b16 %v1131
        %v1450 = vunpack.c.h.b16 %v1131
        %v1451 = vunpack.c.l.b16 %v1132
        %v1452 = vunpack.c.h.b16 %v1132
        %v1453 = vpack.c.b16 %v1267, %v1261
        %v1454 = vpack.c.b16 %v1268, %v1262
        %v1455 = vpack.c.b16 %v1269, %v1263
        %v1456 = vpack.c.b16 %v1270, %v1264
        %v1457 = vpack.c.b16 %v1271, %v1265
        %v1458 = vpack.c.b16 %v1272, %v1266
        %v1459 = vpack.c.b16 %v1279, %v1273
        %v1460 = vpack.c.b16 %v1280, %v1274
        %v1461 = vpack.c.b16 %v1281, %v1275
        %v1462 = vpack.c.b16 %v1282, %v1276
        %v1463 = vpack.c.b16 %v1283, %v1277
        %v1464 = vpack.c.b16 %v1284, %v1278
        %v1465 = vpack.c.b16 %v1291, %v1285
        %v1466 = vpack.c.b16 %v1292, %v1286
        %v1467 = vpack.c.b16 %v1293, %v1287
        %v1468 = vpack.c.b16 %v1294, %v1288
        %v1469 = vpack.c.b16 %v1295, %v1289
        %v1470 = vpack.c.b16 %v1296, %v1290
        %v1471 = vpack.c.b16 %v1303, %v1297
        %v1472 = vpack.c.b16 %v1304, %v1298
        %v1473 = vpack.c.b16 %v1305, %v1299
        %v1474 = vpack.c.b16 %v1306, %v1300
        %v1475 = vpack.c.b16 %v1307, %v1301
        %v1476 = vpack.c.b16 %v1308, %v1302
        %v1477 = vpack.c.b16 %v1315, %v1309
        %v1478 = vpack.c.b16 %v1316, %v1310
        %v1479 = vpack.c.b16 %v1317, %v1311
        %v1480 = vpack.c.b16 %v1318, %v1312
        %v1481 = vpack.c.b16 %v1319, %v1313
        %v1482 = vpack.c.b16 %v1320, %v1314
        %v1483 = vpack.c.b16 %v1327, %v1321
        %v1484 = vpack.c.b16 %v1328, %v1322
        %v1485 = vpack.c.b16 %v1329, %v1323
        %v1486 = vpack.c.b16 %v1330, %v1324
        %v1487 = vpack.c.b16 %v1331, %v1325
        %v1488 = vpack.c.b16 %v1332, %v1326
        %v1489 = vpack.c.b16 %v1339, %v1333
        %v1490 = vpack.c.b16 %v1340, %v1334
        %v1491 = vpack.c.b16 %v1341, %v1335
        %v1492 = vpack.c.b16 %v1342, %v1336
        %v1493 = vpack.c.b16 %v1343, %v1337
        %v1494 = vpack.c.b16 %v1344, %v1338
        %v1495 = vpack.c.b16 %v1351, %v1345
        %v1496 = vpack.c.b16 %v1352, %v1346
        %v1497 = vpack.c.b16 %v1353, %v1347
        %v1498 = vpack.c.b16 %v1354, %v1348
        %v1499 = vpack.c.b16 %v1355, %v1349
        %v1500 = vpack.c.b16 %v1356, %v1350
        %v1501 = vpack.c.b16 %v1363, %v1357
        %v1502 = vpack.c.b16 %v1364, %v1358
        %v1503 = vpack.c.b16 %v1365, %v1359
        %v1504 = vpack.c.b16 %v1366, %v1360
        %v1505 = vpack.c.b16 %v1367, %v1361
        %v1506 = vpack.c.b16 %v1368, %v1362
        %v1507 = vpack.c.b16 %v1375, %v1369
        %v1508 = vpack.c.b16 %v1376, %v1370
        %v1509 = vpack.c.b16 %v1377, %v1371
        %v1510 = vpack.c.b16 %v1378, %v1372
        %v1511 = vpack.c.b16 %v1379, %v1373
        %v1512 = vpack.c.b16 %v1380, %v1374
        %v1513 = vpack.c.b16 %v1387, %v1381
        %v1514 = vpack.c.b16 %v1388, %v1382
        %v1515 = vpack.c.b16 %v1389, %v1383
        %v1516 = vpack.c.b16 %v1390, %v1384
        %v1517 = vpack.c.b16 %v1391, %v1385
        %v1518 = vpack.c.b16 %v1392, %v1386
        %v1519 = vpack.c.b16 %v1399, %v1393
        %v1520 = vpack.c.b16 %v1400, %v1394
        %v1521 = vpack.c.b16 %v1401, %v1395
        %v1522 = vpack.c.b16 %v1402, %v1396
        %v1523 = vpack.c.b16 %v1403, %v1397
        %v1524 = vpack.c.b16 %v1404, %v1398
        %v1525 = vpack.c.b16 %v1411, %v1405
        %v1526 = vpack.c.b16 %v1412, %v1406
        %v1527 = vpack.c.b16 %v1413, %v1407
        %v1528 = vpack.c.b16 %v1414, %v1408
        %v1529 = vpack.c.b16 %v1415, %v1409
        %v1530 = vpack.c.b16 %v1416, %v1410
        %v1531 = vpack.c.b16 %v1423, %v1417
        %v1532 = vpack.c.b16 %v1424, %v1418
        %v1533 = vpack.c.b16 %v1425, %v1419
        %v1534 = vpack.c.b16 %v1426, %v1420
        %v1535 = vpack.c.b16 %v1427, %v1421
        %v1536 = vpack.c.b16 %v1428, %v1422
        %v1537 = vpack.c.b16 %v1435, %v1429
        %v1538 = vpack.c.b16 %v1436, %v1430
        %v1539 = vpack.c.b16 %v1437, %v1431
        %v1540 = vpack.c.b16 %v1438, %v1432
        %v1541 = vpack.c.b16 %v1439, %v1433
        %v1542 = vpack.c.b16 %v1440, %v1434
        %v1543 = vpack.c.b16 %v1447, %v1441
        %v1544 = vpack.c.b16 %v1448, %v1442
        %v1545 = vpack.c.b16 %v1449, %v1443
        %v1546 = vpack.c.b16 %v1450, %v1444
        %v1547 = vpack.c.b16 %v1451, %v1445
        %v1548 = vpack.c.b16 %v1452, %v1446
        %1645 = vmatprep.subr.bf16.mxu0 %v1454
        %1646 = vmatpush1.bf16.msra.mxu0 %v1453
        %1647 = vmatprep.subr.bf16.mxu0 %v1460
        %1648 = vmatpush1.bf16.msra.mxu0 %v1459
        %1649 = vmatprep.subr.bf16.mxu0 %v1466
        %1650 = vmatpush1.bf16.msra.mxu0 %v1465
        %1651 = vmatprep.subr.bf16.mxu0 %v1472
        %1652 = vmatpush1.bf16.msra.mxu0 %v1471
        %1653 = vmatprep.subr.bf16.mxu0 %v1478
        %1654 = vmatpush1.bf16.msra.mxu0 %v1477
        %1655 = vmatprep.subr.bf16.mxu0 %v1484
        %1656 = vmatpush1.bf16.msra.mxu0 %v1483
        %1657 = vmatprep.subr.bf16.mxu0 %v1490
        %1658 = vmatpush1.bf16.msra.mxu0 %v1489
        %1659 = vmatprep.subr.bf16.mxu0 %v1496
        %1660 = vmatpush1.bf16.msra.mxu0 %v1495
        %1661 = vmatprep.subr.bf16.mxu0 %v1502
        %1662 = vmatpush1.bf16.msra.mxu0 %v1501
        %1663 = vmatprep.subr.bf16.mxu0 %v1508
        %1664 = vmatpush1.bf16.msra.mxu0 %v1507
        %1665 = vmatprep.subr.bf16.mxu0 %v1514
        %1666 = vmatpush1.bf16.msra.mxu0 %v1513
        %1667 = vmatprep.subr.bf16.mxu0 %v1520
        %1668 = vmatpush1.bf16.msra.mxu0 %v1519
        %1669 = vmatprep.subr.bf16.mxu0 %v1526
        %1670 = vmatpush1.bf16.msra.mxu0 %v1525
        %1671 = vmatprep.subr.bf16.mxu0 %v1532
        %1672 = vmatpush1.bf16.msra.mxu0 %v1531
        %1673 = vmatprep.subr.bf16.mxu0 %v1538
        %1674 = vmatpush1.bf16.msra.mxu0 %v1537
        %1675 = vmatprep.subr.bf16.mxu0 %v1544
        %1676 = vmatpush1.bf16.msra.mxu0 %v1543
        %1677 = vmatprep.mubr.bf16.mxu0 %v1036
        %1678 = vmatmul.mubr.bf16.gmra.mrb[0].mxu0 %v1035
        %v1679 = vpop.f32.mrb[0].mxu0
        %v1680 = vadd.f32 %v1138, %v1679
        %v1681 = vpop.f32.mrb[0].mxu0
        %v1682 = vadd.f32 %v1142, %v1681
        %v1683 = vpop.f32.mrb[0].mxu0
        %v1684 = vpop.f32.mrb[0].mxu0
        %1685 = vdwg.mxu0
        %1686 = vmatprep.subr.bf16.mxu0 %v1456
        %1687 = vmatpush1.bf16.msra.mxu0 %v1455
        %1688 = vmatprep.subr.bf16.mxu0 %v1462
        %1689 = vmatpush1.bf16.msra.mxu0 %v1461
        %1690 = vmatprep.subr.bf16.mxu0 %v1468
        %1691 = vmatpush1.bf16.msra.mxu0 %v1467
        %1692 = vmatprep.subr.bf16.mxu0 %v1474
        %1693 = vmatpush1.bf16.msra.mxu0 %v1473
        %1694 = vmatprep.subr.bf16.mxu0 %v1480
        %1695 = vmatpush1.bf16.msra.mxu0 %v1479
        %1696 = vmatprep.subr.bf16.mxu0 %v1486
        %1697 = vmatpush1.bf16.msra.mxu0 %v1485
        %1698 = vmatprep.subr.bf16.mxu0 %v1492
        %1699 = vmatpush1.bf16.msra.mxu0 %v1491
        %1700 = vmatprep.subr.bf16.mxu0 %v1498
        %1701 = vmatpush1.bf16.msra.mxu0 %v1497
        %1702 = vmatprep.subr.bf16.mxu0 %v1504
        %1703 = vmatpush1.bf16.msra.mxu0 %v1503
        %1704 = vmatprep.subr.bf16.mxu0 %v1510
        %1705 = vmatpush1.bf16.msra.mxu0 %v1509
        %1706 = vmatprep.subr.bf16.mxu0 %v1516
        %1707 = vmatpush1.bf16.msra.mxu0 %v1515
        %1708 = vmatprep.subr.bf16.mxu0 %v1522
        %1709 = vmatpush1.bf16.msra.mxu0 %v1521
        %1710 = vmatprep.subr.bf16.mxu0 %v1528
        %1711 = vmatpush1.bf16.msra.mxu0 %v1527
        %1712 = vmatprep.subr.bf16.mxu0 %v1534
        %1713 = vmatpush1.bf16.msra.mxu0 %v1533
        %1714 = vmatprep.subr.bf16.mxu0 %v1540
        %1715 = vmatpush1.bf16.msra.mxu0 %v1539
        %1716 = vmatprep.subr.bf16.mxu0 %v1546
        %1717 = vmatpush1.bf16.msra.mxu0 %v1545
        %1718 = vmatprep.mubr.bf16.mxu0 %v1036
        %1719 = vmatmul.mubr.bf16.gmra.mrb[0].mxu0 %v1035
        %v1720 = vpop.f32.mrb[0].mxu0
        %v1721 = vadd.f32 %v1146, %v1720
        %v1722 = vpop.f32.mrb[0].mxu0
        %v1723 = vadd.f32 %v1150, %v1722
        %v1724 = vpop.f32.mrb[0].mxu0
        %v1725 = vpop.f32.mrb[0].mxu0
        %1726 = vdwg.mxu0
        %1727 = vmatprep.subr.bf16.mxu0 %v1458
        %1728 = vmatpush1.bf16.msra.mxu0 %v1457
        %1729 = vmatprep.subr.bf16.mxu0 %v1464
        %1730 = vmatpush1.bf16.msra.mxu0 %v1463
        %1731 = vmatprep.subr.bf16.mxu0 %v1470
        %1732 = vmatpush1.bf16.msra.mxu0 %v1469
        %1733 = vmatprep.subr.bf16.mxu0 %v1476
        %1734 = vmatpush1.bf16.msra.mxu0 %v1475
        %1735 = vmatprep.subr.bf16.mxu0 %v1482
        %1736 = vmatpush1.bf16.msra.mxu0 %v1481
        %1737 = vmatprep.subr.bf16.mxu0 %v1488
        %1738 = vmatpush1.bf16.msra.mxu0 %v1487
        %1739 = vmatprep.subr.bf16.mxu0 %v1494
        %1740 = vmatpush1.bf16.msra.mxu0 %v1493
        %1741 = vmatprep.subr.bf16.mxu0 %v1500
        %1742 = vmatpush1.bf16.msra.mxu0 %v1499
        %1743 = vmatprep.subr.bf16.mxu0 %v1506
        %1744 = vmatpush1.bf16.msra.mxu0 %v1505
        %1745 = vmatprep.subr.bf16.mxu0 %v1512
        %1746 = vmatpush1.bf16.msra.mxu0 %v1511
        %1747 = vmatprep.subr.bf16.mxu0 %v1518
        %1748 = vmatpush1.bf16.msra.mxu0 %v1517
        %1749 = vmatprep.subr.bf16.mxu0 %v1524
        %1750 = vmatpush1.bf16.msra.mxu0 %v1523
        %1751 = vmatprep.subr.bf16.mxu0 %v1530
        %1752 = vmatpush1.bf16.msra.mxu0 %v1529
        %1753 = vmatprep.subr.bf16.mxu0 %v1536
        %1754 = vmatpush1.bf16.msra.mxu0 %v1535
        %1755 = vmatprep.subr.bf16.mxu0 %v1542
        %1756 = vmatpush1.bf16.msra.mxu0 %v1541
        %1757 = vmatprep.subr.bf16.mxu0 %v1548
        %1758 = vmatpush1.bf16.msra.mxu0 %v1547
        %1759 = vmatprep.mubr.bf16.mxu0 %v1036
        %1760 = vmatmul.mubr.bf16.gmra.mrb[0].mxu0 %v1035
        %v1761 = vpop.f32.mrb[0].mxu0
        %v1762 = vadd.f32 %v1154, %v1761
        %v1763 = vpop.f32.mrb[0].mxu0
        %v1764 = vadd.f32 %v1158, %v1763
        %v1765 = vpop.f32.mrb[0].mxu0
        %v1766 = vpop.f32.mrb[0].mxu0
        %1767 = vdwg.mxu0
        %v1768 = vmul.f32 %v1680, 0.088388346
        %v1769 = vmul.f32 %v1682, 0.088388346
        %v1770 = vld [vmem:[%s857] sm:$0xff]
        %v1771 = vld [vmem:[#allocation13] sm:$0xff]
        %v1772 = vld [vmem:[#allocation13 + $0x8] sm:$0xff]
        %v1773 = vld [vmem:[#allocation13 + $0x10] sm:$0xff]
        %v1774 = vld [vmem:[#allocation13 + $0x18] sm:$0xff]
        %v1775 = vld [vmem:[#allocation13 + $0x20] sm:$0xff]
        %v1776 = vld [vmem:[#allocation13 + $0x28] sm:$0xff]
        %v1777 = vld [vmem:[#allocation13 + $0x30] sm:$0xff]
        %v1778 = vld [vmem:[#allocation13 + $0x38] sm:$0xff]
        %v1779 = vld [vmem:[#allocation13 + $0x40] sm:$0xff]
        %v1780 = vld [vmem:[#allocation13 + $0x48] sm:$0xff]
        %v1781 = vld [vmem:[#allocation13 + $0x50] sm:$0xff]
        %v1782 = vld [vmem:[#allocation13 + $0x58] sm:$0xff]
        %v1783 = vld [vmem:[#allocation13 + $0x60] sm:$0xff]
        %v1784 = vld [vmem:[#allocation13 + $0x68] sm:$0xff]
        %v1785 = vld [vmem:[#allocation13 + $0x70] sm:$0xff]
        %v1786 = vld [vmem:[#allocation13 + $0x78] sm:$0xff]
        %v1787 = vld [vmem:[#allocation13 + $0x80] sm:$0xff]
        %v1788 = vld [vmem:[#allocation13 + $0x88] sm:$0xff]
        %v1789 = vld [vmem:[#allocation13 + $0x90] sm:$0xff]
        %v1790 = vld [vmem:[#allocation13 + $0x98] sm:$0xff]
        %v1791 = vld [vmem:[#allocation13 + $0xa0] sm:$0xff]
        %v1792 = vld [vmem:[#allocation13 + $0xa8] sm:$0xff]
        %v1793 = vld [vmem:[#allocation13 + $0xb0] sm:$0xff]
        %v1794 = vld [vmem:[#allocation13 + $0xb8] sm:$0xff]
        %v1795 = vld [vmem:[#allocation13 + $0xc0] sm:$0xff]
        %v1796 = vld [vmem:[#allocation13 + $0xc8] sm:$0xff]
        %v1797 = vld [vmem:[#allocation13 + $0xd0] sm:$0xff]
        %v1798 = vld [vmem:[#allocation13 + $0xd8] sm:$0xff]
        %v1799 = vld [vmem:[#allocation13 + $0xe0] sm:$0xff]
        %v1800 = vld [vmem:[#allocation13 + $0xe8] sm:$0xff]
        %v1801 = vld [vmem:[#allocation13 + $0xf0] sm:$0xff]
        %v1802 = vld [vmem:[#allocation13 + $0xf8] sm:$0xff]
        %v1803 = vld [vmem:[%s9] sm:$0x3]
        %v1804 = vpack.c.bf16 %v1768, %v1768
        %v1805 = vpack.c.bf16 %v1769, %v1769
        %v1806 = vpack.c.bf16 %v1721, %v1721
        %v1807 = vpack.c.bf16 %v1723, %v1723
        %v1808 = vpack.c.bf16 %v1762, %v1762
        %v1809 = vpack.c.bf16 %v1764, %v1764
        %1810 = vmatprep.subr.bf16.mxu0 0
        %1811 = vmatpush1.bf16.xpose.msra.mxu0 %v1806
        %1812 = vmatprep.subr.bf16.mxu0 0
        %1813 = vmatpush1.bf16.xpose.msra.mxu0 0
        %1814 = vmatprep.subr.bf16.mxu0 0
        %1815 = vmatpush1.bf16.xpose.msra.mxu0 0
        %1816 = vmatprep.subr.bf16.mxu0 0
        %1817 = vmatpush1.bf16.xpose.msra.mxu0 0
        %1818 = vmatprep.subr.bf16.mxu0 0
        %1819 = vmatpush1.bf16.xpose.msra.mxu0 0
        %1820 = vmatprep.subr.bf16.mxu0 0
        %1821 = vmatpush1.bf16.xpose.msra.mxu0 0
        %1822 = vmatprep.subr.bf16.mxu0 0
        %1823 = vmatpush1.bf16.xpose.msra.mxu0 0
        %1824 = vmatprep.subr.bf16.mxu0 0
        %1825 = vmatpush1.bf16.xpose.msra.mxu0 0
        %1826 = vmatprep.subr.bf16.mxu0 0
        %1827 = vmatpush1.bf16.xpose.msra.mxu0 0
        %1828 = vmatprep.subr.bf16.mxu0 0
        %1829 = vmatpush1.bf16.xpose.msra.mxu0 0
        %1830 = vmatprep.subr.bf16.mxu0 0
        %1831 = vmatpush1.bf16.xpose.msra.mxu0 0
        %1832 = vmatprep.subr.bf16.mxu0 0
        %1833 = vmatpush1.bf16.xpose.msra.mxu0 0
        %1834 = vmatprep.subr.bf16.mxu0 0
        %1835 = vmatpush1.bf16.xpose.msra.mxu0 0
        %1836 = vmatprep.subr.bf16.mxu0 0
        %1837 = vmatpush1.bf16.xpose.msra.mxu0 0
        %1838 = vmatprep.subr.bf16.mxu0 0
        %1839 = vmatpush1.bf16.xpose.msra.mxu0 0
        %1840 = vmatprep.subr.bf16.mxu0 0
        %1841 = vmatpush1.bf16.xpose.msra.mxu0 0
        %1842 = vmatprep.mubr.bf16.mxu0 0
        %1843 = vmatmul.mubr.bf16.gmra.mrb[0].mxu0 %v1804
        %v1844 = vpop.f32.mrb[0].mxu0
        %v1845 = vadd.f32 %v1770, %v1844
        %v1846 = vpop.f32.mrb[0].mxu0
        %v1847 = vpop.f32.mrb[0].mxu0
        %v1848 = vpop.f32.mrb[0].mxu0
        %1849 = vdwg.mxu0
        %vm1850 = vcmask 64512
        %v1851 = vsel %vm1850, %v1845, -inf
        %1852 = vmax.xlane.f32.xlu0 %v1851
        %v1853 = vpop.xlane.xlu0 %1852
        %v1854 = vsub.f32 %v1845, %v1853
        %v1855 = vmul.f32 %v1854, 1.442695
        %v1856 = vpow.pop %v1855
        %v1857 = vsel %vm1850, %v1856, 0.0
        %1858 = vadd.xlane.f32.xlu0 %v1857
        %v1859 = vpop.xlane.xlu0 %1858
        %v1860 = vrcp.pop %v1859
        %v1861 = vmul.f32 %v1856, %v1860
        %v1862 = vpack.c.bf16 %v1861, %v1861
        %v1864 = vsel %vm1850, %v1862, 0
        %vm1866 = vcmask 1043456
        %v1868 = vsel %vm1866, %v1808, 0
        %1870 = vmatprep.subr.bf16.mxu0 0
        %1871 = vmatpush1.bf16.msra.mxu0 %v1868
        %1872 = vmatprep.subr.bf16.mxu0 0
        %1873 = vmatpush1.bf16.msra.mxu0 0
        %1874 = vmatprep.subr.bf16.mxu0 0
        %1875 = vmatpush1.bf16.msra.mxu0 0
        %1876 = vmatprep.subr.bf16.mxu0 0
        %1877 = vmatpush1.bf16.msra.mxu0 0
        %1878 = vmatprep.subr.bf16.mxu0 0
        %1879 = vmatpush1.bf16.msra.mxu0 0
        %1880 = vmatprep.subr.bf16.mxu0 0
        %1881 = vmatpush1.bf16.msra.mxu0 0
        %1882 = vmatprep.subr.bf16.mxu0 0
        %1883 = vmatpush1.bf16.msra.mxu0 0
        %1884 = vmatprep.subr.bf16.mxu0 0
        %1885 = vmatpush1.bf16.msra.mxu0 0
        %1886 = vmatprep.subr.bf16.mxu0 0
        %1887 = vmatpush1.bf16.msra.mxu0 0
        %1888 = vmatprep.subr.bf16.mxu0 0
        %1889 = vmatpush1.bf16.msra.mxu0 0
        %1890 = vmatprep.subr.bf16.mxu0 0
        %1891 = vmatpush1.bf16.msra.mxu0 0
        %1892 = vmatprep.subr.bf16.mxu0 0
        %1893 = vmatpush1.bf16.msra.mxu0 0
        %1894 = vmatprep.subr.bf16.mxu0 0
        %1895 = vmatpush1.bf16.msra.mxu0 0
        %1896 = vmatprep.subr.bf16.mxu0 0
        %1897 = vmatpush1.bf16.msra.mxu0 0
        %1898 = vmatprep.subr.bf16.mxu0 0
        %1899 = vmatpush1.bf16.msra.mxu0 0
        %1900 = vmatprep.subr.bf16.mxu0 0
        %1901 = vmatpush1.bf16.msra.mxu0 0
        %1902 = vmatprep.mubr.bf16.mxu0 0
        %1903 = vmatmul.mubr.bf16.gmra.mrb[0].mxu0 %v1864
        %v1904 = vpop.f32.mrb[0].mxu0
        %v1905 = vadd.f32 0.0, %v1904
        %v1906 = vpop.f32.mrb[0].mxu0
        %v1907 = vpop.f32.mrb[0].mxu0
        %v1908 = vpop.f32.mrb[0].mxu0
        %1909 = vdwg.mxu0
        %1910 = vmatprep.subr.bf16.mxu0 0
        %1911 = vmatpush1.bf16.xpose.msra.mxu0 %v1807
        %1912 = vmatprep.subr.bf16.mxu0 0
        %1913 = vmatpush1.bf16.xpose.msra.mxu0 0
        %1914 = vmatprep.subr.bf16.mxu0 0
        %1915 = vmatpush1.bf16.xpose.msra.mxu0 0
        %1916 = vmatprep.subr.bf16.mxu0 0
        %1917 = vmatpush1.bf16.xpose.msra.mxu0 0
        %1918 = vmatprep.subr.bf16.mxu0 0
        %1919 = vmatpush1.bf16.xpose.msra.mxu0 0
        %1920 = vmatprep.subr.bf16.mxu0 0
        %1921 = vmatpush1.bf16.xpose.msra.mxu0 0
        %1922 = vmatprep.subr.bf16.mxu0 0
        %1923 = vmatpush1.bf16.xpose.msra.mxu0 0
        %1924 = vmatprep.subr.bf16.mxu0 0
        %1925 = vmatpush1.bf16.xpose.msra.mxu0 0
        %1926 = vmatprep.subr.bf16.mxu0 0
        %1927 = vmatpush1.bf16.xpose.msra.mxu0 0
        %1928 = vmatprep.subr.bf16.mxu0 0
        %1929 = vmatpush1.bf16.xpose.msra.mxu0 0
        %1930 = vmatprep.subr.bf16.mxu0 0
        %1931 = vmatpush1.bf16.xpose.msra.mxu0 0
        %1932 = vmatprep.subr.bf16.mxu0 0
        %1933 = vmatpush1.bf16.xpose.msra.mxu0 0
        %1934 = vmatprep.subr.bf16.mxu0 0
        %1935 = vmatpush1.bf16.xpose.msra.mxu0 0
        %1936 = vmatprep.subr.bf16.mxu0 0
        %1937 = vmatpush1.bf16.xpose.msra.mxu0 0
        %1938 = vmatprep.subr.bf16.mxu0 0
        %1939 = vmatpush1.bf16.xpose.msra.mxu0 0
        %1940 = vmatprep.subr.bf16.mxu0 0
        %1941 = vmatpush1.bf16.xpose.msra.mxu0 0
        %1942 = vmatprep.mubr.bf16.mxu0 0
        %1943 = vmatmul.mubr.bf16.gmra.mrb[0].mxu0 %v1805
        %v1944 = vpop.f32.mrb[0].mxu0
        %v1945 = vadd.f32 %v1770, %v1944
        %v1946 = vpop.f32.mrb[0].mxu0
        %v1947 = vpop.f32.mrb[0].mxu0
        %v1948 = vpop.f32.mrb[0].mxu0
        %1949 = vdwg.mxu0
        %v1950 = vsel %vm1850, %v1945, -inf
        %1951 = vmax.xlane.f32.xlu0 %v1950
        %v1952 = vpop.xlane.xlu0 %1951
        %v1953 = vsub.f32 %v1945, %v1952
        %v1954 = vmul.f32 %v1953, 1.442695
        %v1955 = vpow.pop %v1954
        %v1956 = vsel %vm1850, %v1955, 0.0
        %1957 = vadd.xlane.f32.xlu0 %v1956
        %v1958 = vpop.xlane.xlu0 %1957
        %v1959 = vrcp.pop %v1958
        %v1960 = vmul.f32 %v1955, %v1959
        %v1961 = vpack.c.bf16 %v1960, %v1960
        %v1963 = vsel %vm1850, %v1961, 0
        %v1966 = vsel %vm1866, %v1809, 0
        %1968 = vmatprep.subr.bf16.mxu0 0
        %1969 = vmatpush1.bf16.msra.mxu0 %v1966
        %1970 = vmatprep.subr.bf16.mxu0 0
        %1971 = vmatpush1.bf16.msra.mxu0 0
        %1972 = vmatprep.subr.bf16.mxu0 0
        %1973 = vmatpush1.bf16.msra.mxu0 0
        %1974 = vmatprep.subr.bf16.mxu0 0
        %1975 = vmatpush1.bf16.msra.mxu0 0
        %1976 = vmatprep.subr.bf16.mxu0 0
        %1977 = vmatpush1.bf16.msra.mxu0 0
        %1978 = vmatprep.subr.bf16.mxu0 0
        %1979 = vmatpush1.bf16.msra.mxu0 0
        %1980 = vmatprep.subr.bf16.mxu0 0
        %1981 = vmatpush1.bf16.msra.mxu0 0
        %1982 = vmatprep.subr.bf16.mxu0 0
        %1983 = vmatpush1.bf16.msra.mxu0 0
        %1984 = vmatprep.subr.bf16.mxu0 0
        %1985 = vmatpush1.bf16.msra.mxu0 0
        %1986 = vmatprep.subr.bf16.mxu0 0
        %1987 = vmatpush1.bf16.msra.mxu0 0
        %1988 = vmatprep.subr.bf16.mxu0 0
        %1989 = vmatpush1.bf16.msra.mxu0 0
        %1990 = vmatprep.subr.bf16.mxu0 0
        %1991 = vmatpush1.bf16.msra.mxu0 0
        %1992 = vmatprep.subr.bf16.mxu0 0
        %1993 = vmatpush1.bf16.msra.mxu0 0
        %1994 = vmatprep.subr.bf16.mxu0 0
        %1995 = vmatpush1.bf16.msra.mxu0 0
        %1996 = vmatprep.subr.bf16.mxu0 0
        %1997 = vmatpush1.bf16.msra.mxu0 0
        %1998 = vmatprep.subr.bf16.mxu0 0
        %1999 = vmatpush1.bf16.msra.mxu0 0
        %2000 = vmatprep.mubr.bf16.mxu0 0
        %2001 = vmatmul.mubr.bf16.gmra.mrb[0].mxu0 %v1963
        %v2002 = vpop.f32.mrb[0].mxu0
        %v2003 = vadd.f32 0.0, %v2002
        %v2004 = vpop.f32.mrb[0].mxu0
        %v2005 = vpop.f32.mrb[0].mxu0
        %v2006 = vpop.f32.mrb[0].mxu0
        %2007 = vdwg.mxu0
        %v2008 = vpack.c.bf16 %v1905, %v1905
        %v2009 = vpack.c.bf16 %v2003, %v2003
        %v2011 = vlaneseq
        %v2012 = vshrl.u32 %v2011, 7
        %v2013 = vsub.s32 0, %v2012
        %v2014 = vrot.slane %v1803, %v2013
        %v2015 = vlaneseq
        %v2016 = vshrl.u32 %v2015, 7
        %v2017 = vsub.s32 1, %v2016
        %v2018 = vrot.slane %v1803, %v2017
        %v2053 = vunpack.c.l.b16 %v1771
        %v2054 = vunpack.c.h.b16 %v1771
        %v2055 = vunpack.c.l.b16 %v1772
        %v2056 = vunpack.c.h.b16 %v1772
        %v2057 = vunpack.c.l.b16 %v1773
        %v2058 = vunpack.c.h.b16 %v1773
        %v2059 = vunpack.c.l.b16 %v1774
        %v2060 = vunpack.c.h.b16 %v1774
        %v2061 = vunpack.c.l.b16 %v1775
        %v2062 = vunpack.c.h.b16 %v1775
        %v2063 = vunpack.c.l.b16 %v1776
        %v2064 = vunpack.c.h.b16 %v1776
        %v2065 = vunpack.c.l.b16 %v1777
        %v2066 = vunpack.c.h.b16 %v1777
        %v2067 = vunpack.c.l.b16 %v1778
        %v2068 = vunpack.c.h.b16 %v1778
        %v2069 = vunpack.c.l.b16 %v1779
        %v2070 = vunpack.c.h.b16 %v1779
        %v2071 = vunpack.c.l.b16 %v1780
        %v2072 = vunpack.c.h.b16 %v1780
        %v2073 = vunpack.c.l.b16 %v1781
        %v2074 = vunpack.c.h.b16 %v1781
        %v2075 = vunpack.c.l.b16 %v1782
        %v2076 = vunpack.c.h.b16 %v1782
        %v2077 = vunpack.c.l.b16 %v1783
        %v2078 = vunpack.c.h.b16 %v1783
        %v2079 = vunpack.c.l.b16 %v1784
        %v2080 = vunpack.c.h.b16 %v1784
        %v2081 = vunpack.c.l.b16 %v1785
        %v2082 = vunpack.c.h.b16 %v1785
        %v2083 = vunpack.c.l.b16 %v1786
        %v2084 = vunpack.c.h.b16 %v1786
        %v2085 = vunpack.c.l.b16 %v1787
        %v2086 = vunpack.c.h.b16 %v1787
        %v2087 = vunpack.c.l.b16 %v1788
        %v2088 = vunpack.c.h.b16 %v1788
        %v2089 = vunpack.c.l.b16 %v1789
        %v2090 = vunpack.c.h.b16 %v1789
        %v2091 = vunpack.c.l.b16 %v1790
        %v2092 = vunpack.c.h.b16 %v1790
        %v2093 = vunpack.c.l.b16 %v1791
        %v2094 = vunpack.c.h.b16 %v1791
        %v2095 = vunpack.c.l.b16 %v1792
        %v2096 = vunpack.c.h.b16 %v1792
        %v2097 = vunpack.c.l.b16 %v1793
        %v2098 = vunpack.c.h.b16 %v1793
        %v2099 = vunpack.c.l.b16 %v1794
        %v2100 = vunpack.c.h.b16 %v1794
        %v2101 = vunpack.c.l.b16 %v1795
        %v2102 = vunpack.c.h.b16 %v1795
        %v2103 = vunpack.c.l.b16 %v1796
        %v2104 = vunpack.c.h.b16 %v1796
        %v2105 = vunpack.c.l.b16 %v1797
        %v2106 = vunpack.c.h.b16 %v1797
        %v2107 = vunpack.c.l.b16 %v1798
        %v2108 = vunpack.c.h.b16 %v1798
        %v2109 = vunpack.c.l.b16 %v1799
        %v2110 = vunpack.c.h.b16 %v1799
        %v2111 = vunpack.c.l.b16 %v1800
        %v2112 = vunpack.c.h.b16 %v1800
        %v2113 = vunpack.c.l.b16 %v1801
        %v2114 = vunpack.c.h.b16 %v1801
        %v2115 = vunpack.c.l.b16 %v1802
        %v2116 = vunpack.c.h.b16 %v1802
        %v2117 = vpack.c.b16 %v2055, %v2053
        %v2118 = vpack.c.b16 %v2056, %v2054
        %v2119 = vpack.c.b16 %v2059, %v2057
        %v2120 = vpack.c.b16 %v2060, %v2058
        %v2121 = vpack.c.b16 %v2063, %v2061
        %v2122 = vpack.c.b16 %v2064, %v2062
        %v2123 = vpack.c.b16 %v2067, %v2065
        %v2124 = vpack.c.b16 %v2068, %v2066
        %v2125 = vpack.c.b16 %v2071, %v2069
        %v2126 = vpack.c.b16 %v2072, %v2070
        %v2127 = vpack.c.b16 %v2075, %v2073
        %v2128 = vpack.c.b16 %v2076, %v2074
        %v2129 = vpack.c.b16 %v2079, %v2077
        %v2130 = vpack.c.b16 %v2080, %v2078
        %v2131 = vpack.c.b16 %v2083, %v2081
        %v2132 = vpack.c.b16 %v2084, %v2082
        %v2133 = vpack.c.b16 %v2087, %v2085
        %v2134 = vpack.c.b16 %v2088, %v2086
        %v2135 = vpack.c.b16 %v2091, %v2089
        %v2136 = vpack.c.b16 %v2092, %v2090
        %v2137 = vpack.c.b16 %v2095, %v2093
        %v2138 = vpack.c.b16 %v2096, %v2094
        %v2139 = vpack.c.b16 %v2099, %v2097
        %v2140 = vpack.c.b16 %v2100, %v2098
        %v2141 = vpack.c.b16 %v2103, %v2101
        %v2142 = vpack.c.b16 %v2104, %v2102
        %v2143 = vpack.c.b16 %v2107, %v2105
        %v2144 = vpack.c.b16 %v2108, %v2106
        %v2145 = vpack.c.b16 %v2111, %v2109
        %v2146 = vpack.c.b16 %v2112, %v2110
        %v2147 = vpack.c.b16 %v2115, %v2113
        %v2148 = vpack.c.b16 %v2116, %v2114
        %2181 = vmatprep.subr.bf16.mxu0 %v2118
        %2182 = vmatpush1.bf16.msra.mxu0 %v2117
        %2183 = vmatprep.subr.bf16.mxu0 %v2120
        %2184 = vmatpush1.bf16.msra.mxu0 %v2119
        %2185 = vmatprep.subr.bf16.mxu0 %v2122
        %2186 = vmatpush1.bf16.msra.mxu0 %v2121
        %2187 = vmatprep.subr.bf16.mxu0 %v2124
        %2188 = vmatpush1.bf16.msra.mxu0 %v2123
        %2189 = vmatprep.subr.bf16.mxu0 %v2126
        %2190 = vmatpush1.bf16.msra.mxu0 %v2125
        %2191 = vmatprep.subr.bf16.mxu0 %v2128
        %2192 = vmatpush1.bf16.msra.mxu0 %v2127
        %2193 = vmatprep.subr.bf16.mxu0 %v2130
        %2194 = vmatpush1.bf16.msra.mxu0 %v2129
        %2195 = vmatprep.subr.bf16.mxu0 %v2132
        %2196 = vmatpush1.bf16.msra.mxu0 %v2131
        %2197 = vmatprep.subr.bf16.mxu0 %v2134
        %2198 = vmatpush1.bf16.msra.mxu0 %v2133
        %2199 = vmatprep.subr.bf16.mxu0 %v2136
        %2200 = vmatpush1.bf16.msra.mxu0 %v2135
        %2201 = vmatprep.subr.bf16.mxu0 %v2138
        %2202 = vmatpush1.bf16.msra.mxu0 %v2137
        %2203 = vmatprep.subr.bf16.mxu0 %v2140
        %2204 = vmatpush1.bf16.msra.mxu0 %v2139
        %2205 = vmatprep.subr.bf16.mxu0 %v2142
        %2206 = vmatpush1.bf16.msra.mxu0 %v2141
        %2207 = vmatprep.subr.bf16.mxu0 %v2144
        %2208 = vmatpush1.bf16.msra.mxu0 %v2143
        %2209 = vmatprep.subr.bf16.mxu0 %v2146
        %2210 = vmatpush1.bf16.msra.mxu0 %v2145
        %2211 = vmatprep.subr.bf16.mxu0 %v2148
        %2212 = vmatpush1.bf16.msra.mxu0 %v2147
        %2213 = vmatprep.mubr.bf16.mxu0 %v2009
        %2214 = vmatmul.mubr.bf16.gmra.mrb[0].mxu0 %v2008
        %v2215 = vpop.f32.mrb[0].mxu0
        %v2216 = vadd.f32 %v2014, %v2215
        %v2217 = vpop.f32.mrb[0].mxu0
        %v2218 = vadd.f32 %v2018, %v2217
        %v2219 = vpop.f32.mrb[0].mxu0
        %v2220 = vpop.f32.mrb[0].mxu0
        %2221 = vdwg.mxu0
        %v2222 = vadd.f32 %v977, %v2216
        %v2223 = vadd.f32 %v978, %v2218
        %v2224 = vld [vmem:[%s10] sm:$0x3]
        %v2225 = vld [vmem:[%s11] sm:$0x3]
        %v2226 = vadd.f32 %v2222, %v2223
        %2227 = vadd.xlane.f32.xlu0 %v2226
        %v2228 = vpop.xlane.xlu0 %2227
        %v2229 = vmul.f32 %v2228, %v988
        %v2230 = vsub.f32 %v2222, %v2229
        %v2231 = vsub.f32 %v2223, %v2229
        %v2232 = vmul.f32 %v2230, %v2230
        %v2233 = vmul.f32 %v2231, %v2231
        %v2234 = vadd.f32 %v2232, %v2233
        %2235 = vadd.xlane.f32.xlu0 %v2234
        %v2236 = vpop.xlane.xlu0 %2235
        %v2237 = vmul.f32 %v2236, 0.003921569
        %v2238 = vrsqrt.pop %v2237
        %v2239 = vmul.f32 %v2237, %v2238
        %vm2240 = vcmp.eq.f32.partialorder %v2237, inf
        %v2241 = vsel %vm2240, %v2237, %v2239
        %vm2242 = vcmp.eq.f32.partialorder %v2237, 0.0
        %v2243 = vand.u32 %v2237, 2147483648
        %v2244 = vsel %vm2242, %v2243, %v2241
        %v2245 = vadd.f32 %v2244, 1e-06
        %v2246 = vrcp.pop %v2245
        %v2247 = vmul.f32 %v2230, %v2246
        %v2248 = vmul.f32 %v2231, %v2246
        %v2250 = vlaneseq
        %v2251 = vshrl.u32 %v2250, 7
        %v2252 = vsub.s32 0, %v2251
        %v2253 = vrot.slane %v2224, %v2252
        %v2254 = vlaneseq
        %v2255 = vshrl.u32 %v2254, 7
        %v2256 = vsub.s32 1, %v2255
        %v2257 = vrot.slane %v2224, %v2256
        %v2260 = vmul.f32 %v2253, %v2247
        %v2261 = vmul.f32 %v2257, %v2248
        %v2263 = vlaneseq
        %v2264 = vshrl.u32 %v2263, 7
        %v2265 = vsub.s32 0, %v2264
        %v2266 = vrot.slane %v2225, %v2265
        %v2267 = vlaneseq
        %v2268 = vshrl.u32 %v2267, 7
        %v2269 = vsub.s32 1, %v2268
        %v2270 = vrot.slane %v2225, %v2269
        %v2273 = vadd.f32 %v2260, %v2266
        %v2274 = vadd.f32 %v2261, %v2270
        %v2275 = vpack.c.bf16 %v2273, %v2273
        %v2276 = vpack.c.bf16 %v2274, %v2274
        %v2277 = vld [vmem:[#allocation14] sm:$0xff]
        %v2278 = vld [vmem:[#allocation14 + $0x8] sm:$0xff]
        %v2279 = vld [vmem:[#allocation14 + $0x10] sm:$0xff]
        %v2280 = vld [vmem:[#allocation14 + $0x18] sm:$0xff]
        %v2281 = vld [vmem:[#allocation14 + $0x20] sm:$0xff]
        %v2282 = vld [vmem:[#allocation14 + $0x28] sm:$0xff]
        %v2283 = vld [vmem:[#allocation14 + $0x30] sm:$0xff]
        %v2284 = vld [vmem:[#allocation14 + $0x38] sm:$0xff]
        %v2285 = vld [vmem:[#allocation14 + $0x40] sm:$0xff]
        %v2286 = vld [vmem:[#allocation14 + $0x48] sm:$0xff]
        %v2287 = vld [vmem:[#allocation14 + $0x50] sm:$0xff]
        %v2288 = vld [vmem:[#allocation14 + $0x58] sm:$0xff]
        %v2289 = vld [vmem:[#allocation14 + $0x60] sm:$0xff]
        %v2290 = vld [vmem:[#allocation14 + $0x68] sm:$0xff]
        %v2291 = vld [vmem:[#allocation14 + $0x70] sm:$0xff]
        %v2292 = vld [vmem:[#allocation14 + $0x78] sm:$0xff]
        %v2293 = vld [vmem:[#allocation14 + $0x80] sm:$0xff]
        %v2294 = vld [vmem:[#allocation14 + $0x88] sm:$0xff]
        %v2295 = vld [vmem:[#allocation14 + $0x90] sm:$0xff]
        %v2296 = vld [vmem:[#allocation14 + $0x98] sm:$0xff]
        %v2297 = vld [vmem:[#allocation14 + $0xa0] sm:$0xff]
        %v2298 = vld [vmem:[#allocation14 + $0xa8] sm:$0xff]
        %v2299 = vld [vmem:[#allocation14 + $0xb0] sm:$0xff]
        %v2300 = vld [vmem:[#allocation14 + $0xb8] sm:$0xff]
        %v2301 = vld [vmem:[#allocation14 + $0xc0] sm:$0xff]
        %v2302 = vld [vmem:[#allocation14 + $0xc8] sm:$0xff]
        %v2303 = vld [vmem:[#allocation14 + $0xd0] sm:$0xff]
        %v2304 = vld [vmem:[#allocation14 + $0xd8] sm:$0xff]
        %v2305 = vld [vmem:[#allocation14 + $0xe0] sm:$0xff]
        %v2306 = vld [vmem:[#allocation14 + $0xe8] sm:$0xff]
        %v2307 = vld [vmem:[#allocation14 + $0xf0] sm:$0xff]
        %v2308 = vld [vmem:[#allocation14 + $0xf8] sm:$0xff]
        %v2309 = vld [vmem:[%s13] sm:$0x3]
        %v2311 = vlaneseq
        %v2312 = vshrl.u32 %v2311, 7
        %v2313 = vsub.s32 0, %v2312
        %v2314 = vrot.slane %v2309, %v2313
        %v2315 = vlaneseq
        %v2316 = vshrl.u32 %v2315, 7
        %v2317 = vsub.s32 1, %v2316
        %v2318 = vrot.slane %v2309, %v2317
        %v2353 = vunpack.c.l.b16 %v2277
        %v2354 = vunpack.c.h.b16 %v2277
        %v2355 = vunpack.c.l.b16 %v2278
        %v2356 = vunpack.c.h.b16 %v2278
        %v2357 = vunpack.c.l.b16 %v2279
        %v2358 = vunpack.c.h.b16 %v2279
        %v2359 = vunpack.c.l.b16 %v2280
        %v2360 = vunpack.c.h.b16 %v2280
        %v2361 = vunpack.c.l.b16 %v2281
        %v2362 = vunpack.c.h.b16 %v2281
        %v2363 = vunpack.c.l.b16 %v2282
        %v2364 = vunpack.c.h.b16 %v2282
        %v2365 = vunpack.c.l.b16 %v2283
        %v2366 = vunpack.c.h.b16 %v2283
        %v2367 = vunpack.c.l.b16 %v2284
        %v2368 = vunpack.c.h.b16 %v2284
        %v2369 = vunpack.c.l.b16 %v2285
        %v2370 = vunpack.c.h.b16 %v2285
        %v2371 = vunpack.c.l.b16 %v2286
        %v2372 = vunpack.c.h.b16 %v2286
        %v2373 = vunpack.c.l.b16 %v2287
        %v2374 = vunpack.c.h.b16 %v2287
        %v2375 = vunpack.c.l.b16 %v2288
        %v2376 = vunpack.c.h.b16 %v2288
        %v2377 = vunpack.c.l.b16 %v2289
        %v2378 = vunpack.c.h.b16 %v2289
        %v2379 = vunpack.c.l.b16 %v2290
        %v2380 = vunpack.c.h.b16 %v2290
        %v2381 = vunpack.c.l.b16 %v2291
        %v2382 = vunpack.c.h.b16 %v2291
        %v2383 = vunpack.c.l.b16 %v2292
        %v2384 = vunpack.c.h.b16 %v2292
        %v2385 = vunpack.c.l.b16 %v2293
        %v2386 = vunpack.c.h.b16 %v2293
        %v2387 = vunpack.c.l.b16 %v2294
        %v2388 = vunpack.c.h.b16 %v2294
        %v2389 = vunpack.c.l.b16 %v2295
        %v2390 = vunpack.c.h.b16 %v2295
        %v2391 = vunpack.c.l.b16 %v2296
        %v2392 = vunpack.c.h.b16 %v2296
        %v2393 = vunpack.c.l.b16 %v2297
        %v2394 = vunpack.c.h.b16 %v2297
        %v2395 = vunpack.c.l.b16 %v2298
        %v2396 = vunpack.c.h.b16 %v2298
        %v2397 = vunpack.c.l.b16 %v2299
        %v2398 = vunpack.c.h.b16 %v2299
        %v2399 = vunpack.c.l.b16 %v2300
        %v2400 = vunpack.c.h.b16 %v2300
        %v2401 = vunpack.c.l.b16 %v2301
        %v2402 = vunpack.c.h.b16 %v2301
        %v2403 = vunpack.c.l.b16 %v2302
        %v2404 = vunpack.c.h.b16 %v2302
        %v2405 = vunpack.c.l.b16 %v2303
        %v2406 = vunpack.c.h.b16 %v2303
        %v2407 = vunpack.c.l.b16 %v2304
        %v2408 = vunpack.c.h.b16 %v2304
        %v2409 = vunpack.c.l.b16 %v2305
        %v2410 = vunpack.c.h.b16 %v2305
        %v2411 = vunpack.c.l.b16 %v2306
        %v2412 = vunpack.c.h.b16 %v2306
        %v2413 = vunpack.c.l.b16 %v2307
        %v2414 = vunpack.c.h.b16 %v2307
        %v2415 = vunpack.c.l.b16 %v2308
        %v2416 = vunpack.c.h.b16 %v2308
        %v2417 = vpack.c.b16 %v2355, %v2353
        %v2418 = vpack.c.b16 %v2356, %v2354
        %v2419 = vpack.c.b16 %v2359, %v2357
        %v2420 = vpack.c.b16 %v2360, %v2358
        %v2421 = vpack.c.b16 %v2363, %v2361
        %v2422 = vpack.c.b16 %v2364, %v2362
        %v2423 = vpack.c.b16 %v2367, %v2365
        %v2424 = vpack.c.b16 %v2368, %v2366
        %v2425 = vpack.c.b16 %v2371, %v2369
        %v2426 = vpack.c.b16 %v2372, %v2370
        %v2427 = vpack.c.b16 %v2375, %v2373
        %v2428 = vpack.c.b16 %v2376, %v2374
        %v2429 = vpack.c.b16 %v2379, %v2377
        %v2430 = vpack.c.b16 %v2380, %v2378
        %v2431 = vpack.c.b16 %v2383, %v2381
        %v2432 = vpack.c.b16 %v2384, %v2382
        %v2433 = vpack.c.b16 %v2387, %v2385
        %v2434 = vpack.c.b16 %v2388, %v2386
        %v2435 = vpack.c.b16 %v2391, %v2389
        %v2436 = vpack.c.b16 %v2392, %v2390
        %v2437 = vpack.c.b16 %v2395, %v2393
        %v2438 = vpack.c.b16 %v2396, %v2394
        %v2439 = vpack.c.b16 %v2399, %v2397
        %v2440 = vpack.c.b16 %v2400, %v2398
        %v2441 = vpack.c.b16 %v2403, %v2401
        %v2442 = vpack.c.b16 %v2404, %v2402
        %v2443 = vpack.c.b16 %v2407, %v2405
        %v2444 = vpack.c.b16 %v2408, %v2406
        %v2445 = vpack.c.b16 %v2411, %v2409
        %v2446 = vpack.c.b16 %v2412, %v2410
        %v2447 = vpack.c.b16 %v2415, %v2413
        %v2448 = vpack.c.b16 %v2416, %v2414
        %2481 = vmatprep.subr.bf16.mxu0 %v2418
        %2482 = vmatpush1.bf16.msra.mxu0 %v2417
        %2483 = vmatprep.subr.bf16.mxu0 %v2420
        %2484 = vmatpush1.bf16.msra.mxu0 %v2419
        %2485 = vmatprep.subr.bf16.mxu0 %v2422
        %2486 = vmatpush1.bf16.msra.mxu0 %v2421
        %2487 = vmatprep.subr.bf16.mxu0 %v2424
        %2488 = vmatpush1.bf16.msra.mxu0 %v2423
        %2489 = vmatprep.subr.bf16.mxu0 %v2426
        %2490 = vmatpush1.bf16.msra.mxu0 %v2425
        %2491 = vmatprep.subr.bf16.mxu0 %v2428
        %2492 = vmatpush1.bf16.msra.mxu0 %v2427
        %2493 = vmatprep.subr.bf16.mxu0 %v2430
        %2494 = vmatpush1.bf16.msra.mxu0 %v2429
        %2495 = vmatprep.subr.bf16.mxu0 %v2432
        %2496 = vmatpush1.bf16.msra.mxu0 %v2431
        %2497 = vmatprep.subr.bf16.mxu0 %v2434
        %2498 = vmatpush1.bf16.msra.mxu0 %v2433
        %2499 = vmatprep.subr.bf16.mxu0 %v2436
        %2500 = vmatpush1.bf16.msra.mxu0 %v2435
        %2501 = vmatprep.subr.bf16.mxu0 %v2438
        %2502 = vmatpush1.bf16.msra.mxu0 %v2437
        %2503 = vmatprep.subr.bf16.mxu0 %v2440
        %2504 = vmatpush1.bf16.msra.mxu0 %v2439
        %2505 = vmatprep.subr.bf16.mxu0 %v2442
        %2506 = vmatpush1.bf16.msra.mxu0 %v2441
        %2507 = vmatprep.subr.bf16.mxu0 %v2444
        %2508 = vmatpush1.bf16.msra.mxu0 %v2443
        %2509 = vmatprep.subr.bf16.mxu0 %v2446
        %2510 = vmatpush1.bf16.msra.mxu0 %v2445
        %2511 = vmatprep.subr.bf16.mxu0 %v2448
        %2512 = vmatpush1.bf16.msra.mxu0 %v2447
        %2513 = vmatprep.mubr.bf16.mxu0 %v2276
        %2514 = vmatmul.mubr.bf16.gmra.mrb[0].mxu0 %v2275
        %v2515 = vpop.f32.mrb[0].mxu0
        %v2516 = vadd.f32 %v2314, %v2515
        %v2517 = vpop.f32.mrb[0].mxu0
        %v2518 = vadd.f32 %v2318, %v2517
        %v2519 = vpop.f32.mrb[0].mxu0
        %v2520 = vpop.f32.mrb[0].mxu0
        %2521 = vdwg.mxu0
        %v2522 = vmul.f32 %v2516, 0.088388346
        %v2523 = vmul.f32 %v2518, 0.088388346
        %v2524 = vpack.c.bf16 %v981, %v979
        %v2525 = vpack.c.bf16 %v982, %v980
        %v2526 = vld [vmem:[#allocation16] sm:$0xff]
        %v2527 = vld [vmem:[#allocation16 + $0x8] sm:$0xff]
        %v2528 = vld [vmem:[#allocation16 + $0x10] sm:$0xff]
        %v2529 = vld [vmem:[#allocation16 + $0x18] sm:$0xff]
        %v2530 = vld [vmem:[#allocation16 + $0x20] sm:$0xff]
        %v2531 = vld [vmem:[#allocation16 + $0x28] sm:$0xff]
        %v2532 = vld [vmem:[#allocation16 + $0x30] sm:$0xff]
        %v2533 = vld [vmem:[#allocation16 + $0x38] sm:$0xff]
        %v2534 = vld [vmem:[#allocation16 + $0x40] sm:$0xff]
        %v2535 = vld [vmem:[#allocation16 + $0x48] sm:$0xff]
        %v2536 = vld [vmem:[#allocation16 + $0x50] sm:$0xff]
        %v2537 = vld [vmem:[#allocation16 + $0x58] sm:$0xff]
        %v2538 = vld [vmem:[#allocation16 + $0x60] sm:$0xff]
        %v2539 = vld [vmem:[#allocation16 + $0x68] sm:$0xff]
        %v2540 = vld [vmem:[#allocation16 + $0x70] sm:$0xff]
        %v2541 = vld [vmem:[#allocation16 + $0x78] sm:$0xff]
        %v2542 = vld [vmem:[#allocation16 + $0x80] sm:$0xff]
        %v2543 = vld [vmem:[#allocation16 + $0x88] sm:$0xff]
        %v2544 = vld [vmem:[#allocation16 + $0x90] sm:$0xff]
        %v2545 = vld [vmem:[#allocation16 + $0x98] sm:$0xff]
        %v2546 = vld [vmem:[#allocation16 + $0xa0] sm:$0xff]
        %v2547 = vld [vmem:[#allocation16 + $0xa8] sm:$0xff]
        %v2548 = vld [vmem:[#allocation16 + $0xb0] sm:$0xff]
        %v2549 = vld [vmem:[#allocation16 + $0xb8] sm:$0xff]
        %v2550 = vld [vmem:[#allocation16 + $0xc0] sm:$0xff]
        %v2551 = vld [vmem:[#allocation16 + $0xc8] sm:$0xff]
        %v2552 = vld [vmem:[#allocation16 + $0xd0] sm:$0xff]
        %v2553 = vld [vmem:[#allocation16 + $0xd8] sm:$0xff]
        %v2554 = vld [vmem:[#allocation16 + $0xe0] sm:$0xff]
        %v2555 = vld [vmem:[#allocation16 + $0xe8] sm:$0xff]
        %v2556 = vld [vmem:[#allocation16 + $0xf0] sm:$0xff]
        %v2557 = vld [vmem:[#allocation16 + $0xf8] sm:$0xff]
        %v2558 = vld [vmem:[#allocation16 + $0x100] sm:$0xff]
        %v2559 = vld [vmem:[#allocation16 + $0x108] sm:$0xff]
        %v2560 = vld [vmem:[#allocation16 + $0x110] sm:$0xff]
        %v2561 = vld [vmem:[#allocation16 + $0x118] sm:$0xff]
        %v2562 = vld [vmem:[#allocation16 + $0x120] sm:$0xff]
        %v2563 = vld [vmem:[#allocation16 + $0x128] sm:$0xff]
        %v2564 = vld [vmem:[#allocation16 + $0x130] sm:$0xff]
        %v2565 = vld [vmem:[#allocation16 + $0x138] sm:$0xff]
        %v2566 = vld [vmem:[#allocation16 + $0x140] sm:$0xff]
        %v2567 = vld [vmem:[#allocation16 + $0x148] sm:$0xff]
        %v2568 = vld [vmem:[#allocation16 + $0x150] sm:$0xff]
        %v2569 = vld [vmem:[#allocation16 + $0x158] sm:$0xff]
        %v2570 = vld [vmem:[#allocation16 + $0x160] sm:$0xff]
        %v2571 = vld [vmem:[#allocation16 + $0x168] sm:$0xff]
        %v2572 = vld [vmem:[#allocation16 + $0x170] sm:$0xff]
        %v2573 = vld [vmem:[#allocation16 + $0x178] sm:$0xff]
        %v2574 = vld [vmem:[#allocation16 + $0x180] sm:$0xff]
        %v2575 = vld [vmem:[#allocation16 + $0x188] sm:$0xff]
        %v2576 = vld [vmem:[#allocation16 + $0x190] sm:$0xff]
        %v2577 = vld [vmem:[#allocation16 + $0x198] sm:$0xff]
        %v2578 = vld [vmem:[#allocation16 + $0x1a0] sm:$0xff]
        %v2579 = vld [vmem:[#allocation16 + $0x1a8] sm:$0xff]
        %v2580 = vld [vmem:[#allocation16 + $0x1b0] sm:$0xff]
        %v2581 = vld [vmem:[#allocation16 + $0x1b8] sm:$0xff]
        %v2582 = vld [vmem:[#allocation16 + $0x1c0] sm:$0xff]
        %v2583 = vld [vmem:[#allocation16 + $0x1c8] sm:$0xff]
        %v2584 = vld [vmem:[#allocation16 + $0x1d0] sm:$0xff]
        %v2585 = vld [vmem:[#allocation16 + $0x1d8] sm:$0xff]
        %v2586 = vld [vmem:[#allocation16 + $0x1e0] sm:$0xff]
        %v2587 = vld [vmem:[#allocation16 + $0x1e8] sm:$0xff]
        %v2588 = vld [vmem:[#allocation16 + $0x1f0] sm:$0xff]
        %v2589 = vld [vmem:[#allocation16 + $0x1f8] sm:$0xff]
        %v2590 = vld [vmem:[%s15] sm:$0xf]
        %v2592 = vlaneseq
        %v2593 = vshrl.u32 %v2592, 7
        %v2594 = vsub.s32 0, %v2593
        %v2595 = vrot.slane %v2590, %v2594
        %v2596 = vlaneseq
        %v2597 = vshrl.u32 %v2596, 7
        %v2598 = vsub.s32 1, %v2597
        %v2599 = vrot.slane %v2590, %v2598
        %v2600 = vlaneseq
        %v2601 = vshrl.u32 %v2600, 7
        %v2602 = vsub.s32 2, %v2601
        %v2603 = vrot.slane %v2590, %v2602
        %v2604 = vlaneseq
        %v2605 = vshrl.u32 %v2604, 7
        %v2606 = vsub.s32 3, %v2605
        %v2607 = vrot.slane %v2590, %v2606
        %v2676 = vunpack.c.l.b16 %v2526
        %v2677 = vunpack.c.h.b16 %v2526
        %v2678 = vunpack.c.l.b16 %v2527
        %v2679 = vunpack.c.h.b16 %v2527
        %v2680 = vunpack.c.l.b16 %v2528
        %v2681 = vunpack.c.h.b16 %v2528
        %v2682 = vunpack.c.l.b16 %v2529
        %v2683 = vunpack.c.h.b16 %v2529
        %v2684 = vunpack.c.l.b16 %v2530
        %v2685 = vunpack.c.h.b16 %v2530
        %v2686 = vunpack.c.l.b16 %v2531
        %v2687 = vunpack.c.h.b16 %v2531
        %v2688 = vunpack.c.l.b16 %v2532
        %v2689 = vunpack.c.h.b16 %v2532
        %v2690 = vunpack.c.l.b16 %v2533
        %v2691 = vunpack.c.h.b16 %v2533
        %v2692 = vunpack.c.l.b16 %v2534
        %v2693 = vunpack.c.h.b16 %v2534
        %v2694 = vunpack.c.l.b16 %v2535
        %v2695 = vunpack.c.h.b16 %v2535
        %v2696 = vunpack.c.l.b16 %v2536
        %v2697 = vunpack.c.h.b16 %v2536
        %v2698 = vunpack.c.l.b16 %v2537
        %v2699 = vunpack.c.h.b16 %v2537
        %v2700 = vunpack.c.l.b16 %v2538
        %v2701 = vunpack.c.h.b16 %v2538
        %v2702 = vunpack.c.l.b16 %v2539
        %v2703 = vunpack.c.h.b16 %v2539
        %v2704 = vunpack.c.l.b16 %v2540
        %v2705 = vunpack.c.h.b16 %v2540
        %v2706 = vunpack.c.l.b16 %v2541
        %v2707 = vunpack.c.h.b16 %v2541
        %v2708 = vunpack.c.l.b16 %v2542
        %v2709 = vunpack.c.h.b16 %v2542
        %v2710 = vunpack.c.l.b16 %v2543
        %v2711 = vunpack.c.h.b16 %v2543
        %v2712 = vunpack.c.l.b16 %v2544
        %v2713 = vunpack.c.h.b16 %v2544
        %v2714 = vunpack.c.l.b16 %v2545
        %v2715 = vunpack.c.h.b16 %v2545
        %v2716 = vunpack.c.l.b16 %v2546
        %v2717 = vunpack.c.h.b16 %v2546
        %v2718 = vunpack.c.l.b16 %v2547
        %v2719 = vunpack.c.h.b16 %v2547
        %v2720 = vunpack.c.l.b16 %v2548
        %v2721 = vunpack.c.h.b16 %v2548
        %v2722 = vunpack.c.l.b16 %v2549
        %v2723 = vunpack.c.h.b16 %v2549
        %v2724 = vunpack.c.l.b16 %v2550
        %v2725 = vunpack.c.h.b16 %v2550
        %v2726 = vunpack.c.l.b16 %v2551
        %v2727 = vunpack.c.h.b16 %v2551
        %v2728 = vunpack.c.l.b16 %v2552
        %v2729 = vunpack.c.h.b16 %v2552
        %v2730 = vunpack.c.l.b16 %v2553
        %v2731 = vunpack.c.h.b16 %v2553
        %v2732 = vunpack.c.l.b16 %v2554
        %v2733 = vunpack.c.h.b16 %v2554
        %v2734 = vunpack.c.l.b16 %v2555
        %v2735 = vunpack.c.h.b16 %v2555
        %v2736 = vunpack.c.l.b16 %v2556
        %v2737 = vunpack.c.h.b16 %v2556
        %v2738 = vunpack.c.l.b16 %v2557
        %v2739 = vunpack.c.h.b16 %v2557
        %v2740 = vunpack.c.l.b16 %v2558
        %v2741 = vunpack.c.h.b16 %v2558
        %v2742 = vunpack.c.l.b16 %v2559
        %v2743 = vunpack.c.h.b16 %v2559
        %v2744 = vunpack.c.l.b16 %v2560
        %v2745 = vunpack.c.h.b16 %v2560
        %v2746 = vunpack.c.l.b16 %v2561
        %v2747 = vunpack.c.h.b16 %v2561
        %v2748 = vunpack.c.l.b16 %v2562
        %v2749 = vunpack.c.h.b16 %v2562
        %v2750 = vunpack.c.l.b16 %v2563
        %v2751 = vunpack.c.h.b16 %v2563
        %v2752 = vunpack.c.l.b16 %v2564
        %v2753 = vunpack.c.h.b16 %v2564
        %v2754 = vunpack.c.l.b16 %v2565
        %v2755 = vunpack.c.h.b16 %v2565
        %v2756 = vunpack.c.l.b16 %v2566
        %v2757 = vunpack.c.h.b16 %v2566
        %v2758 = vunpack.c.l.b16 %v2567
        %v2759 = vunpack.c.h.b16 %v2567
        %v2760 = vunpack.c.l.b16 %v2568
        %v2761 = vunpack.c.h.b16 %v2568
        %v2762 = vunpack.c.l.b16 %v2569
        %v2763 = vunpack.c.h.b16 %v2569
        %v2764 = vunpack.c.l.b16 %v2570
        %v2765 = vunpack.c.h.b16 %v2570
        %v2766 = vunpack.c.l.b16 %v2571
        %v2767 = vunpack.c.h.b16 %v2571
        %v2768 = vunpack.c.l.b16 %v2572
        %v2769 = vunpack.c.h.b16 %v2572
        %v2770 = vunpack.c.l.b16 %v2573
        %v2771 = vunpack.c.h.b16 %v2573
        %v2772 = vunpack.c.l.b16 %v2574
        %v2773 = vunpack.c.h.b16 %v2574
        %v2774 = vunpack.c.l.b16 %v2575
        %v2775 = vunpack.c.h.b16 %v2575
        %v2776 = vunpack.c.l.b16 %v2576
        %v2777 = vunpack.c.h.b16 %v2576
        %v2778 = vunpack.c.l.b16 %v2577
        %v2779 = vunpack.c.h.b16 %v2577
        %v2780 = vunpack.c.l.b16 %v2578
        %v2781 = vunpack.c.h.b16 %v2578
        %v2782 = vunpack.c.l.b16 %v2579
        %v2783 = vunpack.c.h.b16 %v2579
        %v2784 = vunpack.c.l.b16 %v2580
        %v2785 = vunpack.c.h.b16 %v2580
        %v2786 = vunpack.c.l.b16 %v2581
        %v2787 = vunpack.c.h.b16 %v2581
        %v2788 = vunpack.c.l.b16 %v2582
        %v2789 = vunpack.c.h.b16 %v2582
        %v2790 = vunpack.c.l.b16 %v2583
        %v2791 = vunpack.c.h.b16 %v2583
        %v2792 = vunpack.c.l.b16 %v2584
        %v2793 = vunpack.c.h.b16 %v2584
        %v2794 = vunpack.c.l.b16 %v2585
        %v2795 = vunpack.c.h.b16 %v2585
        %v2796 = vunpack.c.l.b16 %v2586
        %v2797 = vunpack.c.h.b16 %v2586
        %v2798 = vunpack.c.l.b16 %v2587
        %v2799 = vunpack.c.h.b16 %v2587
        %v2800 = vunpack.c.l.b16 %v2588
        %v2801 = vunpack.c.h.b16 %v2588
        %v2802 = vunpack.c.l.b16 %v2589
        %v2803 = vunpack.c.h.b16 %v2589
        %v2804 = vpack.c.b16 %v2680, %v2676
        %v2805 = vpack.c.b16 %v2681, %v2677
        %v2806 = vpack.c.b16 %v2682, %v2678
        %v2807 = vpack.c.b16 %v2683, %v2679
        %v2808 = vpack.c.b16 %v2688, %v2684
        %v2809 = vpack.c.b16 %v2689, %v2685
        %v2810 = vpack.c.b16 %v2690, %v2686
        %v2811 = vpack.c.b16 %v2691, %v2687
        %v2812 = vpack.c.b16 %v2696, %v2692
        %v2813 = vpack.c.b16 %v2697, %v2693
        %v2814 = vpack.c.b16 %v2698, %v2694
        %v2815 = vpack.c.b16 %v2699, %v2695
        %v2816 = vpack.c.b16 %v2704, %v2700
        %v2817 = vpack.c.b16 %v2705, %v2701
        %v2818 = vpack.c.b16 %v2706, %v2702
        %v2819 = vpack.c.b16 %v2707, %v2703
        %v2820 = vpack.c.b16 %v2712, %v2708
        %v2821 = vpack.c.b16 %v2713, %v2709
        %v2822 = vpack.c.b16 %v2714, %v2710
        %v2823 = vpack.c.b16 %v2715, %v2711
        %v2824 = vpack.c.b16 %v2720, %v2716
        %v2825 = vpack.c.b16 %v2721, %v2717
        %v2826 = vpack.c.b16 %v2722, %v2718
        %v2827 = vpack.c.b16 %v2723, %v2719
        %v2828 = vpack.c.b16 %v2728, %v2724
        %v2829 = vpack.c.b16 %v2729, %v2725
        %v2830 = vpack.c.b16 %v2730, %v2726
        %v2831 = vpack.c.b16 %v2731, %v2727
        %v2832 = vpack.c.b16 %v2736, %v2732
        %v2833 = vpack.c.b16 %v2737, %v2733
        %v2834 = vpack.c.b16 %v2738, %v2734
        %v2835 = vpack.c.b16 %v2739, %v2735
        %v2836 = vpack.c.b16 %v2744, %v2740
        %v2837 = vpack.c.b16 %v2745, %v2741
        %v2838 = vpack.c.b16 %v2746, %v2742
        %v2839 = vpack.c.b16 %v2747, %v2743
        %v2840 = vpack.c.b16 %v2752, %v2748
        %v2841 = vpack.c.b16 %v2753, %v2749
        %v2842 = vpack.c.b16 %v2754, %v2750
        %v2843 = vpack.c.b16 %v2755, %v2751
        %v2844 = vpack.c.b16 %v2760, %v2756
        %v2845 = vpack.c.b16 %v2761, %v2757
        %v2846 = vpack.c.b16 %v2762, %v2758
        %v2847 = vpack.c.b16 %v2763, %v2759
        %v2848 = vpack.c.b16 %v2768, %v2764
        %v2849 = vpack.c.b16 %v2769, %v2765
        %v2850 = vpack.c.b16 %v2770, %v2766
        %v2851 = vpack.c.b16 %v2771, %v2767
        %v2852 = vpack.c.b16 %v2776, %v2772
        %v2853 = vpack.c.b16 %v2777, %v2773
        %v2854 = vpack.c.b16 %v2778, %v2774
        %v2855 = vpack.c.b16 %v2779, %v2775
        %v2856 = vpack.c.b16 %v2784, %v2780
        %v2857 = vpack.c.b16 %v2785, %v2781
        %v2858 = vpack.c.b16 %v2786, %v2782
        %v2859 = vpack.c.b16 %v2787, %v2783
        %v2860 = vpack.c.b16 %v2792, %v2788
        %v2861 = vpack.c.b16 %v2793, %v2789
        %v2862 = vpack.c.b16 %v2794, %v2790
        %v2863 = vpack.c.b16 %v2795, %v2791
        %v2864 = vpack.c.b16 %v2800, %v2796
        %v2865 = vpack.c.b16 %v2801, %v2797
        %v2866 = vpack.c.b16 %v2802, %v2798
        %v2867 = vpack.c.b16 %v2803, %v2799
        %2932 = vmatprep.subr.bf16.mxu0 %v2805
        %2933 = vmatpush1.bf16.msra.mxu0 %v2804
        %2934 = vmatprep.subr.bf16.mxu0 %v2809
        %2935 = vmatpush1.bf16.msra.mxu0 %v2808
        %2936 = vmatprep.subr.bf16.mxu0 %v2813
        %2937 = vmatpush1.bf16.msra.mxu0 %v2812
        %2938 = vmatprep.subr.bf16.mxu0 %v2817
        %2939 = vmatpush1.bf16.msra.mxu0 %v2816
        %2940 = vmatprep.subr.bf16.mxu0 %v2821
        %2941 = vmatpush1.bf16.msra.mxu0 %v2820
        %2942 = vmatprep.subr.bf16.mxu0 %v2825
        %2943 = vmatpush1.bf16.msra.mxu0 %v2824
        %2944 = vmatprep.subr.bf16.mxu0 %v2829
        %2945 = vmatpush1.bf16.msra.mxu0 %v2828
        %2946 = vmatprep.subr.bf16.mxu0 %v2833
        %2947 = vmatpush1.bf16.msra.mxu0 %v2832
        %2948 = vmatprep.subr.bf16.mxu0 %v2837
        %2949 = vmatpush1.bf16.msra.mxu0 %v2836
        %2950 = vmatprep.subr.bf16.mxu0 %v2841
        %2951 = vmatpush1.bf16.msra.mxu0 %v2840
        %2952 = vmatprep.subr.bf16.mxu0 %v2845
        %2953 = vmatpush1.bf16.msra.mxu0 %v2844
        %2954 = vmatprep.subr.bf16.mxu0 %v2849
        %2955 = vmatpush1.bf16.msra.mxu0 %v2848
        %2956 = vmatprep.subr.bf16.mxu0 %v2853
        %2957 = vmatpush1.bf16.msra.mxu0 %v2852
        %2958 = vmatprep.subr.bf16.mxu0 %v2857
        %2959 = vmatpush1.bf16.msra.mxu0 %v2856
        %2960 = vmatprep.subr.bf16.mxu0 %v2861
        %2961 = vmatpush1.bf16.msra.mxu0 %v2860
        %2962 = vmatprep.subr.bf16.mxu0 %v2865
        %2963 = vmatpush1.bf16.msra.mxu0 %v2864
        %2964 = vmatprep.mubr.bf16.mxu0 %v2525
        %2965 = vmatmul.mubr.bf16.gmra.mrb[0].mxu0 %v2524
        %v2966 = vpop.f32.mrb[0].mxu0
        %v2967 = vadd.f32 %v2595, %v2966
        %v2968 = vpop.f32.mrb[0].mxu0
        %v2969 = vadd.f32 %v2599, %v2968
        %v2970 = vpop.f32.mrb[0].mxu0
        %v2971 = vadd.f32 %v2595, %v2970
        %v2972 = vpop.f32.mrb[0].mxu0
        %v2973 = vadd.f32 %v2599, %v2972
        %2974 = vdwg.mxu0
        %2975 = vmatprep.subr.bf16.mxu0 %v2807
        %2976 = vmatpush1.bf16.msra.mxu0 %v2806
        %2977 = vmatprep.subr.bf16.mxu0 %v2811
        %2978 = vmatpush1.bf16.msra.mxu0 %v2810
        %2979 = vmatprep.subr.bf16.mxu0 %v2815
        %2980 = vmatpush1.bf16.msra.mxu0 %v2814
        %2981 = vmatprep.subr.bf16.mxu0 %v2819
        %2982 = vmatpush1.bf16.msra.mxu0 %v2818
        %2983 = vmatprep.subr.bf16.mxu0 %v2823
        %2984 = vmatpush1.bf16.msra.mxu0 %v2822
        %2985 = vmatprep.subr.bf16.mxu0 %v2827
        %2986 = vmatpush1.bf16.msra.mxu0 %v2826
        %2987 = vmatprep.subr.bf16.mxu0 %v2831
        %2988 = vmatpush1.bf16.msra.mxu0 %v2830
        %2989 = vmatprep.subr.bf16.mxu0 %v2835
        %2990 = vmatpush1.bf16.msra.mxu0 %v2834
        %2991 = vmatprep.subr.bf16.mxu0 %v2839
        %2992 = vmatpush1.bf16.msra.mxu0 %v2838
        %2993 = vmatprep.subr.bf16.mxu0 %v2843
        %2994 = vmatpush1.bf16.msra.mxu0 %v2842
        %2995 = vmatprep.subr.bf16.mxu0 %v2847
        %2996 = vmatpush1.bf16.msra.mxu0 %v2846
        %2997 = vmatprep.subr.bf16.mxu0 %v2851
        %2998 = vmatpush1.bf16.msra.mxu0 %v2850
        %2999 = vmatprep.subr.bf16.mxu0 %v2855
        %3000 = vmatpush1.bf16.msra.mxu0 %v2854
        %3001 = vmatprep.subr.bf16.mxu0 %v2859
        %3002 = vmatpush1.bf16.msra.mxu0 %v2858
        %3003 = vmatprep.subr.bf16.mxu0 %v2863
        %3004 = vmatpush1.bf16.msra.mxu0 %v2862
        %3005 = vmatprep.subr.bf16.mxu0 %v2867
        %3006 = vmatpush1.bf16.msra.mxu0 %v2866
        %3007 = vmatprep.mubr.bf16.mxu0 %v2525
        %3008 = vmatmul.mubr.bf16.gmra.mrb[0].mxu0 %v2524
        %v3009 = vpop.f32.mrb[0].mxu0
        %v3010 = vadd.f32 %v2603, %v3009
        %v3011 = vpop.f32.mrb[0].mxu0
        %v3012 = vadd.f32 %v2607, %v3011
        %v3013 = vpop.f32.mrb[0].mxu0
        %v3014 = vadd.f32 %v2603, %v3013
        %v3015 = vpop.f32.mrb[0].mxu0
        %v3016 = vadd.f32 %v2607, %v3015
        %3017 = vdwg.mxu0
        %v3018 = vld [vmem:[%s865] sm:$0x1]
        %v3019 = vld [vmem:[#allocation17] sm:$0xff]
        %v3020 = vld [vmem:[#allocation17 + $0x8] sm:$0xff]
        %v3021 = vld [vmem:[#allocation17 + $0x10] sm:$0xff]
        %v3022 = vld [vmem:[#allocation17 + $0x18] sm:$0xff]
        %v3023 = vld [vmem:[#allocation17 + $0x20] sm:$0xff]
        %v3024 = vld [vmem:[#allocation17 + $0x28] sm:$0xff]
        %v3025 = vld [vmem:[#allocation17 + $0x30] sm:$0xff]
        %v3026 = vld [vmem:[#allocation17 + $0x38] sm:$0xff]
        %v3027 = vld [vmem:[#allocation17 + $0x40] sm:$0xff]
        %v3028 = vld [vmem:[#allocation17 + $0x48] sm:$0xff]
        %v3029 = vld [vmem:[#allocation17 + $0x50] sm:$0xff]
        %v3030 = vld [vmem:[#allocation17 + $0x58] sm:$0xff]
        %v3031 = vld [vmem:[#allocation17 + $0x60] sm:$0xff]
        %v3032 = vld [vmem:[#allocation17 + $0x68] sm:$0xff]
        %v3033 = vld [vmem:[#allocation17 + $0x70] sm:$0xff]
        %v3034 = vld [vmem:[#allocation17 + $0x78] sm:$0xff]
        %v3035 = vld [vmem:[#allocation17 + $0x80] sm:$0xff]
        %v3036 = vld [vmem:[#allocation17 + $0x88] sm:$0xff]
        %v3037 = vld [vmem:[#allocation17 + $0x90] sm:$0xff]
        %v3038 = vld [vmem:[#allocation17 + $0x98] sm:$0xff]
        %v3039 = vld [vmem:[#allocation17 + $0xa0] sm:$0xff]
        %v3040 = vld [vmem:[#allocation17 + $0xa8] sm:$0xff]
        %v3041 = vld [vmem:[#allocation17 + $0xb0] sm:$0xff]
        %v3042 = vld [vmem:[#allocation17 + $0xb8] sm:$0xff]
        %v3043 = vld [vmem:[#allocation17 + $0xc0] sm:$0xff]
        %v3044 = vld [vmem:[#allocation17 + $0xc8] sm:$0xff]
        %v3045 = vld [vmem:[#allocation17 + $0xd0] sm:$0xff]
        %v3046 = vld [vmem:[#allocation17 + $0xd8] sm:$0xff]
        %v3047 = vld [vmem:[#allocation17 + $0xe0] sm:$0xff]
        %v3048 = vld [vmem:[#allocation17 + $0xe8] sm:$0xff]
        %v3049 = vld [vmem:[#allocation17 + $0xf0] sm:$0xff]
        %v3050 = vld [vmem:[#allocation17 + $0xf8] sm:$0xff]
        %v3051 = vld [vmem:[%s17] sm:$0x3]
        %v3052 = vpack.c.bf16 %v2522, %v2522
        %v3053 = vpack.c.bf16 %v2523, %v2523
        %v3054 = vpack.c.bf16 %v2971, %v2967
        %v3055 = vpack.c.bf16 %v2973, %v2969
        %v3056 = vpack.c.bf16 %v3014, %v3010
        %v3057 = vpack.c.bf16 %v3016, %v3012
        %v3059 = vlaneseq
        %v3060 = vshrl.u32 %v3059, 7
        %v3061 = vsub.s32 0, %v3060
        %v3062 = vrot.slane %v3018, %v3061
        %3064 = vmatprep.subr.bf16.mxu0 0
        %3065 = vmatpush1.bf16.xpose.msra.mxu0 %v3054
        %3066 = vmatprep.subr.bf16.mxu0 0
        %3067 = vmatpush1.bf16.xpose.msra.mxu0 0
        %3068 = vmatprep.subr.bf16.mxu0 0
        %3069 = vmatpush1.bf16.xpose.msra.mxu0 0
        %3070 = vmatprep.subr.bf16.mxu0 0
        %3071 = vmatpush1.bf16.xpose.msra.mxu0 0
        %3072 = vmatprep.subr.bf16.mxu0 0
        %3073 = vmatpush1.bf16.xpose.msra.mxu0 0
        %3074 = vmatprep.subr.bf16.mxu0 0
        %3075 = vmatpush1.bf16.xpose.msra.mxu0 0
        %3076 = vmatprep.subr.bf16.mxu0 0
        %3077 = vmatpush1.bf16.xpose.msra.mxu0 0
        %3078 = vmatprep.subr.bf16.mxu0 0
        %3079 = vmatpush1.bf16.xpose.msra.mxu0 0
        %3080 = vmatprep.subr.bf16.mxu0 0
        %3081 = vmatpush1.bf16.xpose.msra.mxu0 0
        %3082 = vmatprep.subr.bf16.mxu0 0
        %3083 = vmatpush1.bf16.xpose.msra.mxu0 0
        %3084 = vmatprep.subr.bf16.mxu0 0
        %3085 = vmatpush1.bf16.xpose.msra.mxu0 0
        %3086 = vmatprep.subr.bf16.mxu0 0
        %3087 = vmatpush1.bf16.xpose.msra.mxu0 0
        %3088 = vmatprep.subr.bf16.mxu0 0
        %3089 = vmatpush1.bf16.xpose.msra.mxu0 0
        %3090 = vmatprep.subr.bf16.mxu0 0
        %3091 = vmatpush1.bf16.xpose.msra.mxu0 0
        %3092 = vmatprep.subr.bf16.mxu0 0
        %3093 = vmatpush1.bf16.xpose.msra.mxu0 0
        %3094 = vmatprep.subr.bf16.mxu0 0
        %3095 = vmatpush1.bf16.xpose.msra.mxu0 0
        %3096 = vmatprep.mubr.bf16.mxu0 0
        %3097 = vmatmul.mubr.bf16.gmra.mrb[0].mxu0 %v3052
        %v3098 = vpop.f32.mrb[0].mxu0
        %v3099 = vadd.f32 %v3062, %v3098
        %v3100 = vpop.f32.mrb[0].mxu0
        %v3101 = vpop.f32.mrb[0].mxu0
        %v3102 = vpop.f32.mrb[0].mxu0
        %3103 = vdwg.mxu0
        %vm3104 = vcmask 130048
        %v3105 = vsel %vm3104, %v3099, -inf
        %3106 = vmax.xlane.f32.xlu0 %v3105
        %v3107 = vpop.xlane.xlu0 %3106
        %v3108 = vsub.f32 %v3099, %v3107
        %v3109 = vmul.f32 %v3108, 1.442695
        %v3110 = vpow.pop %v3109
        %v3111 = vsel %vm3104, %v3110, 0.0
        %3112 = vadd.xlane.f32.xlu0 %v3111
        %v3113 = vpop.xlane.xlu0 %3112
        %v3114 = vrcp.pop %v3113
        %v3115 = vmul.f32 %v3110, %v3114
        %v3116 = vpack.c.bf16 %v3115, %v3115
        %v3118 = vsel %vm3104, %v3116, 0
        %3120 = vmatprep.subr.bf16.mxu0 0
        %3121 = vmatpush1.bf16.msra.mxu0 %v3056
        %3122 = vmatprep.subr.bf16.mxu0 0
        %3123 = vmatpush1.bf16.msra.mxu0 0
        %3124 = vmatprep.subr.bf16.mxu0 0
        %3125 = vmatpush1.bf16.msra.mxu0 0
        %3126 = vmatprep.subr.bf16.mxu0 0
        %3127 = vmatpush1.bf16.msra.mxu0 0
        %3128 = vmatprep.subr.bf16.mxu0 0
        %3129 = vmatpush1.bf16.msra.mxu0 0
        %3130 = vmatprep.subr.bf16.mxu0 0
        %3131 = vmatpush1.bf16.msra.mxu0 0
        %3132 = vmatprep.subr.bf16.mxu0 0
        %3133 = vmatpush1.bf16.msra.mxu0 0
        %3134 = vmatprep.subr.bf16.mxu0 0
        %3135 = vmatpush1.bf16.msra.mxu0 0
        %3136 = vmatprep.subr.bf16.mxu0 0
        %3137 = vmatpush1.bf16.msra.mxu0 0
        %3138 = vmatprep.subr.bf16.mxu0 0
        %3139 = vmatpush1.bf16.msra.mxu0 0
        %3140 = vmatprep.subr.bf16.mxu0 0
        %3141 = vmatpush1.bf16.msra.mxu0 0
        %3142 = vmatprep.subr.bf16.mxu0 0
        %3143 = vmatpush1.bf16.msra.mxu0 0
        %3144 = vmatprep.subr.bf16.mxu0 0
        %3145 = vmatpush1.bf16.msra.mxu0 0
        %3146 = vmatprep.subr.bf16.mxu0 0
        %3147 = vmatpush1.bf16.msra.mxu0 0
        %3148 = vmatprep.subr.bf16.mxu0 0
        %3149 = vmatpush1.bf16.msra.mxu0 0
        %3150 = vmatprep.subr.bf16.mxu0 0
        %3151 = vmatpush1.bf16.msra.mxu0 0
        %3152 = vmatprep.mubr.bf16.mxu0 0
        %3153 = vmatmul.mubr.bf16.gmra.mrb[0].mxu0 %v3118
        %v3154 = vpop.f32.mrb[0].mxu0
        %v3155 = vadd.f32 0.0, %v3154
        %v3156 = vpop.f32.mrb[0].mxu0
        %v3157 = vpop.f32.mrb[0].mxu0
        %v3158 = vpop.f32.mrb[0].mxu0
        %3159 = vdwg.mxu0
        %3160 = vmatprep.subr.bf16.mxu0 0
        %3161 = vmatpush1.bf16.xpose.msra.mxu0 %v3055
        %3162 = vmatprep.subr.bf16.mxu0 0
        %3163 = vmatpush1.bf16.xpose.msra.mxu0 0
        %3164 = vmatprep.subr.bf16.mxu0 0
        %3165 = vmatpush1.bf16.xpose.msra.mxu0 0
        %3166 = vmatprep.subr.bf16.mxu0 0
        %3167 = vmatpush1.bf16.xpose.msra.mxu0 0
        %3168 = vmatprep.subr.bf16.mxu0 0
        %3169 = vmatpush1.bf16.xpose.msra.mxu0 0
        %3170 = vmatprep.subr.bf16.mxu0 0
        %3171 = vmatpush1.bf16.xpose.msra.mxu0 0
        %3172 = vmatprep.subr.bf16.mxu0 0
        %3173 = vmatpush1.bf16.xpose.msra.mxu0 0
        %3174 = vmatprep.subr.bf16.mxu0 0
        %3175 = vmatpush1.bf16.xpose.msra.mxu0 0
        %3176 = vmatprep.subr.bf16.mxu0 0
        %3177 = vmatpush1.bf16.xpose.msra.mxu0 0
        %3178 = vmatprep.subr.bf16.mxu0 0
        %3179 = vmatpush1.bf16.xpose.msra.mxu0 0
        %3180 = vmatprep.subr.bf16.mxu0 0
        %3181 = vmatpush1.bf16.xpose.msra.mxu0 0
        %3182 = vmatprep.subr.bf16.mxu0 0
        %3183 = vmatpush1.bf16.xpose.msra.mxu0 0
        %3184 = vmatprep.subr.bf16.mxu0 0
        %3185 = vmatpush1.bf16.xpose.msra.mxu0 0
        %3186 = vmatprep.subr.bf16.mxu0 0
        %3187 = vmatpush1.bf16.xpose.msra.mxu0 0
        %3188 = vmatprep.subr.bf16.mxu0 0
        %3189 = vmatpush1.bf16.xpose.msra.mxu0 0
        %3190 = vmatprep.subr.bf16.mxu0 0
        %3191 = vmatpush1.bf16.xpose.msra.mxu0 0
        %3192 = vmatprep.mubr.bf16.mxu0 0
        %3193 = vmatmul.mubr.bf16.gmra.mrb[0].mxu0 %v3053
        %v3194 = vpop.f32.mrb[0].mxu0
        %v3195 = vadd.f32 %v3062, %v3194
        %v3196 = vpop.f32.mrb[0].mxu0
        %v3197 = vpop.f32.mrb[0].mxu0
        %v3198 = vpop.f32.mrb[0].mxu0
        %3199 = vdwg.mxu0
        %v3200 = vsel %vm3104, %v3195, -inf
        %3201 = vmax.xlane.f32.xlu0 %v3200
        %v3202 = vpop.xlane.xlu0 %3201
        %v3203 = vsub.f32 %v3195, %v3202
        %v3204 = vmul.f32 %v3203, 1.442695
        %v3205 = vpow.pop %v3204
        %v3206 = vsel %vm3104, %v3205, 0.0
        %3207 = vadd.xlane.f32.xlu0 %v3206
        %v3208 = vpop.xlane.xlu0 %3207
        %v3209 = vrcp.pop %v3208
        %v3210 = vmul.f32 %v3205, %v3209
        %v3211 = vpack.c.bf16 %v3210, %v3210
        %v3213 = vsel %vm3104, %v3211, 0
        %3215 = vmatprep.subr.bf16.mxu0 0
        %3216 = vmatpush1.bf16.msra.mxu0 %v3057
        %3217 = vmatprep.subr.bf16.mxu0 0
        %3218 = vmatpush1.bf16.msra.mxu0 0
        %3219 = vmatprep.subr.bf16.mxu0 0
        %3220 = vmatpush1.bf16.msra.mxu0 0
        %3221 = vmatprep.subr.bf16.mxu0 0
        %3222 = vmatpush1.bf16.msra.mxu0 0
        %3223 = vmatprep.subr.bf16.mxu0 0
        %3224 = vmatpush1.bf16.msra.mxu0 0
        %3225 = vmatprep.subr.bf16.mxu0 0
        %3226 = vmatpush1.bf16.msra.mxu0 0
        %3227 = vmatprep.subr.bf16.mxu0 0
        %3228 = vmatpush1.bf16.msra.mxu0 0
        %3229 = vmatprep.subr.bf16.mxu0 0
        %3230 = vmatpush1.bf16.msra.mxu0 0
        %3231 = vmatprep.subr.bf16.mxu0 0
        %3232 = vmatpush1.bf16.msra.mxu0 0
        %3233 = vmatprep.subr.bf16.mxu0 0
        %3234 = vmatpush1.bf16.msra.mxu0 0
        %3235 = vmatprep.subr.bf16.mxu0 0
        %3236 = vmatpush1.bf16.msra.mxu0 0
        %3237 = vmatprep.subr.bf16.mxu0 0
        %3238 = vmatpush1.bf16.msra.mxu0 0
        %3239 = vmatprep.subr.bf16.mxu0 0
        %3240 = vmatpush1.bf16.msra.mxu0 0
        %3241 = vmatprep.subr.bf16.mxu0 0
        %3242 = vmatpush1.bf16.msra.mxu0 0
        %3243 = vmatprep.subr.bf16.mxu0 0
        %3244 = vmatpush1.bf16.msra.mxu0 0
        %3245 = vmatprep.subr.bf16.mxu0 0
        %3246 = vmatpush1.bf16.msra.mxu0 0
        %3247 = vmatprep.mubr.bf16.mxu0 0
        %3248 = vmatmul.mubr.bf16.gmra.mrb[0].mxu0 %v3213
        %v3249 = vpop.f32.mrb[0].mxu0
        %v3250 = vadd.f32 0.0, %v3249
        %v3251 = vpop.f32.mrb[0].mxu0
        %v3252 = vpop.f32.mrb[0].mxu0
        %v3253 = vpop.f32.mrb[0].mxu0
        %3254 = vdwg.mxu0
        %v3255 = vpack.c.bf16 %v3155, %v3155
        %v3256 = vpack.c.bf16 %v3250, %v3250
        %v3258 = vlaneseq
        %v3259 = vshrl.u32 %v3258, 7
        %v3260 = vsub.s32 0, %v3259
        %v3261 = vrot.slane %v3051, %v3260
        %v3262 = vlaneseq
        %v3263 = vshrl.u32 %v3262, 7
        %v3264 = vsub.s32 1, %v3263
        %v3265 = vrot.slane %v3051, %v3264
        %v3300 = vunpack.c.l.b16 %v3019
        %v3301 = vunpack.c.h.b16 %v3019
        %v3302 = vunpack.c.l.b16 %v3020
        %v3303 = vunpack.c.h.b16 %v3020
        %v3304 = vunpack.c.l.b16 %v3021
        %v3305 = vunpack.c.h.b16 %v3021
        %v3306 = vunpack.c.l.b16 %v3022
        %v3307 = vunpack.c.h.b16 %v3022
        %v3308 = vunpack.c.l.b16 %v3023
        %v3309 = vunpack.c.h.b16 %v3023
        %v3310 = vunpack.c.l.b16 %v3024
        %v3311 = vunpack.c.h.b16 %v3024
        %v3312 = vunpack.c.l.b16 %v3025
        %v3313 = vunpack.c.h.b16 %v3025
        %v3314 = vunpack.c.l.b16 %v3026
        %v3315 = vunpack.c.h.b16 %v3026
        %v3316 = vunpack.c.l.b16 %v3027
        %v3317 = vunpack.c.h.b16 %v3027
        %v3318 = vunpack.c.l.b16 %v3028
        %v3319 = vunpack.c.h.b16 %v3028
        %v3320 = vunpack.c.l.b16 %v3029
        %v3321 = vunpack.c.h.b16 %v3029
        %v3322 = vunpack.c.l.b16 %v3030
        %v3323 = vunpack.c.h.b16 %v3030
        %v3324 = vunpack.c.l.b16 %v3031
        %v3325 = vunpack.c.h.b16 %v3031
        %v3326 = vunpack.c.l.b16 %v3032
        %v3327 = vunpack.c.h.b16 %v3032
        %v3328 = vunpack.c.l.b16 %v3033
        %v3329 = vunpack.c.h.b16 %v3033
        %v3330 = vunpack.c.l.b16 %v3034
        %v3331 = vunpack.c.h.b16 %v3034
        %v3332 = vunpack.c.l.b16 %v3035
        %v3333 = vunpack.c.h.b16 %v3035
        %v3334 = vunpack.c.l.b16 %v3036
        %v3335 = vunpack.c.h.b16 %v3036
        %v3336 = vunpack.c.l.b16 %v3037
        %v3337 = vunpack.c.h.b16 %v3037
        %v3338 = vunpack.c.l.b16 %v3038
        %v3339 = vunpack.c.h.b16 %v3038
        %v3340 = vunpack.c.l.b16 %v3039
        %v3341 = vunpack.c.h.b16 %v3039
        %v3342 = vunpack.c.l.b16 %v3040
        %v3343 = vunpack.c.h.b16 %v3040
        %v3344 = vunpack.c.l.b16 %v3041
        %v3345 = vunpack.c.h.b16 %v3041
        %v3346 = vunpack.c.l.b16 %v3042
        %v3347 = vunpack.c.h.b16 %v3042
        %v3348 = vunpack.c.l.b16 %v3043
        %v3349 = vunpack.c.h.b16 %v3043
        %v3350 = vunpack.c.l.b16 %v3044
        %v3351 = vunpack.c.h.b16 %v3044
        %v3352 = vunpack.c.l.b16 %v3045
        %v3353 = vunpack.c.h.b16 %v3045
        %v3354 = vunpack.c.l.b16 %v3046
        %v3355 = vunpack.c.h.b16 %v3046
        %v3356 = vunpack.c.l.b16 %v3047
        %v3357 = vunpack.c.h.b16 %v3047
        %v3358 = vunpack.c.l.b16 %v3048
        %v3359 = vunpack.c.h.b16 %v3048
        %v3360 = vunpack.c.l.b16 %v3049
        %v3361 = vunpack.c.h.b16 %v3049
        %v3362 = vunpack.c.l.b16 %v3050
        %v3363 = vunpack.c.h.b16 %v3050
        %v3364 = vpack.c.b16 %v3302, %v3300
        %v3365 = vpack.c.b16 %v3303, %v3301
        %v3366 = vpack.c.b16 %v3306, %v3304
        %v3367 = vpack.c.b16 %v3307, %v3305
        %v3368 = vpack.c.b16 %v3310, %v3308
        %v3369 = vpack.c.b16 %v3311, %v3309
        %v3370 = vpack.c.b16 %v3314, %v3312
        %v3371 = vpack.c.b16 %v3315, %v3313
        %v3372 = vpack.c.b16 %v3318, %v3316
        %v3373 = vpack.c.b16 %v3319, %v3317
        %v3374 = vpack.c.b16 %v3322, %v3320
        %v3375 = vpack.c.b16 %v3323, %v3321
        %v3376 = vpack.c.b16 %v3326, %v3324
        %v3377 = vpack.c.b16 %v3327, %v3325
        %v3378 = vpack.c.b16 %v3330, %v3328
        %v3379 = vpack.c.b16 %v3331, %v3329
        %v3380 = vpack.c.b16 %v3334, %v3332
        %v3381 = vpack.c.b16 %v3335, %v3333
        %v3382 = vpack.c.b16 %v3338, %v3336
        %v3383 = vpack.c.b16 %v3339, %v3337
        %v3384 = vpack.c.b16 %v3342, %v3340
        %v3385 = vpack.c.b16 %v3343, %v3341
        %v3386 = vpack.c.b16 %v3346, %v3344
        %v3387 = vpack.c.b16 %v3347, %v3345
        %v3388 = vpack.c.b16 %v3350, %v3348
        %v3389 = vpack.c.b16 %v3351, %v3349
        %v3390 = vpack.c.b16 %v3354, %v3352
        %v3391 = vpack.c.b16 %v3355, %v3353
        %v3392 = vpack.c.b16 %v3358, %v3356
        %v3393 = vpack.c.b16 %v3359, %v3357
        %v3394 = vpack.c.b16 %v3362, %v3360
        %v3395 = vpack.c.b16 %v3363, %v3361
        %3428 = vmatprep.subr.bf16.mxu0 %v3365
        %3429 = vmatpush1.bf16.msra.mxu0 %v3364
        %3430 = vmatprep.subr.bf16.mxu0 %v3367
        %3431 = vmatpush1.bf16.msra.mxu0 %v3366
        %3432 = vmatprep.subr.bf16.mxu0 %v3369
        %3433 = vmatpush1.bf16.msra.mxu0 %v3368
        %3434 = vmatprep.subr.bf16.mxu0 %v3371
        %3435 = vmatpush1.bf16.msra.mxu0 %v3370
        %3436 = vmatprep.subr.bf16.mxu0 %v3373
        %3437 = vmatpush1.bf16.msra.mxu0 %v3372
        %3438 = vmatprep.subr.bf16.mxu0 %v3375
        %3439 = vmatpush1.bf16.msra.mxu0 %v3374
        %3440 = vmatprep.subr.bf16.mxu0 %v3377
        %3441 = vmatpush1.bf16.msra.mxu0 %v3376
        %3442 = vmatprep.subr.bf16.mxu0 %v3379
        %3443 = vmatpush1.bf16.msra.mxu0 %v3378
        %3444 = vmatprep.subr.bf16.mxu0 %v3381
        %3445 = vmatpush1.bf16.msra.mxu0 %v3380
        %3446 = vmatprep.subr.bf16.mxu0 %v3383
        %3447 = vmatpush1.bf16.msra.mxu0 %v3382
        %3448 = vmatprep.subr.bf16.mxu0 %v3385
        %3449 = vmatpush1.bf16.msra.mxu0 %v3384
        %3450 = vmatprep.subr.bf16.mxu0 %v3387
        %3451 = vmatpush1.bf16.msra.mxu0 %v3386
        %3452 = vmatprep.subr.bf16.mxu0 %v3389
        %3453 = vmatpush1.bf16.msra.mxu0 %v3388
        %3454 = vmatprep.subr.bf16.mxu0 %v3391
        %3455 = vmatpush1.bf16.msra.mxu0 %v3390
        %3456 = vmatprep.subr.bf16.mxu0 %v3393
        %3457 = vmatpush1.bf16.msra.mxu0 %v3392
        %3458 = vmatprep.subr.bf16.mxu0 %v3395
        %3459 = vmatpush1.bf16.msra.mxu0 %v3394
        %3460 = vmatprep.mubr.bf16.mxu0 %v3256
        %3461 = vmatmul.mubr.bf16.gmra.mrb[0].mxu0 %v3255
        %v3462 = vpop.f32.mrb[0].mxu0
        %v3463 = vadd.f32 %v3261, %v3462
        %v3464 = vpop.f32.mrb[0].mxu0
        %v3465 = vadd.f32 %v3265, %v3464
        %v3466 = vpop.f32.mrb[0].mxu0
        %v3467 = vpop.f32.mrb[0].mxu0
        %3468 = vdwg.mxu0
        %v3469 = vadd.f32 %v2222, %v3463
        %v3470 = vadd.f32 %v2223, %v3465
        %v3471 = vld [vmem:[%s18] sm:$0x3]
        %v3472 = vld [vmem:[%s19] sm:$0x3]
        %v3473 = vadd.f32 %v3469, %v3470
        %3474 = vadd.xlane.f32.xlu0 %v3473
        %v3475 = vpop.xlane.xlu0 %3474
        %v3476 = vmul.f32 %v3475, %v988
        %v3477 = vsub.f32 %v3469, %v3476
        %v3478 = vsub.f32 %v3470, %v3476
        %v3479 = vmul.f32 %v3477, %v3477
        %v3480 = vmul.f32 %v3478, %v3478
        %v3481 = vadd.f32 %v3479, %v3480
        %3482 = vadd.xlane.f32.xlu0 %v3481
        %v3483 = vpop.xlane.xlu0 %3482
        %v3484 = vmul.f32 %v3483, 0.003921569
        %v3485 = vrsqrt.pop %v3484
        %v3486 = vmul.f32 %v3484, %v3485
        %vm3487 = vcmp.eq.f32.partialorder %v3484, inf
        %v3488 = vsel %vm3487, %v3484, %v3486
        %vm3489 = vcmp.eq.f32.partialorder %v3484, 0.0
        %v3490 = vand.u32 %v3484, 2147483648
        %v3491 = vsel %vm3489, %v3490, %v3488
        %v3492 = vadd.f32 %v3491, 1e-06
        %v3493 = vrcp.pop %v3492
        %v3494 = vmul.f32 %v3477, %v3493
        %v3495 = vmul.f32 %v3478, %v3493
        %v3497 = vlaneseq
        %v3498 = vshrl.u32 %v3497, 7
        %v3499 = vsub.s32 0, %v3498
        %v3500 = vrot.slane %v3471, %v3499
        %v3501 = vlaneseq
        %v3502 = vshrl.u32 %v3501, 7
        %v3503 = vsub.s32 1, %v3502
        %v3504 = vrot.slane %v3471, %v3503
        %v3507 = vmul.f32 %v3500, %v3494
        %v3508 = vmul.f32 %v3504, %v3495
        %v3510 = vlaneseq
        %v3511 = vshrl.u32 %v3510, 7
        %v3512 = vsub.s32 0, %v3511
        %v3513 = vrot.slane %v3472, %v3512
        %v3514 = vlaneseq
        %v3515 = vshrl.u32 %v3514, 7
        %v3516 = vsub.s32 1, %v3515
        %v3517 = vrot.slane %v3472, %v3516
        %v3520 = vadd.f32 %v3507, %v3513
        %v3521 = vadd.f32 %v3508, %v3517
        %v3522 = vpack.c.bf16 %v3520, %v3520
        %v3523 = vpack.c.bf16 %v3521, %v3521
        %v3524 = vld [vmem:[#allocation19] sm:$0xff]
        %v3525 = vld [vmem:[#allocation19 + $0x8] sm:$0xff]
        %v3526 = vld [vmem:[#allocation19 + $0x10] sm:$0xff]
        %v3527 = vld [vmem:[#allocation19 + $0x18] sm:$0xff]
        %v3528 = vld [vmem:[#allocation19 + $0x20] sm:$0xff]
        %v3529 = vld [vmem:[#allocation19 + $0x28] sm:$0xff]
        %v3530 = vld [vmem:[#allocation19 + $0x30] sm:$0xff]
        %v3531 = vld [vmem:[#allocation19 + $0x38] sm:$0xff]
        %v3532 = vld [vmem:[#allocation19 + $0x40] sm:$0xff]
        %v3533 = vld [vmem:[#allocation19 + $0x48] sm:$0xff]
        %v3534 = vld [vmem:[#allocation19 + $0x50] sm:$0xff]
        %v3535 = vld [vmem:[#allocation19 + $0x58] sm:$0xff]
        %v3536 = vld [vmem:[#allocation19 + $0x60] sm:$0xff]
        %v3537 = vld [vmem:[#allocation19 + $0x68] sm:$0xff]
        %v3538 = vld [vmem:[#allocation19 + $0x70] sm:$0xff]
        %v3539 = vld [vmem:[#allocation19 + $0x78] sm:$0xff]
        %v3540 = vld [vmem:[#allocation19 + $0x80] sm:$0xff]
        %v3541 = vld [vmem:[#allocation19 + $0x88] sm:$0xff]
        %v3542 = vld [vmem:[#allocation19 + $0x90] sm:$0xff]
        %v3543 = vld [vmem:[#allocation19 + $0x98] sm:$0xff]
        %v3544 = vld [vmem:[#allocation19 + $0xa0] sm:$0xff]
        %v3545 = vld [vmem:[#allocation19 + $0xa8] sm:$0xff]
        %v3546 = vld [vmem:[#allocation19 + $0xb0] sm:$0xff]
        %v3547 = vld [vmem:[#allocation19 + $0xb8] sm:$0xff]
        %v3548 = vld [vmem:[#allocation19 + $0xc0] sm:$0xff]
        %v3549 = vld [vmem:[#allocation19 + $0xc8] sm:$0xff]
        %v3550 = vld [vmem:[#allocation19 + $0xd0] sm:$0xff]
        %v3551 = vld [vmem:[#allocation19 + $0xd8] sm:$0xff]
        %v3552 = vld [vmem:[#allocation19 + $0xe0] sm:$0xff]
        %v3553 = vld [vmem:[#allocation19 + $0xe8] sm:$0xff]
        %v3554 = vld [vmem:[#allocation19 + $0xf0] sm:$0xff]
        %v3555 = vld [vmem:[#allocation19 + $0xf8] sm:$0xff]
        %v3556 = vld [vmem:[#allocation19 + $0x100] sm:$0xff]
        %v3557 = vld [vmem:[#allocation19 + $0x108] sm:$0xff]
        %v3558 = vld [vmem:[#allocation19 + $0x110] sm:$0xff]
        %v3559 = vld [vmem:[#allocation19 + $0x118] sm:$0xff]
        %v3560 = vld [vmem:[#allocation19 + $0x120] sm:$0xff]
        %v3561 = vld [vmem:[#allocation19 + $0x128] sm:$0xff]
        %v3562 = vld [vmem:[#allocation19 + $0x130] sm:$0xff]
        %v3563 = vld [vmem:[#allocation19 + $0x138] sm:$0xff]
        %v3564 = vld [vmem:[#allocation19 + $0x140] sm:$0xff]
        %v3565 = vld [vmem:[#allocation19 + $0x148] sm:$0xff]
        %v3566 = vld [vmem:[#allocation19 + $0x150] sm:$0xff]
        %v3567 = vld [vmem:[#allocation19 + $0x158] sm:$0xff]
        %v3568 = vld [vmem:[#allocation19 + $0x160] sm:$0xff]
        %v3569 = vld [vmem:[#allocation19 + $0x168] sm:$0xff]
        %v3570 = vld [vmem:[#allocation19 + $0x170] sm:$0xff]
        %v3571 = vld [vmem:[#allocation19 + $0x178] sm:$0xff]
        %v3572 = vld [vmem:[#allocation19 + $0x180] sm:$0xff]
        %v3573 = vld [vmem:[#allocation19 + $0x188] sm:$0xff]
        %v3574 = vld [vmem:[#allocation19 + $0x190] sm:$0xff]
        %v3575 = vld [vmem:[#allocation19 + $0x198] sm:$0xff]
        %v3576 = vld [vmem:[#allocation19 + $0x1a0] sm:$0xff]
        %v3577 = vld [vmem:[#allocation19 + $0x1a8] sm:$0xff]
        %v3578 = vld [vmem:[#allocation19 + $0x1b0] sm:$0xff]
        %v3579 = vld [vmem:[#allocation19 + $0x1b8] sm:$0xff]
        %v3580 = vld [vmem:[#allocation19 + $0x1c0] sm:$0xff]
        %v3581 = vld [vmem:[#allocation19 + $0x1c8] sm:$0xff]
        %v3582 = vld [vmem:[#allocation19 + $0x1d0] sm:$0xff]
        %v3583 = vld [vmem:[#allocation19 + $0x1d8] sm:$0xff]
        %v3584 = vld [vmem:[#allocation19 + $0x1e0] sm:$0xff]
        %v3585 = vld [vmem:[#allocation19 + $0x1e8] sm:$0xff]
        %v3586 = vld [vmem:[#allocation19 + $0x1f0] sm:$0xff]
        %v3587 = vld [vmem:[#allocation19 + $0x1f8] sm:$0xff]
        %v3588 = vld [vmem:[%s21] sm:$0xf]
        %v3590 = vlaneseq
        %v3591 = vshrl.u32 %v3590, 7
        %v3592 = vsub.s32 0, %v3591
        %v3593 = vrot.slane %v3588, %v3592
        %v3594 = vlaneseq
        %v3595 = vshrl.u32 %v3594, 7
        %v3596 = vsub.s32 1, %v3595
        %v3597 = vrot.slane %v3588, %v3596
        %v3598 = vlaneseq
        %v3599 = vshrl.u32 %v3598, 7
        %v3600 = vsub.s32 2, %v3599
        %v3601 = vrot.slane %v3588, %v3600
        %v3602 = vlaneseq
        %v3603 = vshrl.u32 %v3602, 7
        %v3604 = vsub.s32 3, %v3603
        %v3605 = vrot.slane %v3588, %v3604
        %v3674 = vunpack.c.l.b16 %v3524
        %v3675 = vunpack.c.h.b16 %v3524
        %v3676 = vunpack.c.l.b16 %v3525
        %v3677 = vunpack.c.h.b16 %v3525
        %v3678 = vunpack.c.l.b16 %v3526
        %v3679 = vunpack.c.h.b16 %v3526
        %v3680 = vunpack.c.l.b16 %v3527
        %v3681 = vunpack.c.h.b16 %v3527
        %v3682 = vunpack.c.l.b16 %v3528
        %v3683 = vunpack.c.h.b16 %v3528
        %v3684 = vunpack.c.l.b16 %v3529
        %v3685 = vunpack.c.h.b16 %v3529
        %v3686 = vunpack.c.l.b16 %v3530
        %v3687 = vunpack.c.h.b16 %v3530
        %v3688 = vunpack.c.l.b16 %v3531
        %v3689 = vunpack.c.h.b16 %v3531
        %v3690 = vunpack.c.l.b16 %v3532
        %v3691 = vunpack.c.h.b16 %v3532
        %v3692 = vunpack.c.l.b16 %v3533
        %v3693 = vunpack.c.h.b16 %v3533
        %v3694 = vunpack.c.l.b16 %v3534
        %v3695 = vunpack.c.h.b16 %v3534
        %v3696 = vunpack.c.l.b16 %v3535
        %v3697 = vunpack.c.h.b16 %v3535
        %v3698 = vunpack.c.l.b16 %v3536
        %v3699 = vunpack.c.h.b16 %v3536
        %v3700 = vunpack.c.l.b16 %v3537
        %v3701 = vunpack.c.h.b16 %v3537
        %v3702 = vunpack.c.l.b16 %v3538
        %v3703 = vunpack.c.h.b16 %v3538
        %v3704 = vunpack.c.l.b16 %v3539
        %v3705 = vunpack.c.h.b16 %v3539
        %v3706 = vunpack.c.l.b16 %v3540
        %v3707 = vunpack.c.h.b16 %v3540
        %v3708 = vunpack.c.l.b16 %v3541
        %v3709 = vunpack.c.h.b16 %v3541
        %v3710 = vunpack.c.l.b16 %v3542
        %v3711 = vunpack.c.h.b16 %v3542
        %v3712 = vunpack.c.l.b16 %v3543
        %v3713 = vunpack.c.h.b16 %v3543
        %v3714 = vunpack.c.l.b16 %v3544
        %v3715 = vunpack.c.h.b16 %v3544
        %v3716 = vunpack.c.l.b16 %v3545
        %v3717 = vunpack.c.h.b16 %v3545
        %v3718 = vunpack.c.l.b16 %v3546
        %v3719 = vunpack.c.h.b16 %v3546
        %v3720 = vunpack.c.l.b16 %v3547
        %v3721 = vunpack.c.h.b16 %v3547
        %v3722 = vunpack.c.l.b16 %v3548
        %v3723 = vunpack.c.h.b16 %v3548
        %v3724 = vunpack.c.l.b16 %v3549
        %v3725 = vunpack.c.h.b16 %v3549
        %v3726 = vunpack.c.l.b16 %v3550
        %v3727 = vunpack.c.h.b16 %v3550
        %v3728 = vunpack.c.l.b16 %v3551
        %v3729 = vunpack.c.h.b16 %v3551
        %v3730 = vunpack.c.l.b16 %v3552
        %v3731 = vunpack.c.h.b16 %v3552
        %v3732 = vunpack.c.l.b16 %v3553
        %v3733 = vunpack.c.h.b16 %v3553
        %v3734 = vunpack.c.l.b16 %v3554
        %v3735 = vunpack.c.h.b16 %v3554
        %v3736 = vunpack.c.l.b16 %v3555
        %v3737 = vunpack.c.h.b16 %v3555
        %v3738 = vunpack.c.l.b16 %v3556
        %v3739 = vunpack.c.h.b16 %v3556
        %v3740 = vunpack.c.l.b16 %v3557
        %v3741 = vunpack.c.h.b16 %v3557
        %v3742 = vunpack.c.l.b16 %v3558
        %v3743 = vunpack.c.h.b16 %v3558
        %v3744 = vunpack.c.l.b16 %v3559
        %v3745 = vunpack.c.h.b16 %v3559
        %v3746 = vunpack.c.l.b16 %v3560
        %v3747 = vunpack.c.h.b16 %v3560
        %v3748 = vunpack.c.l.b16 %v3561
        %v3749 = vunpack.c.h.b16 %v3561
        %v3750 = vunpack.c.l.b16 %v3562
        %v3751 = vunpack.c.h.b16 %v3562
        %v3752 = vunpack.c.l.b16 %v3563
        %v3753 = vunpack.c.h.b16 %v3563
        %v3754 = vunpack.c.l.b16 %v3564
        %v3755 = vunpack.c.h.b16 %v3564
        %v3756 = vunpack.c.l.b16 %v3565
        %v3757 = vunpack.c.h.b16 %v3565
        %v3758 = vunpack.c.l.b16 %v3566
        %v3759 = vunpack.c.h.b16 %v3566
        %v3760 = vunpack.c.l.b16 %v3567
        %v3761 = vunpack.c.h.b16 %v3567
        %v3762 = vunpack.c.l.b16 %v3568
        %v3763 = vunpack.c.h.b16 %v3568
        %v3764 = vunpack.c.l.b16 %v3569
        %v3765 = vunpack.c.h.b16 %v3569
        %v3766 = vunpack.c.l.b16 %v3570
        %v3767 = vunpack.c.h.b16 %v3570
        %v3768 = vunpack.c.l.b16 %v3571
        %v3769 = vunpack.c.h.b16 %v3571
        %v3770 = vunpack.c.l.b16 %v3572
        %v3771 = vunpack.c.h.b16 %v3572
        %v3772 = vunpack.c.l.b16 %v3573
        %v3773 = vunpack.c.h.b16 %v3573
        %v3774 = vunpack.c.l.b16 %v3574
        %v3775 = vunpack.c.h.b16 %v3574
        %v3776 = vunpack.c.l.b16 %v3575
        %v3777 = vunpack.c.h.b16 %v3575
        %v3778 = vunpack.c.l.b16 %v3576
        %v3779 = vunpack.c.h.b16 %v3576
        %v3780 = vunpack.c.l.b16 %v3577
        %v3781 = vunpack.c.h.b16 %v3577
        %v3782 = vunpack.c.l.b16 %v3578
        %v3783 = vunpack.c.h.b16 %v3578
        %v3784 = vunpack.c.l.b16 %v3579
        %v3785 = vunpack.c.h.b16 %v3579
        %v3786 = vunpack.c.l.b16 %v3580
        %v3787 = vunpack.c.h.b16 %v3580
        %v3788 = vunpack.c.l.b16 %v3581
        %v3789 = vunpack.c.h.b16 %v3581
        %v3790 = vunpack.c.l.b16 %v3582
        %v3791 = vunpack.c.h.b16 %v3582
        %v3792 = vunpack.c.l.b16 %v3583
        %v3793 = vunpack.c.h.b16 %v3583
        %v3794 = vunpack.c.l.b16 %v3584
        %v3795 = vunpack.c.h.b16 %v3584
        %v3796 = vunpack.c.l.b16 %v3585
        %v3797 = vunpack.c.h.b16 %v3585
        %v3798 = vunpack.c.l.b16 %v3586
        %v3799 = vunpack.c.h.b16 %v3586
        %v3800 = vunpack.c.l.b16 %v3587
        %v3801 = vunpack.c.h.b16 %v3587
        %v3802 = vpack.c.b16 %v3678, %v3674
        %v3803 = vpack.c.b16 %v3679, %v3675
        %v3804 = vpack.c.b16 %v3680, %v3676
        %v3805 = vpack.c.b16 %v3681, %v3677
        %v3806 = vpack.c.b16 %v3686, %v3682
        %v3807 = vpack.c.b16 %v3687, %v3683
        %v3808 = vpack.c.b16 %v3688, %v3684
        %v3809 = vpack.c.b16 %v3689, %v3685
        %v3810 = vpack.c.b16 %v3694, %v3690
        %v3811 = vpack.c.b16 %v3695, %v3691
        %v3812 = vpack.c.b16 %v3696, %v3692
        %v3813 = vpack.c.b16 %v3697, %v3693
        %v3814 = vpack.c.b16 %v3702, %v3698
        %v3815 = vpack.c.b16 %v3703, %v3699
        %v3816 = vpack.c.b16 %v3704, %v3700
        %v3817 = vpack.c.b16 %v3705, %v3701
        %v3818 = vpack.c.b16 %v3710, %v3706
        %v3819 = vpack.c.b16 %v3711, %v3707
        %v3820 = vpack.c.b16 %v3712, %v3708
        %v3821 = vpack.c.b16 %v3713, %v3709
        %v3822 = vpack.c.b16 %v3718, %v3714
        %v3823 = vpack.c.b16 %v3719, %v3715
        %v3824 = vpack.c.b16 %v3720, %v3716
        %v3825 = vpack.c.b16 %v3721, %v3717
        %v3826 = vpack.c.b16 %v3726, %v3722
        %v3827 = vpack.c.b16 %v3727, %v3723
        %v3828 = vpack.c.b16 %v3728, %v3724
        %v3829 = vpack.c.b16 %v3729, %v3725
        %v3830 = vpack.c.b16 %v3734, %v3730
        %v3831 = vpack.c.b16 %v3735, %v3731
        %v3832 = vpack.c.b16 %v3736, %v3732
        %v3833 = vpack.c.b16 %v3737, %v3733
        %v3834 = vpack.c.b16 %v3742, %v3738
        %v3835 = vpack.c.b16 %v3743, %v3739
        %v3836 = vpack.c.b16 %v3744, %v3740
        %v3837 = vpack.c.b16 %v3745, %v3741
        %v3838 = vpack.c.b16 %v3750, %v3746
        %v3839 = vpack.c.b16 %v3751, %v3747
        %v3840 = vpack.c.b16 %v3752, %v3748
        %v3841 = vpack.c.b16 %v3753, %v3749
        %v3842 = vpack.c.b16 %v3758, %v3754
        %v3843 = vpack.c.b16 %v3759, %v3755
        %v3844 = vpack.c.b16 %v3760, %v3756
        %v3845 = vpack.c.b16 %v3761, %v3757
        %v3846 = vpack.c.b16 %v3766, %v3762
        %v3847 = vpack.c.b16 %v3767, %v3763
        %v3848 = vpack.c.b16 %v3768, %v3764
        %v3849 = vpack.c.b16 %v3769, %v3765
        %v3850 = vpack.c.b16 %v3774, %v3770
        %v3851 = vpack.c.b16 %v3775, %v3771
        %v3852 = vpack.c.b16 %v3776, %v3772
        %v3853 = vpack.c.b16 %v3777, %v3773
        %v3854 = vpack.c.b16 %v3782, %v3778
        %v3855 = vpack.c.b16 %v3783, %v3779
        %v3856 = vpack.c.b16 %v3784, %v3780
        %v3857 = vpack.c.b16 %v3785, %v3781
        %v3858 = vpack.c.b16 %v3790, %v3786
        %v3859 = vpack.c.b16 %v3791, %v3787
        %v3860 = vpack.c.b16 %v3792, %v3788
        %v3861 = vpack.c.b16 %v3793, %v3789
        %v3862 = vpack.c.b16 %v3798, %v3794
        %v3863 = vpack.c.b16 %v3799, %v3795
        %v3864 = vpack.c.b16 %v3800, %v3796
        %v3865 = vpack.c.b16 %v3801, %v3797
        %3930 = vmatprep.subr.bf16.mxu0 %v3803
        %3931 = vmatpush1.bf16.msra.mxu0 %v3802
        %3932 = vmatprep.subr.bf16.mxu0 %v3807
        %3933 = vmatpush1.bf16.msra.mxu0 %v3806
        %3934 = vmatprep.subr.bf16.mxu0 %v3811
        %3935 = vmatpush1.bf16.msra.mxu0 %v3810
        %3936 = vmatprep.subr.bf16.mxu0 %v3815
        %3937 = vmatpush1.bf16.msra.mxu0 %v3814
        %3938 = vmatprep.subr.bf16.mxu0 %v3819
        %3939 = vmatpush1.bf16.msra.mxu0 %v3818
        %3940 = vmatprep.subr.bf16.mxu0 %v3823
        %3941 = vmatpush1.bf16.msra.mxu0 %v3822
        %3942 = vmatprep.subr.bf16.mxu0 %v3827
        %3943 = vmatpush1.bf16.msra.mxu0 %v3826
        %3944 = vmatprep.subr.bf16.mxu0 %v3831
        %3945 = vmatpush1.bf16.msra.mxu0 %v3830
        %3946 = vmatprep.subr.bf16.mxu0 %v3835
        %3947 = vmatpush1.bf16.msra.mxu0 %v3834
        %3948 = vmatprep.subr.bf16.mxu0 %v3839
        %3949 = vmatpush1.bf16.msra.mxu0 %v3838
        %3950 = vmatprep.subr.bf16.mxu0 %v3843
        %3951 = vmatpush1.bf16.msra.mxu0 %v3842
        %3952 = vmatprep.subr.bf16.mxu0 %v3847
        %3953 = vmatpush1.bf16.msra.mxu0 %v3846
        %3954 = vmatprep.subr.bf16.mxu0 %v3851
        %3955 = vmatpush1.bf16.msra.mxu0 %v3850
        %3956 = vmatprep.subr.bf16.mxu0 %v3855
        %3957 = vmatpush1.bf16.msra.mxu0 %v3854
        %3958 = vmatprep.subr.bf16.mxu0 %v3859
        %3959 = vmatpush1.bf16.msra.mxu0 %v3858
        %3960 = vmatprep.subr.bf16.mxu0 %v3863
        %3961 = vmatpush1.bf16.msra.mxu0 %v3862
        %3962 = vmatprep.mubr.bf16.mxu0 %v3523
        %3963 = vmatmul.mubr.bf16.gmra.mrb[0].mxu0 %v3522
        %v3964 = vpop.f32.mrb[0].mxu0
        %v3965 = vadd.f32 %v3593, %v3964
        %v3966 = vpop.f32.mrb[0].mxu0
        %v3967 = vadd.f32 %v3597, %v3966
        %v3968 = vpop.f32.mrb[0].mxu0
        %v3969 = vpop.f32.mrb[0].mxu0
        %3970 = vdwg.mxu0
        %3971 = vmatprep.subr.bf16.mxu0 %v3805
        %3972 = vmatpush1.bf16.msra.mxu0 %v3804
        %3973 = vmatprep.subr.bf16.mxu0 %v3809
        %3974 = vmatpush1.bf16.msra.mxu0 %v3808
        %3975 = vmatprep.subr.bf16.mxu0 %v3813
        %3976 = vmatpush1.bf16.msra.mxu0 %v3812
        %3977 = vmatprep.subr.bf16.mxu0 %v3817
        %3978 = vmatpush1.bf16.msra.mxu0 %v3816
        %3979 = vmatprep.subr.bf16.mxu0 %v3821
        %3980 = vmatpush1.bf16.msra.mxu0 %v3820
        %3981 = vmatprep.subr.bf16.mxu0 %v3825
        %3982 = vmatpush1.bf16.msra.mxu0 %v3824
        %3983 = vmatprep.subr.bf16.mxu0 %v3829
        %3984 = vmatpush1.bf16.msra.mxu0 %v3828
        %3985 = vmatprep.subr.bf16.mxu0 %v3833
        %3986 = vmatpush1.bf16.msra.mxu0 %v3832
        %3987 = vmatprep.subr.bf16.mxu0 %v3837
        %3988 = vmatpush1.bf16.msra.mxu0 %v3836
        %3989 = vmatprep.subr.bf16.mxu0 %v3841
        %3990 = vmatpush1.bf16.msra.mxu0 %v3840
        %3991 = vmatprep.subr.bf16.mxu0 %v3845
        %3992 = vmatpush1.bf16.msra.mxu0 %v3844
        %3993 = vmatprep.subr.bf16.mxu0 %v3849
        %3994 = vmatpush1.bf16.msra.mxu0 %v3848
        %3995 = vmatprep.subr.bf16.mxu0 %v3853
        %3996 = vmatpush1.bf16.msra.mxu0 %v3852
        %3997 = vmatprep.subr.bf16.mxu0 %v3857
        %3998 = vmatpush1.bf16.msra.mxu0 %v3856
        %3999 = vmatprep.subr.bf16.mxu0 %v3861
        %4000 = vmatpush1.bf16.msra.mxu0 %v3860
        %4001 = vmatprep.subr.bf16.mxu0 %v3865
        %4002 = vmatpush1.bf16.msra.mxu0 %v3864
        %4003 = vmatprep.mubr.bf16.mxu0 %v3523
        %4004 = vmatmul.mubr.bf16.gmra.mrb[0].mxu0 %v3522
        %v4005 = vpop.f32.mrb[0].mxu0
        %v4006 = vadd.f32 %v3601, %v4005
        %v4007 = vpop.f32.mrb[0].mxu0
        %v4008 = vadd.f32 %v3605, %v4007
        %v4009 = vpop.f32.mrb[0].mxu0
        %v4010 = vpop.f32.mrb[0].mxu0
        %4011 = vdwg.mxu0
        %v4012 = vmax.f32 %v3965, 0.0
        %v4013 = vmax.f32 %v3967, 0.0
        %v4014 = vmax.f32 %v4006, 0.0
        %v4015 = vmax.f32 %v4008, 0.0
        %v4016 = vpack.c.bf16 %v4012, %v4012
        %v4017 = vpack.c.bf16 %v4013, %v4013
        %v4018 = vpack.c.bf16 %v4014, %v4014
        %v4019 = vpack.c.bf16 %v4015, %v4015
        %v4020 = vld [vmem:[#allocation20] sm:$0xff]
        %v4021 = vld [vmem:[#allocation20 + $0x8] sm:$0xff]
        %v4022 = vld [vmem:[#allocation20 + $0x10] sm:$0xff]
        %v4023 = vld [vmem:[#allocation20 + $0x18] sm:$0xff]
        %v4024 = vld [vmem:[#allocation20 + $0x20] sm:$0xff]
        %v4025 = vld [vmem:[#allocation20 + $0x28] sm:$0xff]
        %v4026 = vld [vmem:[#allocation20 + $0x30] sm:$0xff]
        %v4027 = vld [vmem:[#allocation20 + $0x38] sm:$0xff]
        %v4028 = vld [vmem:[#allocation20 + $0x40] sm:$0xff]
        %v4029 = vld [vmem:[#allocation20 + $0x48] sm:$0xff]
        %v4030 = vld [vmem:[#allocation20 + $0x50] sm:$0xff]
        %v4031 = vld [vmem:[#allocation20 + $0x58] sm:$0xff]
        %v4032 = vld [vmem:[#allocation20 + $0x60] sm:$0xff]
        %v4033 = vld [vmem:[#allocation20 + $0x68] sm:$0xff]
        %v4034 = vld [vmem:[#allocation20 + $0x70] sm:$0xff]
        %v4035 = vld [vmem:[#allocation20 + $0x78] sm:$0xff]
        %v4036 = vld [vmem:[#allocation20 + $0x80] sm:$0xff]
        %v4037 = vld [vmem:[#allocation20 + $0x88] sm:$0xff]
        %v4038 = vld [vmem:[#allocation20 + $0x90] sm:$0xff]
        %v4039 = vld [vmem:[#allocation20 + $0x98] sm:$0xff]
        %v4040 = vld [vmem:[#allocation20 + $0xa0] sm:$0xff]
        %v4041 = vld [vmem:[#allocation20 + $0xa8] sm:$0xff]
        %v4042 = vld [vmem:[#allocation20 + $0xb0] sm:$0xff]
        %v4043 = vld [vmem:[#allocation20 + $0xb8] sm:$0xff]
        %v4044 = vld [vmem:[#allocation20 + $0xc0] sm:$0xff]
        %v4045 = vld [vmem:[#allocation20 + $0xc8] sm:$0xff]
        %v4046 = vld [vmem:[#allocation20 + $0xd0] sm:$0xff]
        %v4047 = vld [vmem:[#allocation20 + $0xd8] sm:$0xff]
        %v4048 = vld [vmem:[#allocation20 + $0xe0] sm:$0xff]
        %v4049 = vld [vmem:[#allocation20 + $0xe8] sm:$0xff]
        %v4050 = vld [vmem:[#allocation20 + $0xf0] sm:$0xff]
        %v4051 = vld [vmem:[#allocation20 + $0xf8] sm:$0xff]
        %v4052 = vld [vmem:[#allocation20 + $0x100] sm:$0xff]
        %v4053 = vld [vmem:[#allocation20 + $0x108] sm:$0xff]
        %v4054 = vld [vmem:[#allocation20 + $0x110] sm:$0xff]
        %v4055 = vld [vmem:[#allocation20 + $0x118] sm:$0xff]
        %v4056 = vld [vmem:[#allocation20 + $0x120] sm:$0xff]
        %v4057 = vld [vmem:[#allocation20 + $0x128] sm:$0xff]
        %v4058 = vld [vmem:[#allocation20 + $0x130] sm:$0xff]
        %v4059 = vld [vmem:[#allocation20 + $0x138] sm:$0xff]
        %v4060 = vld [vmem:[#allocation20 + $0x140] sm:$0xff]
        %v4061 = vld [vmem:[#allocation20 + $0x148] sm:$0xff]
        %v4062 = vld [vmem:[#allocation20 + $0x150] sm:$0xff]
        %v4063 = vld [vmem:[#allocation20 + $0x158] sm:$0xff]
        %v4064 = vld [vmem:[#allocation20 + $0x160] sm:$0xff]
        %v4065 = vld [vmem:[#allocation20 + $0x168] sm:$0xff]
        %v4066 = vld [vmem:[#allocation20 + $0x170] sm:$0xff]
        %v4067 = vld [vmem:[#allocation20 + $0x178] sm:$0xff]
        %v4068 = vld [vmem:[#allocation20 + $0x180] sm:$0xff]
        %v4069 = vld [vmem:[#allocation20 + $0x188] sm:$0xff]
        %v4070 = vld [vmem:[#allocation20 + $0x190] sm:$0xff]
        %v4071 = vld [vmem:[#allocation20 + $0x198] sm:$0xff]
        %v4072 = vld [vmem:[#allocation20 + $0x1a0] sm:$0xff]
        %v4073 = vld [vmem:[#allocation20 + $0x1a8] sm:$0xff]
        %v4074 = vld [vmem:[#allocation20 + $0x1b0] sm:$0xff]
        %v4075 = vld [vmem:[#allocation20 + $0x1b8] sm:$0xff]
        %v4076 = vld [vmem:[#allocation20 + $0x1c0] sm:$0xff]
        %v4077 = vld [vmem:[#allocation20 + $0x1c8] sm:$0xff]
        %v4078 = vld [vmem:[#allocation20 + $0x1d0] sm:$0xff]
        %v4079 = vld [vmem:[#allocation20 + $0x1d8] sm:$0xff]
        %v4080 = vld [vmem:[#allocation20 + $0x1e0] sm:$0xff]
        %v4081 = vld [vmem:[#allocation20 + $0x1e8] sm:$0xff]
        %v4082 = vld [vmem:[#allocation20 + $0x1f0] sm:$0xff]
        %v4083 = vld [vmem:[#allocation20 + $0x1f8] sm:$0xff]
        %v4084 = vld [vmem:[%s23] sm:$0x3]
        %v4086 = vlaneseq
        %v4087 = vshrl.u32 %v4086, 7
        %v4088 = vsub.s32 0, %v4087
        %v4089 = vrot.slane %v4084, %v4088
        %v4090 = vlaneseq
        %v4091 = vshrl.u32 %v4090, 7
        %v4092 = vsub.s32 1, %v4091
        %v4093 = vrot.slane %v4084, %v4092
        %v4160 = vunpack.c.l.b16 %v4020
        %v4161 = vunpack.c.h.b16 %v4020
        %v4162 = vunpack.c.l.b16 %v4021
        %v4163 = vunpack.c.h.b16 %v4021
        %v4164 = vunpack.c.l.b16 %v4022
        %v4165 = vunpack.c.h.b16 %v4022
        %v4166 = vunpack.c.l.b16 %v4023
        %v4167 = vunpack.c.h.b16 %v4023
        %v4168 = vunpack.c.l.b16 %v4024
        %v4169 = vunpack.c.h.b16 %v4024
        %v4170 = vunpack.c.l.b16 %v4025
        %v4171 = vunpack.c.h.b16 %v4025
        %v4172 = vunpack.c.l.b16 %v4026
        %v4173 = vunpack.c.h.b16 %v4026
        %v4174 = vunpack.c.l.b16 %v4027
        %v4175 = vunpack.c.h.b16 %v4027
        %v4176 = vunpack.c.l.b16 %v4028
        %v4177 = vunpack.c.h.b16 %v4028
        %v4178 = vunpack.c.l.b16 %v4029
        %v4179 = vunpack.c.h.b16 %v4029
        %v4180 = vunpack.c.l.b16 %v4030
        %v4181 = vunpack.c.h.b16 %v4030
        %v4182 = vunpack.c.l.b16 %v4031
        %v4183 = vunpack.c.h.b16 %v4031
        %v4184 = vunpack.c.l.b16 %v4032
        %v4185 = vunpack.c.h.b16 %v4032
        %v4186 = vunpack.c.l.b16 %v4033
        %v4187 = vunpack.c.h.b16 %v4033
        %v4188 = vunpack.c.l.b16 %v4034
        %v4189 = vunpack.c.h.b16 %v4034
        %v4190 = vunpack.c.l.b16 %v4035
        %v4191 = vunpack.c.h.b16 %v4035
        %v4192 = vunpack.c.l.b16 %v4036
        %v4193 = vunpack.c.h.b16 %v4036
        %v4194 = vunpack.c.l.b16 %v4037
        %v4195 = vunpack.c.h.b16 %v4037
        %v4196 = vunpack.c.l.b16 %v4038
        %v4197 = vunpack.c.h.b16 %v4038
        %v4198 = vunpack.c.l.b16 %v4039
        %v4199 = vunpack.c.h.b16 %v4039
        %v4200 = vunpack.c.l.b16 %v4040
        %v4201 = vunpack.c.h.b16 %v4040
        %v4202 = vunpack.c.l.b16 %v4041
        %v4203 = vunpack.c.h.b16 %v4041
        %v4204 = vunpack.c.l.b16 %v4042
        %v4205 = vunpack.c.h.b16 %v4042
        %v4206 = vunpack.c.l.b16 %v4043
        %v4207 = vunpack.c.h.b16 %v4043
        %v4208 = vunpack.c.l.b16 %v4044
        %v4209 = vunpack.c.h.b16 %v4044
        %v4210 = vunpack.c.l.b16 %v4045
        %v4211 = vunpack.c.h.b16 %v4045
        %v4212 = vunpack.c.l.b16 %v4046
        %v4213 = vunpack.c.h.b16 %v4046
        %v4214 = vunpack.c.l.b16 %v4047
        %v4215 = vunpack.c.h.b16 %v4047
        %v4216 = vunpack.c.l.b16 %v4048
        %v4217 = vunpack.c.h.b16 %v4048
        %v4218 = vunpack.c.l.b16 %v4049
        %v4219 = vunpack.c.h.b16 %v4049
        %v4220 = vunpack.c.l.b16 %v4050
        %v4221 = vunpack.c.h.b16 %v4050
        %v4222 = vunpack.c.l.b16 %v4051
        %v4223 = vunpack.c.h.b16 %v4051
        %v4224 = vunpack.c.l.b16 %v4052
        %v4225 = vunpack.c.h.b16 %v4052
        %v4226 = vunpack.c.l.b16 %v4053
        %v4227 = vunpack.c.h.b16 %v4053
        %v4228 = vunpack.c.l.b16 %v4054
        %v4229 = vunpack.c.h.b16 %v4054
        %v4230 = vunpack.c.l.b16 %v4055
        %v4231 = vunpack.c.h.b16 %v4055
        %v4232 = vunpack.c.l.b16 %v4056
        %v4233 = vunpack.c.h.b16 %v4056
        %v4234 = vunpack.c.l.b16 %v4057
        %v4235 = vunpack.c.h.b16 %v4057
        %v4236 = vunpack.c.l.b16 %v4058
        %v4237 = vunpack.c.h.b16 %v4058
        %v4238 = vunpack.c.l.b16 %v4059
        %v4239 = vunpack.c.h.b16 %v4059
        %v4240 = vunpack.c.l.b16 %v4060
        %v4241 = vunpack.c.h.b16 %v4060
        %v4242 = vunpack.c.l.b16 %v4061
        %v4243 = vunpack.c.h.b16 %v4061
        %v4244 = vunpack.c.l.b16 %v4062
        %v4245 = vunpack.c.h.b16 %v4062
        %v4246 = vunpack.c.l.b16 %v4063
        %v4247 = vunpack.c.h.b16 %v4063
        %v4248 = vunpack.c.l.b16 %v4064
        %v4249 = vunpack.c.h.b16 %v4064
        %v4250 = vunpack.c.l.b16 %v4065
        %v4251 = vunpack.c.h.b16 %v4065
        %v4252 = vunpack.c.l.b16 %v4066
        %v4253 = vunpack.c.h.b16 %v4066
        %v4254 = vunpack.c.l.b16 %v4067
        %v4255 = vunpack.c.h.b16 %v4067
        %v4256 = vunpack.c.l.b16 %v4068
        %v4257 = vunpack.c.h.b16 %v4068
        %v4258 = vunpack.c.l.b16 %v4069
        %v4259 = vunpack.c.h.b16 %v4069
        %v4260 = vunpack.c.l.b16 %v4070
        %v4261 = vunpack.c.h.b16 %v4070
        %v4262 = vunpack.c.l.b16 %v4071
        %v4263 = vunpack.c.h.b16 %v4071
        %v4264 = vunpack.c.l.b16 %v4072
        %v4265 = vunpack.c.h.b16 %v4072
        %v4266 = vunpack.c.l.b16 %v4073
        %v4267 = vunpack.c.h.b16 %v4073
        %v4268 = vunpack.c.l.b16 %v4074
        %v4269 = vunpack.c.h.b16 %v4074
        %v4270 = vunpack.c.l.b16 %v4075
        %v4271 = vunpack.c.h.b16 %v4075
        %v4272 = vunpack.c.l.b16 %v4076
        %v4273 = vunpack.c.h.b16 %v4076
        %v4274 = vunpack.c.l.b16 %v4077
        %v4275 = vunpack.c.h.b16 %v4077
        %v4276 = vunpack.c.l.b16 %v4078
        %v4277 = vunpack.c.h.b16 %v4078
        %v4278 = vunpack.c.l.b16 %v4079
        %v4279 = vunpack.c.h.b16 %v4079
        %v4280 = vunpack.c.l.b16 %v4080
        %v4281 = vunpack.c.h.b16 %v4080
        %v4282 = vunpack.c.l.b16 %v4081
        %v4283 = vunpack.c.h.b16 %v4081
        %v4284 = vunpack.c.l.b16 %v4082
        %v4285 = vunpack.c.h.b16 %v4082
        %v4286 = vunpack.c.l.b16 %v4083
        %v4287 = vunpack.c.h.b16 %v4083
        %v4288 = vpack.c.b16 %v4162, %v4160
        %v4289 = vpack.c.b16 %v4163, %v4161
        %v4290 = vpack.c.b16 %v4166, %v4164
        %v4291 = vpack.c.b16 %v4167, %v4165
        %v4292 = vpack.c.b16 %v4170, %v4168
        %v4293 = vpack.c.b16 %v4171, %v4169
        %v4294 = vpack.c.b16 %v4174, %v4172
        %v4295 = vpack.c.b16 %v4175, %v4173
        %v4296 = vpack.c.b16 %v4178, %v4176
        %v4297 = vpack.c.b16 %v4179, %v4177
        %v4298 = vpack.c.b16 %v4182, %v4180
        %v4299 = vpack.c.b16 %v4183, %v4181
        %v4300 = vpack.c.b16 %v4186, %v4184
        %v4301 = vpack.c.b16 %v4187, %v4185
        %v4302 = vpack.c.b16 %v4190, %v4188
        %v4303 = vpack.c.b16 %v4191, %v4189
        %v4304 = vpack.c.b16 %v4194, %v4192
        %v4305 = vpack.c.b16 %v4195, %v4193
        %v4306 = vpack.c.b16 %v4198, %v4196
        %v4307 = vpack.c.b16 %v4199, %v4197
        %v4308 = vpack.c.b16 %v4202, %v4200
        %v4309 = vpack.c.b16 %v4203, %v4201
        %v4310 = vpack.c.b16 %v4206, %v4204
        %v4311 = vpack.c.b16 %v4207, %v4205
        %v4312 = vpack.c.b16 %v4210, %v4208
        %v4313 = vpack.c.b16 %v4211, %v4209
        %v4314 = vpack.c.b16 %v4214, %v4212
        %v4315 = vpack.c.b16 %v4215, %v4213
        %v4316 = vpack.c.b16 %v4218, %v4216
        %v4317 = vpack.c.b16 %v4219, %v4217
        %v4318 = vpack.c.b16 %v4222, %v4220
        %v4319 = vpack.c.b16 %v4223, %v4221
        %v4320 = vpack.c.b16 %v4226, %v4224
        %v4321 = vpack.c.b16 %v4227, %v4225
        %v4322 = vpack.c.b16 %v4230, %v4228
        %v4323 = vpack.c.b16 %v4231, %v4229
        %v4324 = vpack.c.b16 %v4234, %v4232
        %v4325 = vpack.c.b16 %v4235, %v4233
        %v4326 = vpack.c.b16 %v4238, %v4236
        %v4327 = vpack.c.b16 %v4239, %v4237
        %v4328 = vpack.c.b16 %v4242, %v4240
        %v4329 = vpack.c.b16 %v4243, %v4241
        %v4330 = vpack.c.b16 %v4246, %v4244
        %v4331 = vpack.c.b16 %v4247, %v4245
        %v4332 = vpack.c.b16 %v4250, %v4248
        %v4333 = vpack.c.b16 %v4251, %v4249
        %v4334 = vpack.c.b16 %v4254, %v4252
        %v4335 = vpack.c.b16 %v4255, %v4253
        %v4336 = vpack.c.b16 %v4258, %v4256
        %v4337 = vpack.c.b16 %v4259, %v4257
        %v4338 = vpack.c.b16 %v4262, %v4260
        %v4339 = vpack.c.b16 %v4263, %v4261
        %v4340 = vpack.c.b16 %v4266, %v4264
        %v4341 = vpack.c.b16 %v4267, %v4265
        %v4342 = vpack.c.b16 %v4270, %v4268
        %v4343 = vpack.c.b16 %v4271, %v4269
        %v4344 = vpack.c.b16 %v4274, %v4272
        %v4345 = vpack.c.b16 %v4275, %v4273
        %v4346 = vpack.c.b16 %v4278, %v4276
        %v4347 = vpack.c.b16 %v4279, %v4277
        %v4348 = vpack.c.b16 %v4282, %v4280
        %v4349 = vpack.c.b16 %v4283, %v4281
        %v4350 = vpack.c.b16 %v4286, %v4284
        %v4351 = vpack.c.b16 %v4287, %v4285
        %4416 = vmatprep.subr.bf16.mxu0 %v4289
        %4417 = vmatpush1.bf16.msra.mxu0 %v4288
        %4418 = vmatprep.subr.bf16.mxu0 %v4291
        %4419 = vmatpush1.bf16.msra.mxu0 %v4290
        %4420 = vmatprep.subr.bf16.mxu0 %v4293
        %4421 = vmatpush1.bf16.msra.mxu0 %v4292
        %4422 = vmatprep.subr.bf16.mxu0 %v4295
        %4423 = vmatpush1.bf16.msra.mxu0 %v4294
        %4424 = vmatprep.subr.bf16.mxu0 %v4297
        %4425 = vmatpush1.bf16.msra.mxu0 %v4296
        %4426 = vmatprep.subr.bf16.mxu0 %v4299
        %4427 = vmatpush1.bf16.msra.mxu0 %v4298
        %4428 = vmatprep.subr.bf16.mxu0 %v4301
        %4429 = vmatpush1.bf16.msra.mxu0 %v4300
        %4430 = vmatprep.subr.bf16.mxu0 %v4303
        %4431 = vmatpush1.bf16.msra.mxu0 %v4302
        %4432 = vmatprep.subr.bf16.mxu0 %v4305
        %4433 = vmatpush1.bf16.msra.mxu0 %v4304
        %4434 = vmatprep.subr.bf16.mxu0 %v4307
        %4435 = vmatpush1.bf16.msra.mxu0 %v4306
        %4436 = vmatprep.subr.bf16.mxu0 %v4309
        %4437 = vmatpush1.bf16.msra.mxu0 %v4308
        %4438 = vmatprep.subr.bf16.mxu0 %v4311
        %4439 = vmatpush1.bf16.msra.mxu0 %v4310
        %4440 = vmatprep.subr.bf16.mxu0 %v4313
        %4441 = vmatpush1.bf16.msra.mxu0 %v4312
        %4442 = vmatprep.subr.bf16.mxu0 %v4315
        %4443 = vmatpush1.bf16.msra.mxu0 %v4314
        %4444 = vmatprep.subr.bf16.mxu0 %v4317
        %4445 = vmatpush1.bf16.msra.mxu0 %v4316
        %4446 = vmatprep.subr.bf16.mxu0 %v4319
        %4447 = vmatpush1.bf16.msra.mxu0 %v4318
        %4448 = vmatprep.mubr.bf16.mxu0 %v4017
        %4449 = vmatmul.mubr.bf16.gmra.mrb[0].mxu0 %v4016
        %v4450 = vpop.f32.mrb[0].mxu0
        %v4451 = vadd.f32 %v4089, %v4450
        %v4452 = vpop.f32.mrb[0].mxu0
        %v4453 = vadd.f32 %v4093, %v4452
        %v4454 = vpop.f32.mrb[0].mxu0
        %v4455 = vpop.f32.mrb[0].mxu0
        %4456 = vdwg.mxu0
        %4457 = vmatprep.subr.bf16.mxu0 %v4321
        %4458 = vmatpush1.bf16.msra.mxu0 %v4320
        %4459 = vmatprep.subr.bf16.mxu0 %v4323
        %4460 = vmatpush1.bf16.msra.mxu0 %v4322
        %4461 = vmatprep.subr.bf16.mxu0 %v4325
        %4462 = vmatpush1.bf16.msra.mxu0 %v4324
        %4463 = vmatprep.subr.bf16.mxu0 %v4327
        %4464 = vmatpush1.bf16.msra.mxu0 %v4326
        %4465 = vmatprep.subr.bf16.mxu0 %v4329
        %4466 = vmatpush1.bf16.msra.mxu0 %v4328
        %4467 = vmatprep.subr.bf16.mxu0 %v4331
        %4468 = vmatpush1.bf16.msra.mxu0 %v4330
        %4469 = vmatprep.subr.bf16.mxu0 %v4333
        %4470 = vmatpush1.bf16.msra.mxu0 %v4332
        %4471 = vmatprep.subr.bf16.mxu0 %v4335
        %4472 = vmatpush1.bf16.msra.mxu0 %v4334
        %4473 = vmatprep.subr.bf16.mxu0 %v4337
        %4474 = vmatpush1.bf16.msra.mxu0 %v4336
        %4475 = vmatprep.subr.bf16.mxu0 %v4339
        %4476 = vmatpush1.bf16.msra.mxu0 %v4338
        %4477 = vmatprep.subr.bf16.mxu0 %v4341
        %4478 = vmatpush1.bf16.msra.mxu0 %v4340
        %4479 = vmatprep.subr.bf16.mxu0 %v4343
        %4480 = vmatpush1.bf16.msra.mxu0 %v4342
        %4481 = vmatprep.subr.bf16.mxu0 %v4345
        %4482 = vmatpush1.bf16.msra.mxu0 %v4344
        %4483 = vmatprep.subr.bf16.mxu0 %v4347
        %4484 = vmatpush1.bf16.msra.mxu0 %v4346
        %4485 = vmatprep.subr.bf16.mxu0 %v4349
        %4486 = vmatpush1.bf16.msra.mxu0 %v4348
        %4487 = vmatprep.subr.bf16.mxu0 %v4351
        %4488 = vmatpush1.bf16.msra.mxu0 %v4350
        %4489 = vmatprep.mubr.bf16.mxu0 %v4019
        %4490 = vmatmul.mubr.bf16.gmra.mrb[0].mxu0 %v4018
        %v4491 = vpop.f32.mrb[0].mxu0
        %v4492 = vadd.f32 %v4451, %v4491
        %v4493 = vpop.f32.mrb[0].mxu0
        %v4494 = vadd.f32 %v4453, %v4493
        %v4495 = vpop.f32.mrb[0].mxu0
        %v4496 = vpop.f32.mrb[0].mxu0
        %4497 = vdwg.mxu0
        %v4498 = vadd.f32 %v3469, %v4492
        %v4499 = vadd.f32 %v3470, %v4494
        %4500 = vst [vmem:[%s975] sm:$0xff] %v4498
        %4501 = vst [vmem:[%s975 + $0x8] sm:$0xff] %v4499
        %s4502 = sand.u32 %s583, 1
        %s4503 = scalar_lea.sflag [#allocation4], %s4502
        %s4504 = sand.u32 %s583, 1
        %s4505 = smul.addr %s4504, 16
        %s4506 = scalar_lea.vmem [#allocation22], %s4505
        // Predicated region
        $region165: #{tpu_custom_call.1} parent=115 // pred_check
          %p4507 = pneg %p593
        $region166: #{tpu_custom_call.1} parent=115 // pred_check_branch
          %4509 = sbr.rel (%p4507) target = $region168
        $region167: #{tpu_custom_call.1} parent=115 // pred_region
          %s4511 = ssub.s32 256, 256
          %4512 = vsyncadd %s4503, %s4511
          %s4513 = smul.addr %s51, 2
          %s4514 = smul.addr %s4513, 128
          %s4515 = scalar_lea.hbm %s24, %s4514
          %s4517 = sshll.u32 %s4506, 4
          %s4518 = int_to_ptr.vmem [resolvable:$true] %s4517
          %4520 = dma.vmem_to_hbm [thread:$0]  %s4518, 256, %s4515, %s4503
        $region168: #{tpu_custom_call.1} parent=115 // pred_fallthru
          _
      $region116: #{tpu_custom_call.1} parent=5 // pred_fallthru
        _
      %p4521 = scmp.le.s32.totalorder 2, %s46
      // Predicated region
      $region169: #{tpu_custom_call.1} parent=5 // pred_check
        %p4522 = pneg %p4521
      $region170: #{tpu_custom_call.1} parent=5 // pred_check_branch
        %4524 = sbr.rel (%p4522) target = $region172
      $region171: #{tpu_custom_call.1} parent=5 // pred_region
        %s4525 = ssub.s32 %s46, 2
        // Predicated region
        $region173: #{tpu_custom_call.1} parent=171 // pred_check
          %p4526 = pneg %p599
        $region174: #{tpu_custom_call.1} parent=171 // pred_check_branch
          %4528 = sbr.rel (%p4526) target = $region176
        $region175: #{tpu_custom_call.1} parent=171 // pred_region
          %s4529 = sand.u32 %s584, 1
          %s4530 = scalar_lea.sflag [#allocation4], %s4529
          %s4531 = sand.u32 %s584, 1
          %s4532 = smul.addr %s4531, 16
          %s4533 = scalar_lea.vmem [#allocation22], %s4532
          %4534 = dma.done %s4530, 256
        $region176: #{tpu_custom_call.1} parent=171 // pred_fallthru
          _
      $region172: #{tpu_custom_call.1} parent=5 // pred_fallthru
        _
    $region6: #{tpu_custom_call.1} parent=1 // loop_footer
      %s50 = sadd.s32 1, %s46
    $region7: #{tpu_custom_call.1} parent=1 // loop_footer_branch
      %45 = sbr.rel target = $region3
    $region8: #{tpu_custom_call.1} parent=1 // loop_exit
      _
    %4535 = vsyncpa [#allocation3], 1
    %s4536 = scalar_lea.sflag [#allocation3], 1
    %4537 = vsyncpa %s4536, 1
    %4538 = vsyncpa [#allocation6], 1
    %s4539 = scalar_lea.sflag [#allocation6], 1
    %4540 = vsyncpa %s4539, 1
    %4541 = vsyncpa [#allocation9], 1
    %s4542 = scalar_lea.sflag [#allocation9], 1
    %4543 = vsyncpa %s4542, 1
    %4544 = vsyncpa [#allocation12], 1
    %4545 = vsyncpa [#allocation15], 1
    %4546 = vsyncpa [#allocation18], 1
    %4547 = vsyncpa [#allocation21], 1
    %4548 = vsyncpa [#allocation4], 1
    %s4549 = scalar_lea.sflag [#allocation4], 1
    %4550 = vsyncpa %s4549, 1

</llo_original>
